<compile_context>
chip_gen: v7x
topology: tpu7x:2x2x1
jax: 0.10.0
libtpu: 0.0.40
codegen_flags: <defaults>
</compile_context>

<pallas_src>
import functools
import math

import jax
import jax.numpy as jnp
from jax import lax
from jax.experimental import pallas as pl
from jax.experimental.pallas import tpu as pltpu


def _round_up(x, m):
    return (x + m - 1) // m * m


def _accumulate(x_ref, w_ref, acc_ref, mxu_dtype):
    @pl.when(pl.program_id(2) == 0)
    def _():
        acc_ref[...] = jnp.zeros_like(acc_ref)

    x = x_ref[...]
    w = w_ref[...]
    if mxu_dtype is not None:
        x = x.astype(mxu_dtype)
        w = w.astype(mxu_dtype)
    # x: (tm, tk), w: (tn, tk) -- contract on K (last dim of both) => (tm, tn).
    acc_ref[...] += lax.dot_general(
        x, w,
        dimension_numbers=(((1,), (1,)), ((), ())),
        preferred_element_type=jnp.float32)


def _linear_bias_kernel(x_ref, w_ref, b_ref, o_ref, acc_ref, *, mxu_dtype):
    _accumulate(x_ref, w_ref, acc_ref, mxu_dtype)

    @pl.when(pl.program_id(2) == pl.num_programs(2) - 1)
    def _():
        acc = acc_ref[...] + b_ref[...].astype(jnp.float32)
        o_ref[...] = acc.astype(o_ref.dtype)


def _linear_nobias_kernel(x_ref, w_ref, o_ref, acc_ref, *, mxu_dtype):
    _accumulate(x_ref, w_ref, acc_ref, mxu_dtype)

    @pl.when(pl.program_id(2) == pl.num_programs(2) - 1)
    def _():
        o_ref[...] = acc_ref[...].astype(o_ref.dtype)


# Below this many FLOPs, a Pallas launch is pure overhead vs. XLA's fused dot.
_FALLBACK_FLOPS = 1 << 22


def custom_linear(x, weight, bias=None, *, mxu_dtype=None,
                  vmem_tile_budget_bytes=36 * 1024 * 1024):
    """Forward pass of CustomLinear: x @ weight.T (+ bias).

    x:      (..., in_features)
    weight: (out_features, in_features)   -- PyTorch layout (never transposed)
    bias:   (out_features,) or None
    """
    out_features, in_features = weight.shape
    lead_shape = x.shape[:-1]
    out_dtype = x.dtype
    x2d = x.reshape(-1, in_features)
    M, K, N = x2d.shape[0], in_features, out_features

    # Tiny shapes: skip the kernel launch entirely.
    if 2 * M * K * N < _FALLBACK_FLOPS:
        out2d = x2d @ weight.T
        if bias is not None:
            out2d = out2d + bias
        return out2d.reshape(*lead_shape, out_features).astype(out_dtype)

    # ---- lane/sublane-friendly padding targets -----------------------------
    K_pad = _round_up(K, 128)
    N_pad = _round_up(N, 128)

    # ---- tile selection -----------------------------------------------------
    def pick(dim, candidates):
        for c in candidates:
            if dim % c == 0:
                return c
        return dim

    tk = pick(K_pad, (512, 384, 256, 128))
    tn = pick(N_pad, (1024, 768, 512, 384, 256, 128))

    x_bytes = jnp.dtype(x.dtype).itemsize
    w_bytes = jnp.dtype(weight.dtype).itemsize
    o_bytes = jnp.dtype(out_dtype).itemsize

    def tile_bytes(tm_):
        return (2 * tm_ * tk * x_bytes      # double-buffered x tile
                + 2 * tn * tk * w_bytes     # double-buffered weight tile
                + 2 * tm_ * tn * o_bytes    # double-buffered output tile
                + tm_ * tn * 4)             # f32 accumulator scratch

    tm = 8
    for cand in (1024, 768, 512, 384, 256, 128, 64, 32, 16, 8):
        if tile_bytes(cand) <= vmem_tile_budget_bytes:
            tm = cand
            break
    tm = min(tm, _round_up(M, 8))           # don't over-pad small M
    M_pad = _round_up(M, tm)

    # ---- pad operands (zero padding is a no-op for the contraction) --------
    if M_pad != M or K_pad != K:
        x2d = jnp.pad(x2d, ((0, M_pad - M), (0, K_pad - K)))
    w = weight
    if N_pad != N or K_pad != K:
        w = jnp.pad(w, ((0, N_pad - N), (0, K_pad - K)))

    grid = (M_pad // tm, N_pad // tn, K_pad // tk)

    x_spec = pl.BlockSpec((tm, tk), lambda i, j, k: (i, k))
    w_spec = pl.BlockSpec((tn, tk), lambda i, j, k: (j, k))
    o_spec = pl.BlockSpec((tm, tn), lambda i, j, k: (i, j))
    out_shape = jax.ShapeDtypeStruct((M_pad, N_pad), out_dtype)
    scratch = [pltpu.VMEM((tm, tn), jnp.float32)]

    cparams = pltpu.CompilerParams(
        dimension_semantics=("parallel", "parallel", "arbitrary"),
        vmem_limit_bytes=48 * 1024 * 1024)   # safe on v5e/v6e/v7x

    cost = pl.CostEstimate(
        flops=2 * M_pad * K_pad * N_pad,
        transcendentals=0,
        bytes_accessed=(M_pad * K_pad * x_bytes
                        + (M_pad // tm) * N_pad * K_pad * w_bytes
                        + M_pad * N_pad * o_bytes
                        + N_pad * 4))

    if bias is not None:
        b2d = bias.reshape(1, N)
        if N_pad != N:
            b2d = jnp.pad(b2d, ((0, 0), (0, N_pad - N)))
        b_spec = pl.BlockSpec((1, tn), lambda i, j, k: (0, j))
        out2d = pl.pallas_call(
            functools.partial(_linear_bias_kernel, mxu_dtype=mxu_dtype),
            out_shape=out_shape,
            grid_spec=pltpu.PrefetchScalarGridSpec(
                num_scalar_prefetch=0,
                grid=grid,
                in_specs=[x_spec, w_spec, b_spec],
                out_specs=o_spec,
                scratch_shapes=scratch),
            compiler_params=cparams,
            cost_estimate=cost,
        )(x2d, w, b2d)
    else:
        out2d = pl.pallas_call(
            functools.partial(_linear_nobias_kernel, mxu_dtype=mxu_dtype),
            out_shape=out_shape,
            grid_spec=pltpu.PrefetchScalarGridSpec(
                num_scalar_prefetch=0,
                grid=grid,
                in_specs=[x_spec, w_spec],
                out_specs=o_spec,
                scratch_shapes=scratch),
            compiler_params=cparams,
            cost_estimate=cost,
        )(x2d, w)

    return out2d[:M, :N].reshape(*lead_shape, out_features)


def init_custom_linear_params(key, in_features, out_features, bias=True):
    """Deterministic reimplementation of CustomLinear.reset_parameters():
    kaiming_uniform_ (a=0, fan_in, leaky_relu) on weight, zeros on bias."""
    gain = math.sqrt(2.0)                     # leaky_relu gain with a=0
    bound = gain * math.sqrt(3.0 / in_features)
    weight = jax.random.uniform(
        key, (out_features, in_features), dtype=jnp.float32,
        minval=-bound, maxval=bound)
    b = jnp.zeros((out_features,), dtype=jnp.float32) if bias else None
    return weight, b


if __name__ == "__main__":
    key = jax.random.PRNGKey(0)
    k1, k2, k3, k4, k5 = jax.random.split(key, 5)

    # Case 1: MXU-friendly shapes -> Pallas kernel path (with bias).
    in_f, out_f = 256, 384
    batch, seq = 4, 128                        # 512 rows
    w1, b1 = init_custom_linear_params(k1, in_f, out_f, bias=True)
    x1 = jax.random.normal(k2, (batch, seq, in_f), dtype=jnp.float32)
    out1 = jax.block_until_ready(custom_linear(x1, w1, b1))
    ref1 = x1 @ w1.T + b1
    assert out1.shape == (batch, seq, out_f)
    assert jnp.allclose(out1, ref1, atol=1e-4, rtol=1e-4)

    # Case 2: ragged shapes (M/K/N not 8/128 multiples) -> padded Pallas path, no bias.
    in_f2, out_f2, rows2 = 192, 200, 520
    w2, _ = init_custom_linear_params(k3, in_f2, out_f2, bias=False)
    x2 = jax.random.normal(k4, (rows2, in_f2), dtype=jnp.float32)
    out2 = jax.block_until_ready(custom_linear(x2, w2, None))
    ref2 = x2 @ w2.T
    assert out2.shape == (rows2, out_f2)
    assert jnp.allclose(out2, ref2, atol=1e-4, rtol=1e-4)

    # Case 3: tiny shapes -> falls through to plain XLA dot (launch not worth it).
    in_f3, out_f3 = 32, 48
    w3, b3 = init_custom_linear_params(k5, in_f3, out_f3, bias=True)
    x3 = jax.random.normal(k1, (2, 8, in_f3), dtype=jnp.float32)
    out3 = jax.block_until_ready(custom_linear(x3, w3, b3))
    ref3 = x3 @ w3.T + b3
    assert jnp.allclose(out3, ref3, atol=1e-5, rtol=1e-5)

    print("KERNEL_OK")
</pallas_src>

<mosaic_0001>
module attributes {stable_mosaic.version = 11 : i64} {
  func.func @_linear_bias_kernel(%arg0: i32, %arg1: i32, %arg2: i32, %arg3: memref<512x256xf32, #tpu.memory_space<vmem>>, %arg4: memref<384x256xf32, #tpu.memory_space<vmem>>, %arg5: memref<1x384xf32, #tpu.memory_space<vmem>>, %arg6: memref<512x384xf32, #tpu.memory_space<vmem>>, %arg7: memref<512x384xf32, #tpu.memory_space<vmem>>) attributes {dimension_semantics = [#tpu.dimension_semantics<parallel>, #tpu.dimension_semantics<parallel>, #tpu.dimension_semantics<arbitrary>], iteration_bounds = array<i64: 1, 1, 1>, scalar_prefetch = 0 : i64, scratch_operands = 1 : i64, tpu.core_type = #tpu.core_type<tc>, window_params = [{transform_indices = @transform_0, window_bounds = array<i64: 512, 256>}, {transform_indices = @transform_1, window_bounds = array<i64: 384, 256>}, {transform_indices = @transform_2, window_bounds = array<i64: 1, 384>}, {transform_indices = @transform_3, window_bounds = array<i64: 512, 384>}]} {
    %c0_i32 = arith.constant 0 : i32
    %0 = arith.cmpi eq, %arg2, %c0_i32 : i32
    %1 = arith.extui %0 : i1 to i32
    %c0_i32_0 = arith.constant 0 : i32
    %2 = arith.cmpi ne, %1, %c0_i32_0 : i32
    scf.if %2 {
      %cst_10 = arith.constant 0.000000e+00 : f32
      %12 = vector.broadcast %cst_10 : f32 to vector<512x384xf32>
      %c0_11 = arith.constant 0 : index
      %c0_12 = arith.constant 0 : index
      %13 = vector.load %arg7[%c0_11, %c0_12] : memref<512x384xf32, #tpu.memory_space<vmem>>, vector<512x384xf32>
      tpu.vector_store %arg7[%c0_11, %c0_12], %12 {strides = array<i32>} : memref<512x384xf32, #tpu.memory_space<vmem>>, vector<512x384xf32>,
    } else {
    }
    %c0 = arith.constant 0 : index
    %c0_1 = arith.constant 0 : index
    %3 = vector.load %arg3[%c0, %c0_1] : memref<512x256xf32, #tpu.memory_space<vmem>>, vector<512x256xf32>
    %c0_2 = arith.constant 0 : index
    %c0_3 = arith.constant 0 : index
    %4 = vector.load %arg4[%c0_2, %c0_3] : memref<384x256xf32, #tpu.memory_space<vmem>>, vector<384x256xf32>
    %c0_4 = arith.constant 0 : index
    %c0_5 = arith.constant 0 : index
    %5 = vector.load %arg7[%c0_4, %c0_5] : memref<512x384xf32, #tpu.memory_space<vmem>>, vector<512x384xf32>
    %cst = arith.constant dense<0.000000e+00> : vector<512x384xf32>
    %6 = tpu.matmul %3, %4, %cst {dimension_numbers = #tpu.dot_dimension_numbers<[1], [1], [0], [0], [0, 0, 1, 0], [], []>} : vector<512x256xf32>, vector<384x256xf32>, vector<512x384xf32> -> vector<512x384xf32>
    %7 = arith.addf %5, %6 : vector<512x384xf32>
    %c0_6 = arith.constant 0 : index
    %c0_7 = arith.constant 0 : index
    %8 = vector.load %arg7[%c0_6, %c0_7] : memref<512x384xf32, #tpu.memory_space<vmem>>, vector<512x384xf32>
    tpu.vector_store %arg7[%c0_6, %c0_7], %7 {strides = array<i32>} : memref<512x384xf32, #tpu.memory_space<vmem>>, vector<512x384xf32>,
    %c0_i32_8 = arith.constant 0 : i32
    %9 = arith.cmpi eq, %arg2, %c0_i32_8 : i32
    %10 = arith.extui %9 : i1 to i32
    %c0_i32_9 = arith.constant 0 : i32
    %11 = arith.cmpi ne, %10, %c0_i32_9 : i32
    scf.if %11 {
      %c0_10 = arith.constant 0 : index
      %c0_11 = arith.constant 0 : index
      %12 = vector.load %arg7[%c0_10, %c0_11] : memref<512x384xf32, #tpu.memory_space<vmem>>, vector<512x384xf32>
      %c0_12 = arith.constant 0 : index
      %c0_13 = arith.constant 0 : index
      %13 = vector.load %arg5[%c0_12, %c0_13] : memref<1x384xf32, #tpu.memory_space<vmem>>, vector<1x384xf32>
      %14 = vector.broadcast %13 : vector<1x384xf32> to vector<512x384xf32>
      %15 = arith.addf %12, %14 : vector<512x384xf32>
      %c0_14 = arith.constant 0 : index
      %c0_15 = arith.constant 0 : index
      %16 = vector.load %arg6[%c0_14, %c0_15] : memref<512x384xf32, #tpu.memory_space<vmem>>, vector<512x384xf32>
      tpu.vector_store %arg6[%c0_14, %c0_15], %15 {strides = array<i32>} : memref<512x384xf32, #tpu.memory_space<vmem>>, vector<512x384xf32>,
    } else {
    }
    return
  }
  func.func @transform_0(%arg0: i32, %arg1: i32, %arg2: i32) -> (i32, i32) {
    %c0_i32 = arith.constant 0 : i32
    return %arg0, %arg2 : i32, i32
  }
  func.func @transform_1(%arg0: i32, %arg1: i32, %arg2: i32) -> (i32, i32) {
    %c0_i32 = arith.constant 0 : i32
    return %arg1, %arg2 : i32, i32
  }
  func.func @transform_2(%arg0: i32, %arg1: i32, %arg2: i32) -> (i32, i32) {
    %c0_i32 = arith.constant 0 : i32
    %c0_i32_0 = arith.constant 0 : i32
    return %c0_i32, %arg1 : i32, i32
  }
  func.func @transform_3(%arg0: i32, %arg1: i32, %arg2: i32) -> (i32, i32) {
    %c0_i32 = arith.constant 0 : i32
    return %arg0, %arg1 : i32, i32
  }
}

</mosaic_0001>

<llo_original>
// kernel: tpu_custom_call.1
$region0: #{tpu_custom_call.1}
  #allocation0 [shape = 'u32[]', space=smem, size = 0x4, offset = 0x4, fixed_abs, tag = 'smem constant byte address 0x4 - core index']
  #allocation1 [shape = 'u32[144,128]{1,0:T(1,128)}', space=vmem, size = 0x12000, scoped, tag = 'internal scratch']
  #allocation2 [shape = 'f32[512,384]{1,0:T(8,128)}', space=vmem, size = 0xc0000, scoped, tag = 'scratch operand']
  %s0 = inlined_call_operand.hbm [shape: f32[512,256], index: 0, kind: input, shape index: {}]
  %s1 = inlined_call_operand.hbm [shape: f32[384,256], index: 1, kind: input, shape index: {}]
  %s2 = inlined_call_operand.vmem [shape: f32[1,384], index: 2, kind: input, shape index: {}]
  %s3 = inlined_call_operand.hbm [shape: f32[512,384], index: 3, kind: output, shape index: {}]
  %s4 = sld [smem:[#allocation0]]
  $region38: #{tpu_custom_call.1} parent=0
    _
  %s6 = ssub.s32 1, %s4
  %s7 = scalar_select 0, %s6, %s4
  $region1: #{tpu_custom_call.1} parent=0
    #allocation3 [shape = 'u8[524288]{0}', space=vmem, size = 0x80000, scoped, tag = 'input window, operand 0, single buffered']
    #allocation4 [shape = 's32[1]{0}', space=sflag, size = 0x4, scoped, tag = 'scoped memory for tpu_custom_call.1']
    #allocation5 [shape = 's32[1]{0}', space=sflag, size = 0x4, scoped, tag = 'scoped memory for tpu_custom_call.1']
    #allocation6 [shape = 'u8[393216]{0}', space=vmem, size = 0x60000, scoped, tag = 'input window, operand 1, single buffered']
    #allocation7 [shape = 's32[1]{0}', space=sflag, size = 0x4, scoped, tag = 'scoped memory for tpu_custom_call.1']
    #allocation8 [shape = 'u8[786432]{0}', space=vmem, size = 0xc0000, scoped, tag = 'output window, operand 0, single buffered']
    %8 = vsyncpa [#allocation4], 0
    %9 = vsyncpa [#allocation7], 0
    %10 = vsyncpa [#allocation5], 0
    // Predicated region
    $region2: #{tpu_custom_call.1} parent=1 // pred_check
      _
    $region3: #{tpu_custom_call.1} parent=1 // pred_check_branch
      %12 = sbr.rel (0) target = $region5
    $region4: #{tpu_custom_call.1} parent=1 // pred_region
      %s14 = ssub.s32 16384, 16384
      %15 = vsyncadd [#allocation4], %s14
      %s16 = sshll.u32 [#allocation3], 4
      %s17 = int_to_ptr.vmem [resolvable:$true] %s16
      %22 = dma.hbm_to_vmem [thread:$0]  %s0, 16384, %s17, [#allocation4], 256, 256, 16
    $region5: #{tpu_custom_call.1} parent=1 // pred_fallthru
      _
    // Predicated region
    $region6: #{tpu_custom_call.1} parent=1 // pred_check
      _
    $region7: #{tpu_custom_call.1} parent=1 // pred_check_branch
      %24 = sbr.rel (0) target = $region9
    $region8: #{tpu_custom_call.1} parent=1 // pred_region
      %s26 = ssub.s32 12288, 12288
      %27 = vsyncadd [#allocation7], %s26
      %s28 = sshll.u32 [#allocation6], 4
      %s29 = int_to_ptr.vmem [resolvable:$true] %s28
      %34 = dma.hbm_to_vmem [thread:$0]  %s1, 12288, %s29, [#allocation7], 256, 256, 16
    $region9: #{tpu_custom_call.1} parent=1 // pred_fallthru
      _
    // Predicated region
    $region10: #{tpu_custom_call.1} parent=1 // pred_check
      _
    $region11: #{tpu_custom_call.1} parent=1 // pred_check_branch
      %36 = sbr.rel (0) target = $region13
    $region12: #{tpu_custom_call.1} parent=1 // pred_region
      _
    $region13: #{tpu_custom_call.1} parent=1 // pred_fallthru
      _
    // Predicated region
    $region14: #{tpu_custom_call.1} parent=1 // pred_check
      _
    $region15: #{tpu_custom_call.1} parent=1 // pred_check_branch
      %38 = sbr.rel (0) target = $region17
    $region16: #{tpu_custom_call.1} parent=1 // pred_region
      %39 = dma.done [#allocation4], 16384
    $region17: #{tpu_custom_call.1} parent=1 // pred_fallthru
      _
    // Predicated region
    $region18: #{tpu_custom_call.1} parent=1 // pred_check
      _
    $region19: #{tpu_custom_call.1} parent=1 // pred_check_branch
      %41 = sbr.rel (0) target = $region21
    $region20: #{tpu_custom_call.1} parent=1 // pred_region
      %42 = dma.done [#allocation7], 12288
    $region21: #{tpu_custom_call.1} parent=1 // pred_fallthru
      _
    %p43 = scmp.eq.s32.totalorder 0, 0
    // Predicated region
    $region22: #{tpu_custom_call.1} parent=1 // pred_check
      %p44 = pneg %p43
    $region23: #{tpu_custom_call.1} parent=1 // pred_check_branch
      %46 = sbr.rel (%p44) target = $region25
    $region24: #{tpu_custom_call.1} parent=1 // pred_region
      %47 = vst [vmem:[#allocation2] sm:$0xff] 0.0
      %48 = vst [vmem:[#allocation2 + $0x8] sm:$0xff] 0.0
      %49 = vst [vmem:[#allocation2 + $0x10] sm:$0xff] 0.0
      %50 = vst [vmem:[#allocation2 + $0x18] sm:$0xff] 0.0
      %51 = vst [vmem:[#allocation2 + $0x20] sm:$0xff] 0.0
      %52 = vst [vmem:[#allocation2 + $0x28] sm:$0xff] 0.0
      %53 = vst [vmem:[#allocation2 + $0x30] sm:$0xff] 0.0
      %54 = vst [vmem:[#allocation2 + $0x38] sm:$0xff] 0.0
      %55 = vst [vmem:[#allocation2 + $0x40] sm:$0xff] 0.0
      %56 = vst [vmem:[#allocation2 + $0x48] sm:$0xff] 0.0
      %57 = vst [vmem:[#allocation2 + $0x50] sm:$0xff] 0.0
      %58 = vst [vmem:[#allocation2 + $0x58] sm:$0xff] 0.0
      %59 = vst [vmem:[#allocation2 + $0x60] sm:$0xff] 0.0
      %60 = vst [vmem:[#allocation2 + $0x68] sm:$0xff] 0.0
      %61 = vst [vmem:[#allocation2 + $0x70] sm:$0xff] 0.0
      %62 = vst [vmem:[#allocation2 + $0x78] sm:$0xff] 0.0
      %63 = vst [vmem:[#allocation2 + $0x80] sm:$0xff] 0.0
      %64 = vst [vmem:[#allocation2 + $0x88] sm:$0xff] 0.0
      %65 = vst [vmem:[#allocation2 + $0x90] sm:$0xff] 0.0
      %66 = vst [vmem:[#allocation2 + $0x98] sm:$0xff] 0.0
      %67 = vst [vmem:[#allocation2 + $0xa0] sm:$0xff] 0.0
      %68 = vst [vmem:[#allocation2 + $0xa8] sm:$0xff] 0.0
      %69 = vst [vmem:[#allocation2 + $0xb0] sm:$0xff] 0.0
      %70 = vst [vmem:[#allocation2 + $0xb8] sm:$0xff] 0.0
      %71 = vst [vmem:[#allocation2 + $0xc0] sm:$0xff] 0.0
      %72 = vst [vmem:[#allocation2 + $0xc8] sm:$0xff] 0.0
      %73 = vst [vmem:[#allocation2 + $0xd0] sm:$0xff] 0.0
      %74 = vst [vmem:[#allocation2 + $0xd8] sm:$0xff] 0.0
      %75 = vst [vmem:[#allocation2 + $0xe0] sm:$0xff] 0.0
      %76 = vst [vmem:[#allocation2 + $0xe8] sm:$0xff] 0.0
      %77 = vst [vmem:[#allocation2 + $0xf0] sm:$0xff] 0.0
      %78 = vst [vmem:[#allocation2 + $0xf8] sm:$0xff] 0.0
      %79 = vst [vmem:[#allocation2 + $0x100] sm:$0xff] 0.0
      %80 = vst [vmem:[#allocation2 + $0x108] sm:$0xff] 0.0
      %81 = vst [vmem:[#allocation2 + $0x110] sm:$0xff] 0.0
      %82 = vst [vmem:[#allocation2 + $0x118] sm:$0xff] 0.0
      %83 = vst [vmem:[#allocation2 + $0x120] sm:$0xff] 0.0
      %84 = vst [vmem:[#allocation2 + $0x128] sm:$0xff] 0.0
      %85 = vst [vmem:[#allocation2 + $0x130] sm:$0xff] 0.0
      %86 = vst [vmem:[#allocation2 + $0x138] sm:$0xff] 0.0
      %87 = vst [vmem:[#allocation2 + $0x140] sm:$0xff] 0.0
      %88 = vst [vmem:[#allocation2 + $0x148] sm:$0xff] 0.0
      %89 = vst [vmem:[#allocation2 + $0x150] sm:$0xff] 0.0
      %90 = vst [vmem:[#allocation2 + $0x158] sm:$0xff] 0.0
      %91 = vst [vmem:[#allocation2 + $0x160] sm:$0xff] 0.0
      %92 = vst [vmem:[#allocation2 + $0x168] sm:$0xff] 0.0
      %93 = vst [vmem:[#allocation2 + $0x170] sm:$0xff] 0.0
      %94 = vst [vmem:[#allocation2 + $0x178] sm:$0xff] 0.0
      %95 = vst [vmem:[#allocation2 + $0x180] sm:$0xff] 0.0
      %96 = vst [vmem:[#allocation2 + $0x188] sm:$0xff] 0.0
      %97 = vst [vmem:[#allocation2 + $0x190] sm:$0xff] 0.0
      %98 = vst [vmem:[#allocation2 + $0x198] sm:$0xff] 0.0
      %99 = vst [vmem:[#allocation2 + $0x1a0] sm:$0xff] 0.0
      %100 = vst [vmem:[#allocation2 + $0x1a8] sm:$0xff] 0.0
      %101 = vst [vmem:[#allocation2 + $0x1b0] sm:$0xff] 0.0
      %102 = vst [vmem:[#allocation2 + $0x1b8] sm:$0xff] 0.0
      %103 = vst [vmem:[#allocation2 + $0x1c0] sm:$0xff] 0.0
      %104 = vst [vmem:[#allocation2 + $0x1c8] sm:$0xff] 0.0
      %105 = vst [vmem:[#allocation2 + $0x1d0] sm:$0xff] 0.0
      %106 = vst [vmem:[#allocation2 + $0x1d8] sm:$0xff] 0.0
      %107 = vst [vmem:[#allocation2 + $0x1e0] sm:$0xff] 0.0
      %108 = vst [vmem:[#allocation2 + $0x1e8] sm:$0xff] 0.0
      %109 = vst [vmem:[#allocation2 + $0x1f0] sm:$0xff] 0.0
      %110 = vst [vmem:[#allocation2 + $0x1f8] sm:$0xff] 0.0
      %111 = vst [vmem:[#allocation2 + $0x200] sm:$0xff] 0.0
      %112 = vst [vmem:[#allocation2 + $0x208] sm:$0xff] 0.0
      %113 = vst [vmem:[#allocation2 + $0x210] sm:$0xff] 0.0
      %114 = vst [vmem:[#allocation2 + $0x218] sm:$0xff] 0.0
      %115 = vst [vmem:[#allocation2 + $0x220] sm:$0xff] 0.0
      %116 = vst [vmem:[#allocation2 + $0x228] sm:$0xff] 0.0
      %117 = vst [vmem:[#allocation2 + $0x230] sm:$0xff] 0.0
      %118 = vst [vmem:[#allocation2 + $0x238] sm:$0xff] 0.0
      %119 = vst [vmem:[#allocation2 + $0x240] sm:$0xff] 0.0
      %120 = vst [vmem:[#allocation2 + $0x248] sm:$0xff] 0.0
      %121 = vst [vmem:[#allocation2 + $0x250] sm:$0xff] 0.0
      %122 = vst [vmem:[#allocation2 + $0x258] sm:$0xff] 0.0
      %123 = vst [vmem:[#allocation2 + $0x260] sm:$0xff] 0.0
      %124 = vst [vmem:[#allocation2 + $0x268] sm:$0xff] 0.0
      %125 = vst [vmem:[#allocation2 + $0x270] sm:$0xff] 0.0
      %126 = vst [vmem:[#allocation2 + $0x278] sm:$0xff] 0.0
      %127 = vst [vmem:[#allocation2 + $0x280] sm:$0xff] 0.0
      %128 = vst [vmem:[#allocation2 + $0x288] sm:$0xff] 0.0
      %129 = vst [vmem:[#allocation2 + $0x290] sm:$0xff] 0.0
      %130 = vst [vmem:[#allocation2 + $0x298] sm:$0xff] 0.0
      %131 = vst [vmem:[#allocation2 + $0x2a0] sm:$0xff] 0.0
      %132 = vst [vmem:[#allocation2 + $0x2a8] sm:$0xff] 0.0
      %133 = vst [vmem:[#allocation2 + $0x2b0] sm:$0xff] 0.0
      %134 = vst [vmem:[#allocation2 + $0x2b8] sm:$0xff] 0.0
      %135 = vst [vmem:[#allocation2 + $0x2c0] sm:$0xff] 0.0
      %136 = vst [vmem:[#allocation2 + $0x2c8] sm:$0xff] 0.0
      %137 = vst [vmem:[#allocation2 + $0x2d0] sm:$0xff] 0.0
      %138 = vst [vmem:[#allocation2 + $0x2d8] sm:$0xff] 0.0
      %139 = vst [vmem:[#allocation2 + $0x2e0] sm:$0xff] 0.0
      %140 = vst [vmem:[#allocation2 + $0x2e8] sm:$0xff] 0.0
      %141 = vst [vmem:[#allocation2 + $0x2f0] sm:$0xff] 0.0
      %142 = vst [vmem:[#allocation2 + $0x2f8] sm:$0xff] 0.0
      %143 = vst [vmem:[#allocation2 + $0x300] sm:$0xff] 0.0
      %144 = vst [vmem:[#allocation2 + $0x308] sm:$0xff] 0.0
      %145 = vst [vmem:[#allocation2 + $0x310] sm:$0xff] 0.0
      %146 = vst [vmem:[#allocation2 + $0x318] sm:$0xff] 0.0
      %147 = vst [vmem:[#allocation2 + $0x320] sm:$0xff] 0.0
      %148 = vst [vmem:[#allocation2 + $0x328] sm:$0xff] 0.0
      %149 = vst [vmem:[#allocation2 + $0x330] sm:$0xff] 0.0
      %150 = vst [vmem:[#allocation2 + $0x338] sm:$0xff] 0.0
      %151 = vst [vmem:[#allocation2 + $0x340] sm:$0xff] 0.0
      %152 = vst [vmem:[#allocation2 + $0x348] sm:$0xff] 0.0
      %153 = vst [vmem:[#allocation2 + $0x350] sm:$0xff] 0.0
      %154 = vst [vmem:[#allocation2 + $0x358] sm:$0xff] 0.0
      %155 = vst [vmem:[#allocation2 + $0x360] sm:$0xff] 0.0
      %156 = vst [vmem:[#allocation2 + $0x368] sm:$0xff] 0.0
      %157 = vst [vmem:[#allocation2 + $0x370] sm:$0xff] 0.0
      %158 = vst [vmem:[#allocation2 + $0x378] sm:$0xff] 0.0
      %159 = vst [vmem:[#allocation2 + $0x380] sm:$0xff] 0.0
      %160 = vst [vmem:[#allocation2 + $0x388] sm:$0xff] 0.0
      %161 = vst [vmem:[#allocation2 + $0x390] sm:$0xff] 0.0
      %162 = vst [vmem:[#allocation2 + $0x398] sm:$0xff] 0.0
      %163 = vst [vmem:[#allocation2 + $0x3a0] sm:$0xff] 0.0
      %164 = vst [vmem:[#allocation2 + $0x3a8] sm:$0xff] 0.0
      %165 = vst [vmem:[#allocation2 + $0x3b0] sm:$0xff] 0.0
      %166 = vst [vmem:[#allocation2 + $0x3b8] sm:$0xff] 0.0
      %167 = vst [vmem:[#allocation2 + $0x3c0] sm:$0xff] 0.0
      %168 = vst [vmem:[#allocation2 + $0x3c8] sm:$0xff] 0.0
      %169 = vst [vmem:[#allocation2 + $0x3d0] sm:$0xff] 0.0
      %170 = vst [vmem:[#allocation2 + $0x3d8] sm:$0xff] 0.0
      %171 = vst [vmem:[#allocation2 + $0x3e0] sm:$0xff] 0.0
      %172 = vst [vmem:[#allocation2 + $0x3e8] sm:$0xff] 0.0
      %173 = vst [vmem:[#allocation2 + $0x3f0] sm:$0xff] 0.0
      %174 = vst [vmem:[#allocation2 + $0x3f8] sm:$0xff] 0.0
      %175 = vst [vmem:[#allocation2 + $0x400] sm:$0xff] 0.0
      %176 = vst [vmem:[#allocation2 + $0x408] sm:$0xff] 0.0
      %177 = vst [vmem:[#allocation2 + $0x410] sm:$0xff] 0.0
      %178 = vst [vmem:[#allocation2 + $0x418] sm:$0xff] 0.0
      %179 = vst [vmem:[#allocation2 + $0x420] sm:$0xff] 0.0
      %180 = vst [vmem:[#allocation2 + $0x428] sm:$0xff] 0.0
      %181 = vst [vmem:[#allocation2 + $0x430] sm:$0xff] 0.0
      %182 = vst [vmem:[#allocation2 + $0x438] sm:$0xff] 0.0
      %183 = vst [vmem:[#allocation2 + $0x440] sm:$0xff] 0.0
      %184 = vst [vmem:[#allocation2 + $0x448] sm:$0xff] 0.0
      %185 = vst [vmem:[#allocation2 + $0x450] sm:$0xff] 0.0
      %186 = vst [vmem:[#allocation2 + $0x458] sm:$0xff] 0.0
      %187 = vst [vmem:[#allocation2 + $0x460] sm:$0xff] 0.0
      %188 = vst [vmem:[#allocation2 + $0x468] sm:$0xff] 0.0
      %189 = vst [vmem:[#allocation2 + $0x470] sm:$0xff] 0.0
      %190 = vst [vmem:[#allocation2 + $0x478] sm:$0xff] 0.0
      %191 = vst [vmem:[#allocation2 + $0x480] sm:$0xff] 0.0
      %192 = vst [vmem:[#allocation2 + $0x488] sm:$0xff] 0.0
      %193 = vst [vmem:[#allocation2 + $0x490] sm:$0xff] 0.0
      %194 = vst [vmem:[#allocation2 + $0x498] sm:$0xff] 0.0
      %195 = vst [vmem:[#allocation2 + $0x4a0] sm:$0xff] 0.0
      %196 = vst [vmem:[#allocation2 + $0x4a8] sm:$0xff] 0.0
      %197 = vst [vmem:[#allocation2 + $0x4b0] sm:$0xff] 0.0
      %198 = vst [vmem:[#allocation2 + $0x4b8] sm:$0xff] 0.0
      %199 = vst [vmem:[#allocation2 + $0x4c0] sm:$0xff] 0.0
      %200 = vst [vmem:[#allocation2 + $0x4c8] sm:$0xff] 0.0
      %201 = vst [vmem:[#allocation2 + $0x4d0] sm:$0xff] 0.0
      %202 = vst [vmem:[#allocation2 + $0x4d8] sm:$0xff] 0.0
      %203 = vst [vmem:[#allocation2 + $0x4e0] sm:$0xff] 0.0
      %204 = vst [vmem:[#allocation2 + $0x4e8] sm:$0xff] 0.0
      %205 = vst [vmem:[#allocation2 + $0x4f0] sm:$0xff] 0.0
      %206 = vst [vmem:[#allocation2 + $0x4f8] sm:$0xff] 0.0
      %207 = vst [vmem:[#allocation2 + $0x500] sm:$0xff] 0.0
      %208 = vst [vmem:[#allocation2 + $0x508] sm:$0xff] 0.0
      %209 = vst [vmem:[#allocation2 + $0x510] sm:$0xff] 0.0
      %210 = vst [vmem:[#allocation2 + $0x518] sm:$0xff] 0.0
      %211 = vst [vmem:[#allocation2 + $0x520] sm:$0xff] 0.0
      %212 = vst [vmem:[#allocation2 + $0x528] sm:$0xff] 0.0
      %213 = vst [vmem:[#allocation2 + $0x530] sm:$0xff] 0.0
      %214 = vst [vmem:[#allocation2 + $0x538] sm:$0xff] 0.0
      %215 = vst [vmem:[#allocation2 + $0x540] sm:$0xff] 0.0
      %216 = vst [vmem:[#allocation2 + $0x548] sm:$0xff] 0.0
      %217 = vst [vmem:[#allocation2 + $0x550] sm:$0xff] 0.0
      %218 = vst [vmem:[#allocation2 + $0x558] sm:$0xff] 0.0
      %219 = vst [vmem:[#allocation2 + $0x560] sm:$0xff] 0.0
      %220 = vst [vmem:[#allocation2 + $0x568] sm:$0xff] 0.0
      %221 = vst [vmem:[#allocation2 + $0x570] sm:$0xff] 0.0
      %222 = vst [vmem:[#allocation2 + $0x578] sm:$0xff] 0.0
      %223 = vst [vmem:[#allocation2 + $0x580] sm:$0xff] 0.0
      %224 = vst [vmem:[#allocation2 + $0x588] sm:$0xff] 0.0
      %225 = vst [vmem:[#allocation2 + $0x590] sm:$0xff] 0.0
      %226 = vst [vmem:[#allocation2 + $0x598] sm:$0xff] 0.0
      %227 = vst [vmem:[#allocation2 + $0x5a0] sm:$0xff] 0.0
      %228 = vst [vmem:[#allocation2 + $0x5a8] sm:$0xff] 0.0
      %229 = vst [vmem:[#allocation2 + $0x5b0] sm:$0xff] 0.0
      %230 = vst [vmem:[#allocation2 + $0x5b8] sm:$0xff] 0.0
      %231 = vst [vmem:[#allocation2 + $0x5c0] sm:$0xff] 0.0
      %232 = vst [vmem:[#allocation2 + $0x5c8] sm:$0xff] 0.0
      %233 = vst [vmem:[#allocation2 + $0x5d0] sm:$0xff] 0.0
      %234 = vst [vmem:[#allocation2 + $0x5d8] sm:$0xff] 0.0
      %235 = vst [vmem:[#allocation2 + $0x5e0] sm:$0xff] 0.0
      %236 = vst [vmem:[#allocation2 + $0x5e8] sm:$0xff] 0.0
      %237 = vst [vmem:[#allocation2 + $0x5f0] sm:$0xff] 0.0
      %238 = vst [vmem:[#allocation2 + $0x5f8] sm:$0xff] 0.0
    $region25: #{tpu_custom_call.1} parent=1 // pred_fallthru
      _
    %v239 = vld [vmem:[#allocation3] sm:$0xff]
    %v240 = vld [vmem:[#allocation3 + $0x8] sm:$0xff]
    %v241 = vld [vmem:[#allocation3 + $0x10] sm:$0xff]
    %v242 = vld [vmem:[#allocation3 + $0x18] sm:$0xff]
    %v243 = vld [vmem:[#allocation3 + $0x20] sm:$0xff]
    %v244 = vld [vmem:[#allocation3 + $0x28] sm:$0xff]
    %v245 = vld [vmem:[#allocation3 + $0x30] sm:$0xff]
    %v246 = vld [vmem:[#allocation3 + $0x38] sm:$0xff]
    %v247 = vld [vmem:[#allocation3 + $0x40] sm:$0xff]
    %v248 = vld [vmem:[#allocation3 + $0x48] sm:$0xff]
    %v249 = vld [vmem:[#allocation3 + $0x50] sm:$0xff]
    %v250 = vld [vmem:[#allocation3 + $0x58] sm:$0xff]
    %v251 = vld [vmem:[#allocation3 + $0x60] sm:$0xff]
    %v252 = vld [vmem:[#allocation3 + $0x68] sm:$0xff]
    %v253 = vld [vmem:[#allocation3 + $0x70] sm:$0xff]
    %v254 = vld [vmem:[#allocation3 + $0x78] sm:$0xff]
    %v255 = vld [vmem:[#allocation3 + $0x80] sm:$0xff]
    %v256 = vld [vmem:[#allocation3 + $0x88] sm:$0xff]
    %v257 = vld [vmem:[#allocation3 + $0x90] sm:$0xff]
    %v258 = vld [vmem:[#allocation3 + $0x98] sm:$0xff]
    %v259 = vld [vmem:[#allocation3 + $0xa0] sm:$0xff]
    %v260 = vld [vmem:[#allocation3 + $0xa8] sm:$0xff]
    %v261 = vld [vmem:[#allocation3 + $0xb0] sm:$0xff]
    %v262 = vld [vmem:[#allocation3 + $0xb8] sm:$0xff]
    %v263 = vld [vmem:[#allocation3 + $0xc0] sm:$0xff]
    %v264 = vld [vmem:[#allocation3 + $0xc8] sm:$0xff]
    %v265 = vld [vmem:[#allocation3 + $0xd0] sm:$0xff]
    %v266 = vld [vmem:[#allocation3 + $0xd8] sm:$0xff]
    %v267 = vld [vmem:[#allocation3 + $0xe0] sm:$0xff]
    %v268 = vld [vmem:[#allocation3 + $0xe8] sm:$0xff]
    %v269 = vld [vmem:[#allocation3 + $0xf0] sm:$0xff]
    %v270 = vld [vmem:[#allocation3 + $0xf8] sm:$0xff]
    %v271 = vld [vmem:[#allocation3 + $0x100] sm:$0xff]
    %v272 = vld [vmem:[#allocation3 + $0x108] sm:$0xff]
    %v273 = vld [vmem:[#allocation3 + $0x110] sm:$0xff]
    %v274 = vld [vmem:[#allocation3 + $0x118] sm:$0xff]
    %v275 = vld [vmem:[#allocation3 + $0x120] sm:$0xff]
    %v276 = vld [vmem:[#allocation3 + $0x128] sm:$0xff]
    %v277 = vld [vmem:[#allocation3 + $0x130] sm:$0xff]
    %v278 = vld [vmem:[#allocation3 + $0x138] sm:$0xff]
    %v279 = vld [vmem:[#allocation3 + $0x140] sm:$0xff]
    %v280 = vld [vmem:[#allocation3 + $0x148] sm:$0xff]
    %v281 = vld [vmem:[#allocation3 + $0x150] sm:$0xff]
    %v282 = vld [vmem:[#allocation3 + $0x158] sm:$0xff]
    %v283 = vld [vmem:[#allocation3 + $0x160] sm:$0xff]
    %v284 = vld [vmem:[#allocation3 + $0x168] sm:$0xff]
    %v285 = vld [vmem:[#allocation3 + $0x170] sm:$0xff]
    %v286 = vld [vmem:[#allocation3 + $0x178] sm:$0xff]
    %v287 = vld [vmem:[#allocation3 + $0x180] sm:$0xff]
    %v288 = vld [vmem:[#allocation3 + $0x188] sm:$0xff]
    %v289 = vld [vmem:[#allocation3 + $0x190] sm:$0xff]
    %v290 = vld [vmem:[#allocation3 + $0x198] sm:$0xff]
    %v291 = vld [vmem:[#allocation3 + $0x1a0] sm:$0xff]
    %v292 = vld [vmem:[#allocation3 + $0x1a8] sm:$0xff]
    %v293 = vld [vmem:[#allocation3 + $0x1b0] sm:$0xff]
    %v294 = vld [vmem:[#allocation3 + $0x1b8] sm:$0xff]
    %v295 = vld [vmem:[#allocation3 + $0x1c0] sm:$0xff]
    %v296 = vld [vmem:[#allocation3 + $0x1c8] sm:$0xff]
    %v297 = vld [vmem:[#allocation3 + $0x1d0] sm:$0xff]
    %v298 = vld [vmem:[#allocation3 + $0x1d8] sm:$0xff]
    %v299 = vld [vmem:[#allocation3 + $0x1e0] sm:$0xff]
    %v300 = vld [vmem:[#allocation3 + $0x1e8] sm:$0xff]
    %v301 = vld [vmem:[#allocation3 + $0x1f0] sm:$0xff]
    %v302 = vld [vmem:[#allocation3 + $0x1f8] sm:$0xff]
    %v303 = vld [vmem:[#allocation3 + $0x200] sm:$0xff]
    %v304 = vld [vmem:[#allocation3 + $0x208] sm:$0xff]
    %v305 = vld [vmem:[#allocation3 + $0x210] sm:$0xff]
    %v306 = vld [vmem:[#allocation3 + $0x218] sm:$0xff]
    %v307 = vld [vmem:[#allocation3 + $0x220] sm:$0xff]
    %v308 = vld [vmem:[#allocation3 + $0x228] sm:$0xff]
    %v309 = vld [vmem:[#allocation3 + $0x230] sm:$0xff]
    %v310 = vld [vmem:[#allocation3 + $0x238] sm:$0xff]
    %v311 = vld [vmem:[#allocation3 + $0x240] sm:$0xff]
    %v312 = vld [vmem:[#allocation3 + $0x248] sm:$0xff]
    %v313 = vld [vmem:[#allocation3 + $0x250] sm:$0xff]
    %v314 = vld [vmem:[#allocation3 + $0x258] sm:$0xff]
    %v315 = vld [vmem:[#allocation3 + $0x260] sm:$0xff]
    %v316 = vld [vmem:[#allocation3 + $0x268] sm:$0xff]
    %v317 = vld [vmem:[#allocation3 + $0x270] sm:$0xff]
    %v318 = vld [vmem:[#allocation3 + $0x278] sm:$0xff]
    %v319 = vld [vmem:[#allocation3 + $0x280] sm:$0xff]
    %v320 = vld [vmem:[#allocation3 + $0x288] sm:$0xff]
    %v321 = vld [vmem:[#allocation3 + $0x290] sm:$0xff]
    %v322 = vld [vmem:[#allocation3 + $0x298] sm:$0xff]
    %v323 = vld [vmem:[#allocation3 + $0x2a0] sm:$0xff]
    %v324 = vld [vmem:[#allocation3 + $0x2a8] sm:$0xff]
    %v325 = vld [vmem:[#allocation3 + $0x2b0] sm:$0xff]
    %v326 = vld [vmem:[#allocation3 + $0x2b8] sm:$0xff]
    %v327 = vld [vmem:[#allocation3 + $0x2c0] sm:$0xff]
    %v328 = vld [vmem:[#allocation3 + $0x2c8] sm:$0xff]
    %v329 = vld [vmem:[#allocation3 + $0x2d0] sm:$0xff]
    %v330 = vld [vmem:[#allocation3 + $0x2d8] sm:$0xff]
    %v331 = vld [vmem:[#allocation3 + $0x2e0] sm:$0xff]
    %v332 = vld [vmem:[#allocation3 + $0x2e8] sm:$0xff]
    %v333 = vld [vmem:[#allocation3 + $0x2f0] sm:$0xff]
    %v334 = vld [vmem:[#allocation3 + $0x2f8] sm:$0xff]
    %v335 = vld [vmem:[#allocation3 + $0x300] sm:$0xff]
    %v336 = vld [vmem:[#allocation3 + $0x308] sm:$0xff]
    %v337 = vld [vmem:[#allocation3 + $0x310] sm:$0xff]
    %v338 = vld [vmem:[#allocation3 + $0x318] sm:$0xff]
    %v339 = vld [vmem:[#allocation3 + $0x320] sm:$0xff]
    %v340 = vld [vmem:[#allocation3 + $0x328] sm:$0xff]
    %v341 = vld [vmem:[#allocation3 + $0x330] sm:$0xff]
    %v342 = vld [vmem:[#allocation3 + $0x338] sm:$0xff]
    %v343 = vld [vmem:[#allocation3 + $0x340] sm:$0xff]
    %v344 = vld [vmem:[#allocation3 + $0x348] sm:$0xff]
    %v345 = vld [vmem:[#allocation3 + $0x350] sm:$0xff]
    %v346 = vld [vmem:[#allocation3 + $0x358] sm:$0xff]
    %v347 = vld [vmem:[#allocation3 + $0x360] sm:$0xff]
    %v348 = vld [vmem:[#allocation3 + $0x368] sm:$0xff]
    %v349 = vld [vmem:[#allocation3 + $0x370] sm:$0xff]
    %v350 = vld [vmem:[#allocation3 + $0x378] sm:$0xff]
    %v351 = vld [vmem:[#allocation3 + $0x380] sm:$0xff]
    %v352 = vld [vmem:[#allocation3 + $0x388] sm:$0xff]
    %v353 = vld [vmem:[#allocation3 + $0x390] sm:$0xff]
    %v354 = vld [vmem:[#allocation3 + $0x398] sm:$0xff]
    %v355 = vld [vmem:[#allocation3 + $0x3a0] sm:$0xff]
    %v356 = vld [vmem:[#allocation3 + $0x3a8] sm:$0xff]
    %v357 = vld [vmem:[#allocation3 + $0x3b0] sm:$0xff]
    %v358 = vld [vmem:[#allocation3 + $0x3b8] sm:$0xff]
    %v359 = vld [vmem:[#allocation3 + $0x3c0] sm:$0xff]
    %v360 = vld [vmem:[#allocation3 + $0x3c8] sm:$0xff]
    %v361 = vld [vmem:[#allocation3 + $0x3d0] sm:$0xff]
    %v362 = vld [vmem:[#allocation3 + $0x3d8] sm:$0xff]
    %v363 = vld [vmem:[#allocation3 + $0x3e0] sm:$0xff]
    %v364 = vld [vmem:[#allocation3 + $0x3e8] sm:$0xff]
    %v365 = vld [vmem:[#allocation3 + $0x3f0] sm:$0xff]
    %v366 = vld [vmem:[#allocation3 + $0x3f8] sm:$0xff]
    %v367 = vld [vmem:[#allocation6] sm:$0xff]
    %v368 = vld [vmem:[#allocation6 + $0x8] sm:$0xff]
    %v369 = vld [vmem:[#allocation6 + $0x10] sm:$0xff]
    %v370 = vld [vmem:[#allocation6 + $0x18] sm:$0xff]
    %v371 = vld [vmem:[#allocation6 + $0x20] sm:$0xff]
    %v372 = vld [vmem:[#allocation6 + $0x28] sm:$0xff]
    %v373 = vld [vmem:[#allocation6 + $0x30] sm:$0xff]
    %v374 = vld [vmem:[#allocation6 + $0x38] sm:$0xff]
    %v375 = vld [vmem:[#allocation6 + $0x40] sm:$0xff]
    %v376 = vld [vmem:[#allocation6 + $0x48] sm:$0xff]
    %v377 = vld [vmem:[#allocation6 + $0x50] sm:$0xff]
    %v378 = vld [vmem:[#allocation6 + $0x58] sm:$0xff]
    %v379 = vld [vmem:[#allocation6 + $0x60] sm:$0xff]
    %v380 = vld [vmem:[#allocation6 + $0x68] sm:$0xff]
    %v381 = vld [vmem:[#allocation6 + $0x70] sm:$0xff]
    %v382 = vld [vmem:[#allocation6 + $0x78] sm:$0xff]
    %v383 = vld [vmem:[#allocation6 + $0x80] sm:$0xff]
    %v384 = vld [vmem:[#allocation6 + $0x88] sm:$0xff]
    %v385 = vld [vmem:[#allocation6 + $0x90] sm:$0xff]
    %v386 = vld [vmem:[#allocation6 + $0x98] sm:$0xff]
    %v387 = vld [vmem:[#allocation6 + $0xa0] sm:$0xff]
    %v388 = vld [vmem:[#allocation6 + $0xa8] sm:$0xff]
    %v389 = vld [vmem:[#allocation6 + $0xb0] sm:$0xff]
    %v390 = vld [vmem:[#allocation6 + $0xb8] sm:$0xff]
    %v391 = vld [vmem:[#allocation6 + $0xc0] sm:$0xff]
    %v392 = vld [vmem:[#allocation6 + $0xc8] sm:$0xff]
    %v393 = vld [vmem:[#allocation6 + $0xd0] sm:$0xff]
    %v394 = vld [vmem:[#allocation6 + $0xd8] sm:$0xff]
    %v395 = vld [vmem:[#allocation6 + $0xe0] sm:$0xff]
    %v396 = vld [vmem:[#allocation6 + $0xe8] sm:$0xff]
    %v397 = vld [vmem:[#allocation6 + $0xf0] sm:$0xff]
    %v398 = vld [vmem:[#allocation6 + $0xf8] sm:$0xff]
    %v399 = vld [vmem:[#allocation6 + $0x100] sm:$0xff]
    %v400 = vld [vmem:[#allocation6 + $0x108] sm:$0xff]
    %v401 = vld [vmem:[#allocation6 + $0x110] sm:$0xff]
    %v402 = vld [vmem:[#allocation6 + $0x118] sm:$0xff]
    %v403 = vld [vmem:[#allocation6 + $0x120] sm:$0xff]
    %v404 = vld [vmem:[#allocation6 + $0x128] sm:$0xff]
    %v405 = vld [vmem:[#allocation6 + $0x130] sm:$0xff]
    %v406 = vld [vmem:[#allocation6 + $0x138] sm:$0xff]
    %v407 = vld [vmem:[#allocation6 + $0x140] sm:$0xff]
    %v408 = vld [vmem:[#allocation6 + $0x148] sm:$0xff]
    %v409 = vld [vmem:[#allocation6 + $0x150] sm:$0xff]
    %v410 = vld [vmem:[#allocation6 + $0x158] sm:$0xff]
    %v411 = vld [vmem:[#allocation6 + $0x160] sm:$0xff]
    %v412 = vld [vmem:[#allocation6 + $0x168] sm:$0xff]
    %v413 = vld [vmem:[#allocation6 + $0x170] sm:$0xff]
    %v414 = vld [vmem:[#allocation6 + $0x178] sm:$0xff]
    %v415 = vld [vmem:[#allocation6 + $0x180] sm:$0xff]
    %v416 = vld [vmem:[#allocation6 + $0x188] sm:$0xff]
    %v417 = vld [vmem:[#allocation6 + $0x190] sm:$0xff]
    %v418 = vld [vmem:[#allocation6 + $0x198] sm:$0xff]
    %v419 = vld [vmem:[#allocation6 + $0x1a0] sm:$0xff]
    %v420 = vld [vmem:[#allocation6 + $0x1a8] sm:$0xff]
    %v421 = vld [vmem:[#allocation6 + $0x1b0] sm:$0xff]
    %v422 = vld [vmem:[#allocation6 + $0x1b8] sm:$0xff]
    %v423 = vld [vmem:[#allocation6 + $0x1c0] sm:$0xff]
    %v424 = vld [vmem:[#allocation6 + $0x1c8] sm:$0xff]
    %v425 = vld [vmem:[#allocation6 + $0x1d0] sm:$0xff]
    %v426 = vld [vmem:[#allocation6 + $0x1d8] sm:$0xff]
    %v427 = vld [vmem:[#allocation6 + $0x1e0] sm:$0xff]
    %v428 = vld [vmem:[#allocation6 + $0x1e8] sm:$0xff]
    %v429 = vld [vmem:[#allocation6 + $0x1f0] sm:$0xff]
    %v430 = vld [vmem:[#allocation6 + $0x1f8] sm:$0xff]
    %v431 = vld [vmem:[#allocation6 + $0x200] sm:$0xff]
    %v432 = vld [vmem:[#allocation6 + $0x208] sm:$0xff]
    %v433 = vld [vmem:[#allocation6 + $0x210] sm:$0xff]
    %v434 = vld [vmem:[#allocation6 + $0x218] sm:$0xff]
    %v435 = vld [vmem:[#allocation6 + $0x220] sm:$0xff]
    %v436 = vld [vmem:[#allocation6 + $0x228] sm:$0xff]
    %v437 = vld [vmem:[#allocation6 + $0x230] sm:$0xff]
    %v438 = vld [vmem:[#allocation6 + $0x238] sm:$0xff]
    %v439 = vld [vmem:[#allocation6 + $0x240] sm:$0xff]
    %v440 = vld [vmem:[#allocation6 + $0x248] sm:$0xff]
    %v441 = vld [vmem:[#allocation6 + $0x250] sm:$0xff]
    %v442 = vld [vmem:[#allocation6 + $0x258] sm:$0xff]
    %v443 = vld [vmem:[#allocation6 + $0x260] sm:$0xff]
    %v444 = vld [vmem:[#allocation6 + $0x268] sm:$0xff]
    %v445 = vld [vmem:[#allocation6 + $0x270] sm:$0xff]
    %v446 = vld [vmem:[#allocation6 + $0x278] sm:$0xff]
    %v447 = vld [vmem:[#allocation6 + $0x280] sm:$0xff]
    %v448 = vld [vmem:[#allocation6 + $0x288] sm:$0xff]
    %v449 = vld [vmem:[#allocation6 + $0x290] sm:$0xff]
    %v450 = vld [vmem:[#allocation6 + $0x298] sm:$0xff]
    %v451 = vld [vmem:[#allocation6 + $0x2a0] sm:$0xff]
    %v452 = vld [vmem:[#allocation6 + $0x2a8] sm:$0xff]
    %v453 = vld [vmem:[#allocation6 + $0x2b0] sm:$0xff]
    %v454 = vld [vmem:[#allocation6 + $0x2b8] sm:$0xff]
    %v455 = vld [vmem:[#allocation6 + $0x2c0] sm:$0xff]
    %v456 = vld [vmem:[#allocation6 + $0x2c8] sm:$0xff]
    %v457 = vld [vmem:[#allocation6 + $0x2d0] sm:$0xff]
    %v458 = vld [vmem:[#allocation6 + $0x2d8] sm:$0xff]
    %v459 = vld [vmem:[#allocation6 + $0x2e0] sm:$0xff]
    %v460 = vld [vmem:[#allocation6 + $0x2e8] sm:$0xff]
    %v461 = vld [vmem:[#allocation6 + $0x2f0] sm:$0xff]
    %v462 = vld [vmem:[#allocation6 + $0x2f8] sm:$0xff]
    %v463 = vld [vmem:[#allocation2] sm:$0xff]
    %v464 = vld [vmem:[#allocation2 + $0x8] sm:$0xff]
    %v465 = vld [vmem:[#allocation2 + $0x10] sm:$0xff]
    %v466 = vld [vmem:[#allocation2 + $0x18] sm:$0xff]
    %v467 = vld [vmem:[#allocation2 + $0x20] sm:$0xff]
    %v468 = vld [vmem:[#allocation2 + $0x28] sm:$0xff]
    %v469 = vld [vmem:[#allocation2 + $0x30] sm:$0xff]
    %v470 = vld [vmem:[#allocation2 + $0x38] sm:$0xff]
    %v471 = vld [vmem:[#allocation2 + $0x40] sm:$0xff]
    %v472 = vld [vmem:[#allocation2 + $0x48] sm:$0xff]
    %v473 = vld [vmem:[#allocation2 + $0x50] sm:$0xff]
    %v474 = vld [vmem:[#allocation2 + $0x58] sm:$0xff]
    %v475 = vld [vmem:[#allocation2 + $0x60] sm:$0xff]
    %v476 = vld [vmem:[#allocation2 + $0x68] sm:$0xff]
    %v477 = vld [vmem:[#allocation2 + $0x70] sm:$0xff]
    %v478 = vld [vmem:[#allocation2 + $0x78] sm:$0xff]
    %v479 = vld [vmem:[#allocation2 + $0x80] sm:$0xff]
    %v480 = vld [vmem:[#allocation2 + $0x88] sm:$0xff]
    %v481 = vld [vmem:[#allocation2 + $0x90] sm:$0xff]
    %v482 = vld [vmem:[#allocation2 + $0x98] sm:$0xff]
    %v483 = vld [vmem:[#allocation2 + $0xa0] sm:$0xff]
    %v484 = vld [vmem:[#allocation2 + $0xa8] sm:$0xff]
    %v485 = vld [vmem:[#allocation2 + $0xb0] sm:$0xff]
    %v486 = vld [vmem:[#allocation2 + $0xb8] sm:$0xff]
    %v487 = vld [vmem:[#allocation2 + $0xc0] sm:$0xff]
    %v488 = vld [vmem:[#allocation2 + $0xc8] sm:$0xff]
    %v489 = vld [vmem:[#allocation2 + $0xd0] sm:$0xff]
    %v490 = vld [vmem:[#allocation2 + $0xd8] sm:$0xff]
    %v491 = vld [vmem:[#allocation2 + $0xe0] sm:$0xff]
    %v492 = vld [vmem:[#allocation2 + $0xe8] sm:$0xff]
    %v493 = vld [vmem:[#allocation2 + $0xf0] sm:$0xff]
    %v494 = vld [vmem:[#allocation2 + $0xf8] sm:$0xff]
    %v495 = vld [vmem:[#allocation2 + $0x100] sm:$0xff]
    %v496 = vld [vmem:[#allocation2 + $0x108] sm:$0xff]
    %v497 = vld [vmem:[#allocation2 + $0x110] sm:$0xff]
    %v498 = vld [vmem:[#allocation2 + $0x118] sm:$0xff]
    %v499 = vld [vmem:[#allocation2 + $0x120] sm:$0xff]
    %v500 = vld [vmem:[#allocation2 + $0x128] sm:$0xff]
    %v501 = vld [vmem:[#allocation2 + $0x130] sm:$0xff]
    %v502 = vld [vmem:[#allocation2 + $0x138] sm:$0xff]
    %v503 = vld [vmem:[#allocation2 + $0x140] sm:$0xff]
    %v504 = vld [vmem:[#allocation2 + $0x148] sm:$0xff]
    %v505 = vld [vmem:[#allocation2 + $0x150] sm:$0xff]
    %v506 = vld [vmem:[#allocation2 + $0x158] sm:$0xff]
    %v507 = vld [vmem:[#allocation2 + $0x160] sm:$0xff]
    %v508 = vld [vmem:[#allocation2 + $0x168] sm:$0xff]
    %v509 = vld [vmem:[#allocation2 + $0x170] sm:$0xff]
    %v510 = vld [vmem:[#allocation2 + $0x178] sm:$0xff]
    %v511 = vld [vmem:[#allocation2 + $0x180] sm:$0xff]
    %v512 = vld [vmem:[#allocation2 + $0x188] sm:$0xff]
    %v513 = vld [vmem:[#allocation2 + $0x190] sm:$0xff]
    %v514 = vld [vmem:[#allocation2 + $0x198] sm:$0xff]
    %v515 = vld [vmem:[#allocation2 + $0x1a0] sm:$0xff]
    %v516 = vld [vmem:[#allocation2 + $0x1a8] sm:$0xff]
    %v517 = vld [vmem:[#allocation2 + $0x1b0] sm:$0xff]
    %v518 = vld [vmem:[#allocation2 + $0x1b8] sm:$0xff]
    %v519 = vld [vmem:[#allocation2 + $0x1c0] sm:$0xff]
    %v520 = vld [vmem:[#allocation2 + $0x1c8] sm:$0xff]
    %v521 = vld [vmem:[#allocation2 + $0x1d0] sm:$0xff]
    %v522 = vld [vmem:[#allocation2 + $0x1d8] sm:$0xff]
    %v523 = vld [vmem:[#allocation2 + $0x1e0] sm:$0xff]
    %v524 = vld [vmem:[#allocation2 + $0x1e8] sm:$0xff]
    %v525 = vld [vmem:[#allocation2 + $0x1f0] sm:$0xff]
    %v526 = vld [vmem:[#allocation2 + $0x1f8] sm:$0xff]
    %v527 = vld [vmem:[#allocation2 + $0x200] sm:$0xff]
    %v528 = vld [vmem:[#allocation2 + $0x208] sm:$0xff]
    %v529 = vld [vmem:[#allocation2 + $0x210] sm:$0xff]
    %v530 = vld [vmem:[#allocation2 + $0x218] sm:$0xff]
    %v531 = vld [vmem:[#allocation2 + $0x220] sm:$0xff]
    %v532 = vld [vmem:[#allocation2 + $0x228] sm:$0xff]
    %v533 = vld [vmem:[#allocation2 + $0x230] sm:$0xff]
    %v534 = vld [vmem:[#allocation2 + $0x238] sm:$0xff]
    %v535 = vld [vmem:[#allocation2 + $0x240] sm:$0xff]
    %v536 = vld [vmem:[#allocation2 + $0x248] sm:$0xff]
    %v537 = vld [vmem:[#allocation2 + $0x250] sm:$0xff]
    %v538 = vld [vmem:[#allocation2 + $0x258] sm:$0xff]
    %v539 = vld [vmem:[#allocation2 + $0x260] sm:$0xff]
    %v540 = vld [vmem:[#allocation2 + $0x268] sm:$0xff]
    %v541 = vld [vmem:[#allocation2 + $0x270] sm:$0xff]
    %v542 = vld [vmem:[#allocation2 + $0x278] sm:$0xff]
    %v543 = vld [vmem:[#allocation2 + $0x280] sm:$0xff]
    %v544 = vld [vmem:[#allocation2 + $0x288] sm:$0xff]
    %v545 = vld [vmem:[#allocation2 + $0x290] sm:$0xff]
    %v546 = vld [vmem:[#allocation2 + $0x298] sm:$0xff]
    %v547 = vld [vmem:[#allocation2 + $0x2a0] sm:$0xff]
    %v548 = vld [vmem:[#allocation2 + $0x2a8] sm:$0xff]
    %v549 = vld [vmem:[#allocation2 + $0x2b0] sm:$0xff]
    %v550 = vld [vmem:[#allocation2 + $0x2b8] sm:$0xff]
    %v551 = vld [vmem:[#allocation2 + $0x2c0] sm:$0xff]
    %v552 = vld [vmem:[#allocation2 + $0x2c8] sm:$0xff]
    %v553 = vld [vmem:[#allocation2 + $0x2d0] sm:$0xff]
    %v554 = vld [vmem:[#allocation2 + $0x2d8] sm:$0xff]
    %v555 = vld [vmem:[#allocation2 + $0x2e0] sm:$0xff]
    %v556 = vld [vmem:[#allocation2 + $0x2e8] sm:$0xff]
    %v557 = vld [vmem:[#allocation2 + $0x2f0] sm:$0xff]
    %v558 = vld [vmem:[#allocation2 + $0x2f8] sm:$0xff]
    %v559 = vld [vmem:[#allocation2 + $0x300] sm:$0xff]
    %v560 = vld [vmem:[#allocation2 + $0x308] sm:$0xff]
    %v561 = vld [vmem:[#allocation2 + $0x310] sm:$0xff]
    %v562 = vld [vmem:[#allocation2 + $0x318] sm:$0xff]
    %v563 = vld [vmem:[#allocation2 + $0x320] sm:$0xff]
    %v564 = vld [vmem:[#allocation2 + $0x328] sm:$0xff]
    %v565 = vld [vmem:[#allocation2 + $0x330] sm:$0xff]
    %v566 = vld [vmem:[#allocation2 + $0x338] sm:$0xff]
    %v567 = vld [vmem:[#allocation2 + $0x340] sm:$0xff]
    %v568 = vld [vmem:[#allocation2 + $0x348] sm:$0xff]
    %v569 = vld [vmem:[#allocation2 + $0x350] sm:$0xff]
    %v570 = vld [vmem:[#allocation2 + $0x358] sm:$0xff]
    %v571 = vld [vmem:[#allocation2 + $0x360] sm:$0xff]
    %v572 = vld [vmem:[#allocation2 + $0x368] sm:$0xff]
    %v573 = vld [vmem:[#allocation2 + $0x370] sm:$0xff]
    %v574 = vld [vmem:[#allocation2 + $0x378] sm:$0xff]
    %v575 = vld [vmem:[#allocation2 + $0x380] sm:$0xff]
    %v576 = vld [vmem:[#allocation2 + $0x388] sm:$0xff]
    %v577 = vld [vmem:[#allocation2 + $0x390] sm:$0xff]
    %v578 = vld [vmem:[#allocation2 + $0x398] sm:$0xff]
    %v579 = vld [vmem:[#allocation2 + $0x3a0] sm:$0xff]
    %v580 = vld [vmem:[#allocation2 + $0x3a8] sm:$0xff]
    %v581 = vld [vmem:[#allocation2 + $0x3b0] sm:$0xff]
    %v582 = vld [vmem:[#allocation2 + $0x3b8] sm:$0xff]
    %v583 = vld [vmem:[#allocation2 + $0x3c0] sm:$0xff]
    %v584 = vld [vmem:[#allocation2 + $0x3c8] sm:$0xff]
    %v585 = vld [vmem:[#allocation2 + $0x3d0] sm:$0xff]
    %v586 = vld [vmem:[#allocation2 + $0x3d8] sm:$0xff]
    %v587 = vld [vmem:[#allocation2 + $0x3e0] sm:$0xff]
    %v588 = vld [vmem:[#allocation2 + $0x3e8] sm:$0xff]
    %v589 = vld [vmem:[#allocation2 + $0x3f0] sm:$0xff]
    %v590 = vld [vmem:[#allocation2 + $0x3f8] sm:$0xff]
    %v591 = vld [vmem:[#allocation2 + $0x400] sm:$0xff]
    %v592 = vld [vmem:[#allocation2 + $0x408] sm:$0xff]
    %v593 = vld [vmem:[#allocation2 + $0x410] sm:$0xff]
    %v594 = vld [vmem:[#allocation2 + $0x418] sm:$0xff]
    %v595 = vld [vmem:[#allocation2 + $0x420] sm:$0xff]
    %v596 = vld [vmem:[#allocation2 + $0x428] sm:$0xff]
    %v597 = vld [vmem:[#allocation2 + $0x430] sm:$0xff]
    %v598 = vld [vmem:[#allocation2 + $0x438] sm:$0xff]
    %v599 = vld [vmem:[#allocation2 + $0x440] sm:$0xff]
    %v600 = vld [vmem:[#allocation2 + $0x448] sm:$0xff]
    %v601 = vld [vmem:[#allocation2 + $0x450] sm:$0xff]
    %v602 = vld [vmem:[#allocation2 + $0x458] sm:$0xff]
    %v603 = vld [vmem:[#allocation2 + $0x460] sm:$0xff]
    %v604 = vld [vmem:[#allocation2 + $0x468] sm:$0xff]
    %v605 = vld [vmem:[#allocation2 + $0x470] sm:$0xff]
    %v606 = vld [vmem:[#allocation2 + $0x478] sm:$0xff]
    %v607 = vld [vmem:[#allocation2 + $0x480] sm:$0xff]
    %v608 = vld [vmem:[#allocation2 + $0x488] sm:$0xff]
    %v609 = vld [vmem:[#allocation2 + $0x490] sm:$0xff]
    %v610 = vld [vmem:[#allocation2 + $0x498] sm:$0xff]
    %v611 = vld [vmem:[#allocation2 + $0x4a0] sm:$0xff]
    %v612 = vld [vmem:[#allocation2 + $0x4a8] sm:$0xff]
    %v613 = vld [vmem:[#allocation2 + $0x4b0] sm:$0xff]
    %v614 = vld [vmem:[#allocation2 + $0x4b8] sm:$0xff]
    %v615 = vld [vmem:[#allocation2 + $0x4c0] sm:$0xff]
    %v616 = vld [vmem:[#allocation2 + $0x4c8] sm:$0xff]
    %v617 = vld [vmem:[#allocation2 + $0x4d0] sm:$0xff]
    %v618 = vld [vmem:[#allocation2 + $0x4d8] sm:$0xff]
    %v619 = vld [vmem:[#allocation2 + $0x4e0] sm:$0xff]
    %v620 = vld [vmem:[#allocation2 + $0x4e8] sm:$0xff]
    %v621 = vld [vmem:[#allocation2 + $0x4f0] sm:$0xff]
    %v622 = vld [vmem:[#allocation2 + $0x4f8] sm:$0xff]
    %v623 = vld [vmem:[#allocation2 + $0x500] sm:$0xff]
    %v624 = vld [vmem:[#allocation2 + $0x508] sm:$0xff]
    %v625 = vld [vmem:[#allocation2 + $0x510] sm:$0xff]
    %v626 = vld [vmem:[#allocation2 + $0x518] sm:$0xff]
    %v627 = vld [vmem:[#allocation2 + $0x520] sm:$0xff]
    %v628 = vld [vmem:[#allocation2 + $0x528] sm:$0xff]
    %v629 = vld [vmem:[#allocation2 + $0x530] sm:$0xff]
    %v630 = vld [vmem:[#allocation2 + $0x538] sm:$0xff]
    %v631 = vld [vmem:[#allocation2 + $0x540] sm:$0xff]
    %v632 = vld [vmem:[#allocation2 + $0x548] sm:$0xff]
    %v633 = vld [vmem:[#allocation2 + $0x550] sm:$0xff]
    %v634 = vld [vmem:[#allocation2 + $0x558] sm:$0xff]
    %v635 = vld [vmem:[#allocation2 + $0x560] sm:$0xff]
    %v636 = vld [vmem:[#allocation2 + $0x568] sm:$0xff]
    %v637 = vld [vmem:[#allocation2 + $0x570] sm:$0xff]
    %v638 = vld [vmem:[#allocation2 + $0x578] sm:$0xff]
    %v639 = vld [vmem:[#allocation2 + $0x580] sm:$0xff]
    %v640 = vld [vmem:[#allocation2 + $0x588] sm:$0xff]
    %v641 = vld [vmem:[#allocation2 + $0x590] sm:$0xff]
    %v642 = vld [vmem:[#allocation2 + $0x598] sm:$0xff]
    %v643 = vld [vmem:[#allocation2 + $0x5a0] sm:$0xff]
    %v644 = vld [vmem:[#allocation2 + $0x5a8] sm:$0xff]
    %v645 = vld [vmem:[#allocation2 + $0x5b0] sm:$0xff]
    %v646 = vld [vmem:[#allocation2 + $0x5b8] sm:$0xff]
    %v647 = vld [vmem:[#allocation2 + $0x5c0] sm:$0xff]
    %v648 = vld [vmem:[#allocation2 + $0x5c8] sm:$0xff]
    %v649 = vld [vmem:[#allocation2 + $0x5d0] sm:$0xff]
    %v650 = vld [vmem:[#allocation2 + $0x5d8] sm:$0xff]
    %v651 = vld [vmem:[#allocation2 + $0x5e0] sm:$0xff]
    %v652 = vld [vmem:[#allocation2 + $0x5e8] sm:$0xff]
    %v653 = vld [vmem:[#allocation2 + $0x5f0] sm:$0xff]
    %v654 = vld [vmem:[#allocation2 + $0x5f8] sm:$0xff]
    %655 = vmatprep.subr.mxu0 %v368
    %656 = vmatpush1.xpose.msra.mxu0 %v367
    %657 = vmatprep.subr.mxu0 %v370
    %658 = vmatpush1.xpose.msra.mxu0 %v369
    %659 = vmatprep.subr.mxu0 %v372
    %660 = vmatpush1.xpose.msra.mxu0 %v371
    %661 = vmatprep.subr.mxu0 %v374
    %662 = vmatpush1.xpose.msra.mxu0 %v373
    %663 = vmatprep.subr.mxu0 %v376
    %664 = vmatpush1.xpose.msra.mxu0 %v375
    %665 = vmatprep.subr.mxu0 %v378
    %666 = vmatpush1.xpose.msra.mxu0 %v377
    %667 = vmatprep.subr.mxu0 %v380
    %668 = vmatpush1.xpose.msra.mxu0 %v379
    %669 = vmatprep.subr.mxu0 %v382
    %670 = vmatpush1.xpose.msra.mxu0 %v381
    %671 = vmatprep.subr.mxu0 %v384
    %672 = vmatpush1.xpose.msra.mxu0 %v383
    %673 = vmatprep.subr.mxu0 %v386
    %674 = vmatpush1.xpose.msra.mxu0 %v385
    %675 = vmatprep.subr.mxu0 %v388
    %676 = vmatpush1.xpose.msra.mxu0 %v387
    %677 = vmatprep.subr.mxu0 %v390
    %678 = vmatpush1.xpose.msra.mxu0 %v389
    %679 = vmatprep.subr.mxu0 %v392
    %680 = vmatpush1.xpose.msra.mxu0 %v391
    %681 = vmatprep.subr.mxu0 %v394
    %682 = vmatpush1.xpose.msra.mxu0 %v393
    %683 = vmatprep.subr.mxu0 %v396
    %684 = vmatpush1.xpose.msra.mxu0 %v395
    %685 = vmatprep.subr.mxu0 %v398
    %686 = vmatpush1.xpose.msra.mxu0 %v397
    %687 = vmatprep.subr.mxu0 %v400
    %688 = vmatpush1.xpose.msra.mxu0 %v399
    %689 = vmatprep.subr.mxu0 %v402
    %690 = vmatpush1.xpose.msra.mxu0 %v401
    %691 = vmatprep.subr.mxu0 %v404
    %692 = vmatpush1.xpose.msra.mxu0 %v403
    %693 = vmatprep.subr.mxu0 %v406
    %694 = vmatpush1.xpose.msra.mxu0 %v405
    %695 = vmatprep.subr.mxu0 %v408
    %696 = vmatpush1.xpose.msra.mxu0 %v407
    %697 = vmatprep.subr.mxu0 %v410
    %698 = vmatpush1.xpose.msra.mxu0 %v409
    %699 = vmatprep.subr.mxu0 %v412
    %700 = vmatpush1.xpose.msra.mxu0 %v411
    %701 = vmatprep.subr.mxu0 %v414
    %702 = vmatpush1.xpose.msra.mxu0 %v413
    %703 = vmatprep.subr.mxu0 %v416
    %704 = vmatpush1.xpose.msra.mxu0 %v415
    %705 = vmatprep.subr.mxu0 %v418
    %706 = vmatpush1.xpose.msra.mxu0 %v417
    %707 = vmatprep.subr.mxu0 %v420
    %708 = vmatpush1.xpose.msra.mxu0 %v419
    %709 = vmatprep.subr.mxu0 %v422
    %710 = vmatpush1.xpose.msra.mxu0 %v421
    %711 = vmatprep.subr.mxu0 %v424
    %712 = vmatpush1.xpose.msra.mxu0 %v423
    %713 = vmatprep.subr.mxu0 %v426
    %714 = vmatpush1.xpose.msra.mxu0 %v425
    %715 = vmatprep.subr.mxu0 %v428
    %716 = vmatpush1.xpose.msra.mxu0 %v427
    %717 = vmatprep.subr.mxu0 %v430
    %718 = vmatpush1.xpose.msra.mxu0 %v429
    %719 = vmatprep.mubr.f32.mxu0 %v240
    %720 = vmatmul.mubr.f32.gmra.mrb[0].mxu0 %v239
    %v721 = vpop.f32.mrb[0].mxu0
    %v722 = vadd.f32 0.0, %v721
    %v723 = vpop.f32.mrb[0].mxu0
    %v724 = vadd.f32 0.0, %v723
    %725 = vmatprep.mubr.f32.mxu0 %v242
    %726 = vmatmul.mubr.f32.gmra.mrb[0].mxu0 %v241
    %v727 = vpop.f32.mrb[0].mxu0
    %v728 = vadd.f32 0.0, %v727
    %v729 = vpop.f32.mrb[0].mxu0
    %v730 = vadd.f32 0.0, %v729
    %731 = vmatprep.mubr.f32.mxu0 %v244
    %732 = vmatmul.mubr.f32.gmra.mrb[0].mxu0 %v243
    %v733 = vpop.f32.mrb[0].mxu0
    %v734 = vadd.f32 0.0, %v733
    %v735 = vpop.f32.mrb[0].mxu0
    %v736 = vadd.f32 0.0, %v735
    %737 = vmatprep.mubr.f32.mxu0 %v246
    %738 = vmatmul.mubr.f32.gmra.mrb[0].mxu0 %v245
    %v739 = vpop.f32.mrb[0].mxu0
    %v740 = vadd.f32 0.0, %v739
    %v741 = vpop.f32.mrb[0].mxu0
    %v742 = vadd.f32 0.0, %v741
    %743 = vmatprep.mubr.f32.mxu0 %v248
    %744 = vmatmul.mubr.f32.gmra.mrb[0].mxu0 %v247
    %v745 = vpop.f32.mrb[0].mxu0
    %v746 = vadd.f32 0.0, %v745
    %v747 = vpop.f32.mrb[0].mxu0
    %v748 = vadd.f32 0.0, %v747
    %749 = vmatprep.mubr.f32.mxu0 %v250
    %750 = vmatmul.mubr.f32.gmra.mrb[0].mxu0 %v249
    %v751 = vpop.f32.mrb[0].mxu0
    %v752 = vadd.f32 0.0, %v751
    %v753 = vpop.f32.mrb[0].mxu0
    %v754 = vadd.f32 0.0, %v753
    %755 = vmatprep.mubr.f32.mxu0 %v252
    %756 = vmatmul.mubr.f32.gmra.mrb[0].mxu0 %v251
    %v757 = vpop.f32.mrb[0].mxu0
    %v758 = vadd.f32 0.0, %v757
    %v759 = vpop.f32.mrb[0].mxu0
    %v760 = vadd.f32 0.0, %v759
    %761 = vmatprep.mubr.f32.mxu0 %v254
    %762 = vmatmul.mubr.f32.gmra.mrb[0].mxu0 %v253
    %v763 = vpop.f32.mrb[0].mxu0
    %v764 = vadd.f32 0.0, %v763
    %v765 = vpop.f32.mrb[0].mxu0
    %v766 = vadd.f32 0.0, %v765
    %767 = vmatprep.mubr.f32.mxu0 %v256
    %768 = vmatmul.mubr.f32.gmra.mrb[0].mxu0 %v255
    %v769 = vpop.f32.mrb[0].mxu0
    %v770 = vadd.f32 0.0, %v769
    %v771 = vpop.f32.mrb[0].mxu0
    %v772 = vadd.f32 0.0, %v771
    %773 = vmatprep.mubr.f32.mxu0 %v258
    %774 = vmatmul.mubr.f32.gmra.mrb[0].mxu0 %v257
    %v775 = vpop.f32.mrb[0].mxu0
    %v776 = vadd.f32 0.0, %v775
    %v777 = vpop.f32.mrb[0].mxu0
    %v778 = vadd.f32 0.0, %v777
    %779 = vmatprep.mubr.f32.mxu0 %v260
    %780 = vmatmul.mubr.f32.gmra.mrb[0].mxu0 %v259
    %v781 = vpop.f32.mrb[0].mxu0
    %v782 = vadd.f32 0.0, %v781
    %v783 = vpop.f32.mrb[0].mxu0
    %v784 = vadd.f32 0.0, %v783
    %785 = vmatprep.mubr.f32.mxu0 %v262
    %786 = vmatmul.mubr.f32.gmra.mrb[0].mxu0 %v261
    %v787 = vpop.f32.mrb[0].mxu0
    %v788 = vadd.f32 0.0, %v787
    %v789 = vpop.f32.mrb[0].mxu0
    %v790 = vadd.f32 0.0, %v789
    %791 = vmatprep.mubr.f32.mxu0 %v264
    %792 = vmatmul.mubr.f32.gmra.mrb[0].mxu0 %v263
    %v793 = vpop.f32.mrb[0].mxu0
    %v794 = vadd.f32 0.0, %v793
    %v795 = vpop.f32.mrb[0].mxu0
    %v796 = vadd.f32 0.0, %v795
    %797 = vmatprep.mubr.f32.mxu0 %v266
    %798 = vmatmul.mubr.f32.gmra.mrb[0].mxu0 %v265
    %v799 = vpop.f32.mrb[0].mxu0
    %v800 = vadd.f32 0.0, %v799
    %v801 = vpop.f32.mrb[0].mxu0
    %v802 = vadd.f32 0.0, %v801
    %803 = vmatprep.mubr.f32.mxu0 %v268
    %804 = vmatmul.mubr.f32.gmra.mrb[0].mxu0 %v267
    %v805 = vpop.f32.mrb[0].mxu0
    %v806 = vadd.f32 0.0, %v805
    %v807 = vpop.f32.mrb[0].mxu0
    %v808 = vadd.f32 0.0, %v807
    %809 = vmatprep.mubr.f32.mxu0 %v270
    %810 = vmatmul.mubr.f32.gmra.mrb[0].mxu0 %v269
    %v811 = vpop.f32.mrb[0].mxu0
    %v812 = vadd.f32 0.0, %v811
    %v813 = vpop.f32.mrb[0].mxu0
    %v814 = vadd.f32 0.0, %v813
    %815 = vmatprep.mubr.f32.mxu0 %v272
    %816 = vmatmul.mubr.f32.gmra.mrb[0].mxu0 %v271
    %v817 = vpop.f32.mrb[0].mxu0
    %v818 = vadd.f32 0.0, %v817
    %v819 = vpop.f32.mrb[0].mxu0
    %v820 = vadd.f32 0.0, %v819
    %821 = vmatprep.mubr.f32.mxu0 %v274
    %822 = vmatmul.mubr.f32.gmra.mrb[0].mxu0 %v273
    %v823 = vpop.f32.mrb[0].mxu0
    %v824 = vadd.f32 0.0, %v823
    %v825 = vpop.f32.mrb[0].mxu0
    %v826 = vadd.f32 0.0, %v825
    %827 = vmatprep.mubr.f32.mxu0 %v276
    %828 = vmatmul.mubr.f32.gmra.mrb[0].mxu0 %v275
    %v829 = vpop.f32.mrb[0].mxu0
    %v830 = vadd.f32 0.0, %v829
    %v831 = vpop.f32.mrb[0].mxu0
    %v832 = vadd.f32 0.0, %v831
    %833 = vmatprep.mubr.f32.mxu0 %v278
    %834 = vmatmul.mubr.f32.gmra.mrb[0].mxu0 %v277
    %v835 = vpop.f32.mrb[0].mxu0
    %v836 = vadd.f32 0.0, %v835
    %v837 = vpop.f32.mrb[0].mxu0
    %v838 = vadd.f32 0.0, %v837
    %839 = vmatprep.mubr.f32.mxu0 %v280
    %840 = vmatmul.mubr.f32.gmra.mrb[0].mxu0 %v279
    %v841 = vpop.f32.mrb[0].mxu0
    %v842 = vadd.f32 0.0, %v841
    %v843 = vpop.f32.mrb[0].mxu0
    %v844 = vadd.f32 0.0, %v843
    %845 = vmatprep.mubr.f32.mxu0 %v282
    %846 = vmatmul.mubr.f32.gmra.mrb[0].mxu0 %v281
    %v847 = vpop.f32.mrb[0].mxu0
    %v848 = vadd.f32 0.0, %v847
    %v849 = vpop.f32.mrb[0].mxu0
    %v850 = vadd.f32 0.0, %v849
    %851 = vmatprep.mubr.f32.mxu0 %v284
    %852 = vmatmul.mubr.f32.gmra.mrb[0].mxu0 %v283
    %v853 = vpop.f32.mrb[0].mxu0
    %v854 = vadd.f32 0.0, %v853
    %v855 = vpop.f32.mrb[0].mxu0
    %v856 = vadd.f32 0.0, %v855
    %857 = vmatprep.mubr.f32.mxu0 %v286
    %858 = vmatmul.mubr.f32.gmra.mrb[0].mxu0 %v285
    %v859 = vpop.f32.mrb[0].mxu0
    %v860 = vadd.f32 0.0, %v859
    %v861 = vpop.f32.mrb[0].mxu0
    %v862 = vadd.f32 0.0, %v861
    %863 = vmatprep.mubr.f32.mxu0 %v288
    %864 = vmatmul.mubr.f32.gmra.mrb[0].mxu0 %v287
    %v865 = vpop.f32.mrb[0].mxu0
    %v866 = vadd.f32 0.0, %v865
    %v867 = vpop.f32.mrb[0].mxu0
    %v868 = vadd.f32 0.0, %v867
    %869 = vmatprep.mubr.f32.mxu0 %v290
    %870 = vmatmul.mubr.f32.gmra.mrb[0].mxu0 %v289
    %v871 = vpop.f32.mrb[0].mxu0
    %v872 = vadd.f32 0.0, %v871
    %v873 = vpop.f32.mrb[0].mxu0
    %v874 = vadd.f32 0.0, %v873
    %875 = vmatprep.mubr.f32.mxu0 %v292
    %876 = vmatmul.mubr.f32.gmra.mrb[0].mxu0 %v291
    %v877 = vpop.f32.mrb[0].mxu0
    %v878 = vadd.f32 0.0, %v877
    %v879 = vpop.f32.mrb[0].mxu0
    %v880 = vadd.f32 0.0, %v879
    %881 = vmatprep.mubr.f32.mxu0 %v294
    %882 = vmatmul.mubr.f32.gmra.mrb[0].mxu0 %v293
    %v883 = vpop.f32.mrb[0].mxu0
    %v884 = vadd.f32 0.0, %v883
    %v885 = vpop.f32.mrb[0].mxu0
    %v886 = vadd.f32 0.0, %v885
    %887 = vmatprep.mubr.f32.mxu0 %v296
    %888 = vmatmul.mubr.f32.gmra.mrb[0].mxu0 %v295
    %v889 = vpop.f32.mrb[0].mxu0
    %v890 = vadd.f32 0.0, %v889
    %v891 = vpop.f32.mrb[0].mxu0
    %v892 = vadd.f32 0.0, %v891
    %893 = vmatprep.mubr.f32.mxu0 %v298
    %894 = vmatmul.mubr.f32.gmra.mrb[0].mxu0 %v297
    %v895 = vpop.f32.mrb[0].mxu0
    %v896 = vadd.f32 0.0, %v895
    %v897 = vpop.f32.mrb[0].mxu0
    %v898 = vadd.f32 0.0, %v897
    %899 = vmatprep.mubr.f32.mxu0 %v300
    %900 = vmatmul.mubr.f32.gmra.mrb[0].mxu0 %v299
    %v901 = vpop.f32.mrb[0].mxu0
    %v902 = vadd.f32 0.0, %v901
    %v903 = vpop.f32.mrb[0].mxu0
    %v904 = vadd.f32 0.0, %v903
    %905 = vmatprep.mubr.f32.mxu0 %v302
    %906 = vmatmul.mubr.f32.gmra.mrb[0].mxu0 %v301
    %v907 = vpop.f32.mrb[0].mxu0
    %v908 = vadd.f32 0.0, %v907
    %v909 = vpop.f32.mrb[0].mxu0
    %v910 = vadd.f32 0.0, %v909
    %911 = vmatprep.mubr.f32.mxu0 %v304
    %912 = vmatmul.mubr.f32.gmra.mrb[0].mxu0 %v303
    %v913 = vpop.f32.mrb[0].mxu0
    %v914 = vadd.f32 0.0, %v913
    %v915 = vpop.f32.mrb[0].mxu0
    %v916 = vadd.f32 0.0, %v915
    %917 = vmatprep.mubr.f32.mxu0 %v306
    %918 = vmatmul.mubr.f32.gmra.mrb[0].mxu0 %v305
    %v919 = vpop.f32.mrb[0].mxu0
    %v920 = vadd.f32 0.0, %v919
    %v921 = vpop.f32.mrb[0].mxu0
    %v922 = vadd.f32 0.0, %v921
    %923 = vmatprep.mubr.f32.mxu0 %v308
    %924 = vmatmul.mubr.f32.gmra.mrb[0].mxu0 %v307
    %v925 = vpop.f32.mrb[0].mxu0
    %v926 = vadd.f32 0.0, %v925
    %v927 = vpop.f32.mrb[0].mxu0
    %v928 = vadd.f32 0.0, %v927
    %929 = vmatprep.mubr.f32.mxu0 %v310
    %930 = vmatmul.mubr.f32.gmra.mrb[0].mxu0 %v309
    %v931 = vpop.f32.mrb[0].mxu0
    %v932 = vadd.f32 0.0, %v931
    %v933 = vpop.f32.mrb[0].mxu0
    %v934 = vadd.f32 0.0, %v933
    %935 = vmatprep.mubr.f32.mxu0 %v312
    %936 = vmatmul.mubr.f32.gmra.mrb[0].mxu0 %v311
    %v937 = vpop.f32.mrb[0].mxu0
    %v938 = vadd.f32 0.0, %v937
    %v939 = vpop.f32.mrb[0].mxu0
    %v940 = vadd.f32 0.0, %v939
    %941 = vmatprep.mubr.f32.mxu0 %v314
    %942 = vmatmul.mubr.f32.gmra.mrb[0].mxu0 %v313
    %v943 = vpop.f32.mrb[0].mxu0
    %v944 = vadd.f32 0.0, %v943
    %v945 = vpop.f32.mrb[0].mxu0
    %v946 = vadd.f32 0.0, %v945
    %947 = vmatprep.mubr.f32.mxu0 %v316
    %948 = vmatmul.mubr.f32.gmra.mrb[0].mxu0 %v315
    %v949 = vpop.f32.mrb[0].mxu0
    %v950 = vadd.f32 0.0, %v949
    %v951 = vpop.f32.mrb[0].mxu0
    %v952 = vadd.f32 0.0, %v951
    %953 = vmatprep.mubr.f32.mxu0 %v318
    %954 = vmatmul.mubr.f32.gmra.mrb[0].mxu0 %v317
    %v955 = vpop.f32.mrb[0].mxu0
    %v956 = vadd.f32 0.0, %v955
    %v957 = vpop.f32.mrb[0].mxu0
    %v958 = vadd.f32 0.0, %v957
    %959 = vmatprep.mubr.f32.mxu0 %v320
    %960 = vmatmul.mubr.f32.gmra.mrb[0].mxu0 %v319
    %v961 = vpop.f32.mrb[0].mxu0
    %v962 = vadd.f32 0.0, %v961
    %v963 = vpop.f32.mrb[0].mxu0
    %v964 = vadd.f32 0.0, %v963
    %965 = vmatprep.mubr.f32.mxu0 %v322
    %966 = vmatmul.mubr.f32.gmra.mrb[0].mxu0 %v321
    %v967 = vpop.f32.mrb[0].mxu0
    %v968 = vadd.f32 0.0, %v967
    %v969 = vpop.f32.mrb[0].mxu0
    %v970 = vadd.f32 0.0, %v969
    %971 = vmatprep.mubr.f32.mxu0 %v324
    %972 = vmatmul.mubr.f32.gmra.mrb[0].mxu0 %v323
    %v973 = vpop.f32.mrb[0].mxu0
    %v974 = vadd.f32 0.0, %v973
    %v975 = vpop.f32.mrb[0].mxu0
    %v976 = vadd.f32 0.0, %v975
    %977 = vmatprep.mubr.f32.mxu0 %v326
    %978 = vmatmul.mubr.f32.gmra.mrb[0].mxu0 %v325
    %v979 = vpop.f32.mrb[0].mxu0
    %v980 = vadd.f32 0.0, %v979
    %v981 = vpop.f32.mrb[0].mxu0
    %v982 = vadd.f32 0.0, %v981
    %983 = vmatprep.mubr.f32.mxu0 %v328
    %984 = vmatmul.mubr.f32.gmra.mrb[0].mxu0 %v327
    %v985 = vpop.f32.mrb[0].mxu0
    %v986 = vadd.f32 0.0, %v985
    %v987 = vpop.f32.mrb[0].mxu0
    %v988 = vadd.f32 0.0, %v987
    %989 = vmatprep.mubr.f32.mxu0 %v330
    %990 = vmatmul.mubr.f32.gmra.mrb[0].mxu0 %v329
    %v991 = vpop.f32.mrb[0].mxu0
    %v992 = vadd.f32 0.0, %v991
    %v993 = vpop.f32.mrb[0].mxu0
    %v994 = vadd.f32 0.0, %v993
    %995 = vmatprep.mubr.f32.mxu0 %v332
    %996 = vmatmul.mubr.f32.gmra.mrb[0].mxu0 %v331
    %v997 = vpop.f32.mrb[0].mxu0
    %v998 = vadd.f32 0.0, %v997
    %v999 = vpop.f32.mrb[0].mxu0
    %v1000 = vadd.f32 0.0, %v999
    %1001 = vmatprep.mubr.f32.mxu0 %v334
    %1002 = vmatmul.mubr.f32.gmra.mrb[0].mxu0 %v333
    %v1003 = vpop.f32.mrb[0].mxu0
    %v1004 = vadd.f32 0.0, %v1003
    %v1005 = vpop.f32.mrb[0].mxu0
    %v1006 = vadd.f32 0.0, %v1005
    %1007 = vmatprep.mubr.f32.mxu0 %v336
    %1008 = vmatmul.mubr.f32.gmra.mrb[0].mxu0 %v335
    %v1009 = vpop.f32.mrb[0].mxu0
    %v1010 = vadd.f32 0.0, %v1009
    %v1011 = vpop.f32.mrb[0].mxu0
    %v1012 = vadd.f32 0.0, %v1011
    %1013 = vmatprep.mubr.f32.mxu0 %v338
    %1014 = vmatmul.mubr.f32.gmra.mrb[0].mxu0 %v337
    %v1015 = vpop.f32.mrb[0].mxu0
    %v1016 = vadd.f32 0.0, %v1015
    %v1017 = vpop.f32.mrb[0].mxu0
    %v1018 = vadd.f32 0.0, %v1017
    %1019 = vmatprep.mubr.f32.mxu0 %v340
    %1020 = vmatmul.mubr.f32.gmra.mrb[0].mxu0 %v339
    %v1021 = vpop.f32.mrb[0].mxu0
    %v1022 = vadd.f32 0.0, %v1021
    %v1023 = vpop.f32.mrb[0].mxu0
    %v1024 = vadd.f32 0.0, %v1023
    %1025 = vmatprep.mubr.f32.mxu0 %v342
    %1026 = vmatmul.mubr.f32.gmra.mrb[0].mxu0 %v341
    %v1027 = vpop.f32.mrb[0].mxu0
    %v1028 = vadd.f32 0.0, %v1027
    %v1029 = vpop.f32.mrb[0].mxu0
    %v1030 = vadd.f32 0.0, %v1029
    %1031 = vmatprep.mubr.f32.mxu0 %v344
    %1032 = vmatmul.mubr.f32.gmra.mrb[0].mxu0 %v343
    %v1033 = vpop.f32.mrb[0].mxu0
    %v1034 = vadd.f32 0.0, %v1033
    %v1035 = vpop.f32.mrb[0].mxu0
    %v1036 = vadd.f32 0.0, %v1035
    %1037 = vmatprep.mubr.f32.mxu0 %v346
    %1038 = vmatmul.mubr.f32.gmra.mrb[0].mxu0 %v345
    %v1039 = vpop.f32.mrb[0].mxu0
    %v1040 = vadd.f32 0.0, %v1039
    %v1041 = vpop.f32.mrb[0].mxu0
    %v1042 = vadd.f32 0.0, %v1041
    %1043 = vmatprep.mubr.f32.mxu0 %v348
    %1044 = vmatmul.mubr.f32.gmra.mrb[0].mxu0 %v347
    %v1045 = vpop.f32.mrb[0].mxu0
    %v1046 = vadd.f32 0.0, %v1045
    %v1047 = vpop.f32.mrb[0].mxu0
    %v1048 = vadd.f32 0.0, %v1047
    %1049 = vmatprep.mubr.f32.mxu0 %v350
    %1050 = vmatmul.mubr.f32.gmra.mrb[0].mxu0 %v349
    %v1051 = vpop.f32.mrb[0].mxu0
    %v1052 = vadd.f32 0.0, %v1051
    %v1053 = vpop.f32.mrb[0].mxu0
    %v1054 = vadd.f32 0.0, %v1053
    %1055 = vmatprep.mubr.f32.mxu0 %v352
    %1056 = vmatmul.mubr.f32.gmra.mrb[0].mxu0 %v351
    %v1057 = vpop.f32.mrb[0].mxu0
    %v1058 = vadd.f32 0.0, %v1057
    %v1059 = vpop.f32.mrb[0].mxu0
    %v1060 = vadd.f32 0.0, %v1059
    %1061 = vmatprep.mubr.f32.mxu0 %v354
    %1062 = vmatmul.mubr.f32.gmra.mrb[0].mxu0 %v353
    %v1063 = vpop.f32.mrb[0].mxu0
    %v1064 = vadd.f32 0.0, %v1063
    %v1065 = vpop.f32.mrb[0].mxu0
    %v1066 = vadd.f32 0.0, %v1065
    %1067 = vmatprep.mubr.f32.mxu0 %v356
    %1068 = vmatmul.mubr.f32.gmra.mrb[0].mxu0 %v355
    %v1069 = vpop.f32.mrb[0].mxu0
    %v1070 = vadd.f32 0.0, %v1069
    %v1071 = vpop.f32.mrb[0].mxu0
    %v1072 = vadd.f32 0.0, %v1071
    %1073 = vmatprep.mubr.f32.mxu0 %v358
    %1074 = vmatmul.mubr.f32.gmra.mrb[0].mxu0 %v357
    %v1075 = vpop.f32.mrb[0].mxu0
    %v1076 = vadd.f32 0.0, %v1075
    %v1077 = vpop.f32.mrb[0].mxu0
    %v1078 = vadd.f32 0.0, %v1077
    %1079 = vmatprep.mubr.f32.mxu0 %v360
    %1080 = vmatmul.mubr.f32.gmra.mrb[0].mxu0 %v359
    %v1081 = vpop.f32.mrb[0].mxu0
    %v1082 = vadd.f32 0.0, %v1081
    %v1083 = vpop.f32.mrb[0].mxu0
    %v1084 = vadd.f32 0.0, %v1083
    %1085 = vmatprep.mubr.f32.mxu0 %v362
    %1086 = vmatmul.mubr.f32.gmra.mrb[0].mxu0 %v361
    %v1087 = vpop.f32.mrb[0].mxu0
    %v1088 = vadd.f32 0.0, %v1087
    %v1089 = vpop.f32.mrb[0].mxu0
    %v1090 = vadd.f32 0.0, %v1089
    %1091 = vmatprep.mubr.f32.mxu0 %v364
    %1092 = vmatmul.mubr.f32.gmra.mrb[0].mxu0 %v363
    %v1093 = vpop.f32.mrb[0].mxu0
    %v1094 = vadd.f32 0.0, %v1093
    %v1095 = vpop.f32.mrb[0].mxu0
    %v1096 = vadd.f32 0.0, %v1095
    %1097 = vmatprep.mubr.f32.mxu0 %v366
    %1098 = vmatmul.mubr.f32.gmra.mrb[0].mxu0 %v365
    %v1099 = vpop.f32.mrb[0].mxu0
    %v1100 = vadd.f32 0.0, %v1099
    %v1101 = vpop.f32.mrb[0].mxu0
    %v1102 = vadd.f32 0.0, %v1101
    %1103 = vdwg.mxu0
    %1104 = vmatprep.subr.mxu0 %v432
    %1105 = vmatpush1.xpose.msra.mxu0 %v431
    %1106 = vmatprep.subr.mxu0 %v434
    %1107 = vmatpush1.xpose.msra.mxu0 %v433
    %1108 = vmatprep.subr.mxu0 %v436
    %1109 = vmatpush1.xpose.msra.mxu0 %v435
    %1110 = vmatprep.subr.mxu0 %v438
    %1111 = vmatpush1.xpose.msra.mxu0 %v437
    %1112 = vmatprep.subr.mxu0 %v440
    %1113 = vmatpush1.xpose.msra.mxu0 %v439
    %1114 = vmatprep.subr.mxu0 %v442
    %1115 = vmatpush1.xpose.msra.mxu0 %v441
    %1116 = vmatprep.subr.mxu0 %v444
    %1117 = vmatpush1.xpose.msra.mxu0 %v443
    %1118 = vmatprep.subr.mxu0 %v446
    %1119 = vmatpush1.xpose.msra.mxu0 %v445
    %1120 = vmatprep.subr.mxu0 %v448
    %1121 = vmatpush1.xpose.msra.mxu0 %v447
    %1122 = vmatprep.subr.mxu0 %v450
    %1123 = vmatpush1.xpose.msra.mxu0 %v449
    %1124 = vmatprep.subr.mxu0 %v452
    %1125 = vmatpush1.xpose.msra.mxu0 %v451
    %1126 = vmatprep.subr.mxu0 %v454
    %1127 = vmatpush1.xpose.msra.mxu0 %v453
    %1128 = vmatprep.subr.mxu0 %v456
    %1129 = vmatpush1.xpose.msra.mxu0 %v455
    %1130 = vmatprep.subr.mxu0 %v458
    %1131 = vmatpush1.xpose.msra.mxu0 %v457
    %1132 = vmatprep.subr.mxu0 %v460
    %1133 = vmatpush1.xpose.msra.mxu0 %v459
    %1134 = vmatprep.subr.mxu0 %v462
    %1135 = vmatpush1.xpose.msra.mxu0 %v461
    %1136 = vmatprep.subr.mxu0 0.0
    %1137 = vmatpush1.xpose.msra.mxu0 0.0
    %1138 = vmatprep.subr.mxu0 0.0
    %1139 = vmatpush1.xpose.msra.mxu0 0.0
    %1140 = vmatprep.subr.mxu0 0.0
    %1141 = vmatpush1.xpose.msra.mxu0 0.0
    %1142 = vmatprep.subr.mxu0 0.0
    %1143 = vmatpush1.xpose.msra.mxu0 0.0
    %1144 = vmatprep.subr.mxu0 0.0
    %1145 = vmatpush1.xpose.msra.mxu0 0.0
    %1146 = vmatprep.subr.mxu0 0.0
    %1147 = vmatpush1.xpose.msra.mxu0 0.0
    %1148 = vmatprep.subr.mxu0 0.0
    %1149 = vmatpush1.xpose.msra.mxu0 0.0
    %1150 = vmatprep.subr.mxu0 0.0
    %1151 = vmatpush1.xpose.msra.mxu0 0.0
    %1152 = vmatprep.subr.mxu0 0.0
    %1153 = vmatpush1.xpose.msra.mxu0 0.0
    %1154 = vmatprep.subr.mxu0 0.0
    %1155 = vmatpush1.xpose.msra.mxu0 0.0
    %1156 = vmatprep.subr.mxu0 0.0
    %1157 = vmatpush1.xpose.msra.mxu0 0.0
    %1158 = vmatprep.subr.mxu0 0.0
    %1159 = vmatpush1.xpose.msra.mxu0 0.0
    %1160 = vmatprep.subr.mxu0 0.0
    %1161 = vmatpush1.xpose.msra.mxu0 0.0
    %1162 = vmatprep.subr.mxu0 0.0
    %1163 = vmatpush1.xpose.msra.mxu0 0.0
    %1164 = vmatprep.subr.mxu0 0.0
    %1165 = vmatpush1.xpose.msra.mxu0 0.0
    %1166 = vmatprep.subr.mxu0 0.0
    %1167 = vmatpush1.xpose.msra.mxu0 0.0
    %1168 = vmatprep.mubr.f32.mxu0 %v240
    %1169 = vmatmul.mubr.f32.gmra.mrb[0].mxu0 %v239
    %v1170 = vpop.f32.mrb[0].mxu0
    %v1171 = vadd.f32 0.0, %v1170
    %v1172 = vpop.f32.mrb[0].mxu0
    %1173 = vmatprep.mubr.f32.mxu0 %v242
    %1174 = vmatmul.mubr.f32.gmra.mrb[0].mxu0 %v241
    %v1175 = vpop.f32.mrb[0].mxu0
    %v1176 = vadd.f32 0.0, %v1175
    %v1177 = vpop.f32.mrb[0].mxu0
    %1178 = vmatprep.mubr.f32.mxu0 %v244
    %1179 = vmatmul.mubr.f32.gmra.mrb[0].mxu0 %v243
    %v1180 = vpop.f32.mrb[0].mxu0
    %v1181 = vadd.f32 0.0, %v1180
    %v1182 = vpop.f32.mrb[0].mxu0
    %1183 = vmatprep.mubr.f32.mxu0 %v246
    %1184 = vmatmul.mubr.f32.gmra.mrb[0].mxu0 %v245
    %v1185 = vpop.f32.mrb[0].mxu0
    %v1186 = vadd.f32 0.0, %v1185
    %v1187 = vpop.f32.mrb[0].mxu0
    %1188 = vmatprep.mubr.f32.mxu0 %v248
    %1189 = vmatmul.mubr.f32.gmra.mrb[0].mxu0 %v247
    %v1190 = vpop.f32.mrb[0].mxu0
    %v1191 = vadd.f32 0.0, %v1190
    %v1192 = vpop.f32.mrb[0].mxu0
    %1193 = vmatprep.mubr.f32.mxu0 %v250
    %1194 = vmatmul.mubr.f32.gmra.mrb[0].mxu0 %v249
    %v1195 = vpop.f32.mrb[0].mxu0
    %v1196 = vadd.f32 0.0, %v1195
    %v1197 = vpop.f32.mrb[0].mxu0
    %1198 = vmatprep.mubr.f32.mxu0 %v252
    %1199 = vmatmul.mubr.f32.gmra.mrb[0].mxu0 %v251
    %v1200 = vpop.f32.mrb[0].mxu0
    %v1201 = vadd.f32 0.0, %v1200
    %v1202 = vpop.f32.mrb[0].mxu0
    %1203 = vmatprep.mubr.f32.mxu0 %v254
    %1204 = vmatmul.mubr.f32.gmra.mrb[0].mxu0 %v253
    %v1205 = vpop.f32.mrb[0].mxu0
    %v1206 = vadd.f32 0.0, %v1205
    %v1207 = vpop.f32.mrb[0].mxu0
    %1208 = vmatprep.mubr.f32.mxu0 %v256
    %1209 = vmatmul.mubr.f32.gmra.mrb[0].mxu0 %v255
    %v1210 = vpop.f32.mrb[0].mxu0
    %v1211 = vadd.f32 0.0, %v1210
    %v1212 = vpop.f32.mrb[0].mxu0
    %1213 = vmatprep.mubr.f32.mxu0 %v258
    %1214 = vmatmul.mubr.f32.gmra.mrb[0].mxu0 %v257
    %v1215 = vpop.f32.mrb[0].mxu0
    %v1216 = vadd.f32 0.0, %v1215
    %v1217 = vpop.f32.mrb[0].mxu0
    %1218 = vmatprep.mubr.f32.mxu0 %v260
    %1219 = vmatmul.mubr.f32.gmra.mrb[0].mxu0 %v259
    %v1220 = vpop.f32.mrb[0].mxu0
    %v1221 = vadd.f32 0.0, %v1220
    %v1222 = vpop.f32.mrb[0].mxu0
    %1223 = vmatprep.mubr.f32.mxu0 %v262
    %1224 = vmatmul.mubr.f32.gmra.mrb[0].mxu0 %v261
    %v1225 = vpop.f32.mrb[0].mxu0
    %v1226 = vadd.f32 0.0, %v1225
    %v1227 = vpop.f32.mrb[0].mxu0
    %1228 = vmatprep.mubr.f32.mxu0 %v264
    %1229 = vmatmul.mubr.f32.gmra.mrb[0].mxu0 %v263
    %v1230 = vpop.f32.mrb[0].mxu0
    %v1231 = vadd.f32 0.0, %v1230
    %v1232 = vpop.f32.mrb[0].mxu0
    %1233 = vmatprep.mubr.f32.mxu0 %v266
    %1234 = vmatmul.mubr.f32.gmra.mrb[0].mxu0 %v265
    %v1235 = vpop.f32.mrb[0].mxu0
    %v1236 = vadd.f32 0.0, %v1235
    %v1237 = vpop.f32.mrb[0].mxu0
    %1238 = vmatprep.mubr.f32.mxu0 %v268
    %1239 = vmatmul.mubr.f32.gmra.mrb[0].mxu0 %v267
    %v1240 = vpop.f32.mrb[0].mxu0
    %v1241 = vadd.f32 0.0, %v1240
    %v1242 = vpop.f32.mrb[0].mxu0
    %1243 = vmatprep.mubr.f32.mxu0 %v270
    %1244 = vmatmul.mubr.f32.gmra.mrb[0].mxu0 %v269
    %v1245 = vpop.f32.mrb[0].mxu0
    %v1246 = vadd.f32 0.0, %v1245
    %v1247 = vpop.f32.mrb[0].mxu0
    %1248 = vmatprep.mubr.f32.mxu0 %v272
    %1249 = vmatmul.mubr.f32.gmra.mrb[0].mxu0 %v271
    %v1250 = vpop.f32.mrb[0].mxu0
    %v1251 = vadd.f32 0.0, %v1250
    %v1252 = vpop.f32.mrb[0].mxu0
    %1253 = vmatprep.mubr.f32.mxu0 %v274
    %1254 = vmatmul.mubr.f32.gmra.mrb[0].mxu0 %v273
    %v1255 = vpop.f32.mrb[0].mxu0
    %v1256 = vadd.f32 0.0, %v1255
    %v1257 = vpop.f32.mrb[0].mxu0
    %1258 = vmatprep.mubr.f32.mxu0 %v276
    %1259 = vmatmul.mubr.f32.gmra.mrb[0].mxu0 %v275
    %v1260 = vpop.f32.mrb[0].mxu0
    %v1261 = vadd.f32 0.0, %v1260
    %v1262 = vpop.f32.mrb[0].mxu0
    %1263 = vmatprep.mubr.f32.mxu0 %v278
    %1264 = vmatmul.mubr.f32.gmra.mrb[0].mxu0 %v277
    %v1265 = vpop.f32.mrb[0].mxu0
    %v1266 = vadd.f32 0.0, %v1265
    %v1267 = vpop.f32.mrb[0].mxu0
    %1268 = vmatprep.mubr.f32.mxu0 %v280
    %1269 = vmatmul.mubr.f32.gmra.mrb[0].mxu0 %v279
    %v1270 = vpop.f32.mrb[0].mxu0
    %v1271 = vadd.f32 0.0, %v1270
    %v1272 = vpop.f32.mrb[0].mxu0
    %1273 = vmatprep.mubr.f32.mxu0 %v282
    %1274 = vmatmul.mubr.f32.gmra.mrb[0].mxu0 %v281
    %v1275 = vpop.f32.mrb[0].mxu0
    %v1276 = vadd.f32 0.0, %v1275
    %v1277 = vpop.f32.mrb[0].mxu0
    %1278 = vmatprep.mubr.f32.mxu0 %v284
    %1279 = vmatmul.mubr.f32.gmra.mrb[0].mxu0 %v283
    %v1280 = vpop.f32.mrb[0].mxu0
    %v1281 = vadd.f32 0.0, %v1280
    %v1282 = vpop.f32.mrb[0].mxu0
    %1283 = vmatprep.mubr.f32.mxu0 %v286
    %1284 = vmatmul.mubr.f32.gmra.mrb[0].mxu0 %v285
    %v1285 = vpop.f32.mrb[0].mxu0
    %v1286 = vadd.f32 0.0, %v1285
    %v1287 = vpop.f32.mrb[0].mxu0
    %1288 = vmatprep.mubr.f32.mxu0 %v288
    %1289 = vmatmul.mubr.f32.gmra.mrb[0].mxu0 %v287
    %v1290 = vpop.f32.mrb[0].mxu0
    %v1291 = vadd.f32 0.0, %v1290
    %v1292 = vpop.f32.mrb[0].mxu0
    %1293 = vmatprep.mubr.f32.mxu0 %v290
    %1294 = vmatmul.mubr.f32.gmra.mrb[0].mxu0 %v289
    %v1295 = vpop.f32.mrb[0].mxu0
    %v1296 = vadd.f32 0.0, %v1295
    %v1297 = vpop.f32.mrb[0].mxu0
    %1298 = vmatprep.mubr.f32.mxu0 %v292
    %1299 = vmatmul.mubr.f32.gmra.mrb[0].mxu0 %v291
    %v1300 = vpop.f32.mrb[0].mxu0
    %v1301 = vadd.f32 0.0, %v1300
    %v1302 = vpop.f32.mrb[0].mxu0
    %1303 = vmatprep.mubr.f32.mxu0 %v294
    %1304 = vmatmul.mubr.f32.gmra.mrb[0].mxu0 %v293
    %v1305 = vpop.f32.mrb[0].mxu0
    %v1306 = vadd.f32 0.0, %v1305
    %v1307 = vpop.f32.mrb[0].mxu0
    %1308 = vmatprep.mubr.f32.mxu0 %v296
    %1309 = vmatmul.mubr.f32.gmra.mrb[0].mxu0 %v295
    %v1310 = vpop.f32.mrb[0].mxu0
    %v1311 = vadd.f32 0.0, %v1310
    %v1312 = vpop.f32.mrb[0].mxu0
    %1313 = vmatprep.mubr.f32.mxu0 %v298
    %1314 = vmatmul.mubr.f32.gmra.mrb[0].mxu0 %v297
    %v1315 = vpop.f32.mrb[0].mxu0
    %v1316 = vadd.f32 0.0, %v1315
    %v1317 = vpop.f32.mrb[0].mxu0
    %1318 = vmatprep.mubr.f32.mxu0 %v300
    %1319 = vmatmul.mubr.f32.gmra.mrb[0].mxu0 %v299
    %v1320 = vpop.f32.mrb[0].mxu0
    %v1321 = vadd.f32 0.0, %v1320
    %v1322 = vpop.f32.mrb[0].mxu0
    %1323 = vmatprep.mubr.f32.mxu0 %v302
    %1324 = vmatmul.mubr.f32.gmra.mrb[0].mxu0 %v301
    %v1325 = vpop.f32.mrb[0].mxu0
    %v1326 = vadd.f32 0.0, %v1325
    %v1327 = vpop.f32.mrb[0].mxu0
    %1328 = vmatprep.mubr.f32.mxu0 %v304
    %1329 = vmatmul.mubr.f32.gmra.mrb[0].mxu0 %v303
    %v1330 = vpop.f32.mrb[0].mxu0
    %v1331 = vadd.f32 0.0, %v1330
    %v1332 = vpop.f32.mrb[0].mxu0
    %1333 = vmatprep.mubr.f32.mxu0 %v306
    %1334 = vmatmul.mubr.f32.gmra.mrb[0].mxu0 %v305
    %v1335 = vpop.f32.mrb[0].mxu0
    %v1336 = vadd.f32 0.0, %v1335
    %v1337 = vpop.f32.mrb[0].mxu0
    %1338 = vmatprep.mubr.f32.mxu0 %v308
    %1339 = vmatmul.mubr.f32.gmra.mrb[0].mxu0 %v307
    %v1340 = vpop.f32.mrb[0].mxu0
    %v1341 = vadd.f32 0.0, %v1340
    %v1342 = vpop.f32.mrb[0].mxu0
    %1343 = vmatprep.mubr.f32.mxu0 %v310
    %1344 = vmatmul.mubr.f32.gmra.mrb[0].mxu0 %v309
    %v1345 = vpop.f32.mrb[0].mxu0
    %v1346 = vadd.f32 0.0, %v1345
    %v1347 = vpop.f32.mrb[0].mxu0
    %1348 = vmatprep.mubr.f32.mxu0 %v312
    %1349 = vmatmul.mubr.f32.gmra.mrb[0].mxu0 %v311
    %v1350 = vpop.f32.mrb[0].mxu0
    %v1351 = vadd.f32 0.0, %v1350
    %v1352 = vpop.f32.mrb[0].mxu0
    %1353 = vmatprep.mubr.f32.mxu0 %v314
    %1354 = vmatmul.mubr.f32.gmra.mrb[0].mxu0 %v313
    %v1355 = vpop.f32.mrb[0].mxu0
    %v1356 = vadd.f32 0.0, %v1355
    %v1357 = vpop.f32.mrb[0].mxu0
    %1358 = vmatprep.mubr.f32.mxu0 %v316
    %1359 = vmatmul.mubr.f32.gmra.mrb[0].mxu0 %v315
    %v1360 = vpop.f32.mrb[0].mxu0
    %v1361 = vadd.f32 0.0, %v1360
    %v1362 = vpop.f32.mrb[0].mxu0
    %1363 = vmatprep.mubr.f32.mxu0 %v318
    %1364 = vmatmul.mubr.f32.gmra.mrb[0].mxu0 %v317
    %v1365 = vpop.f32.mrb[0].mxu0
    %v1366 = vadd.f32 0.0, %v1365
    %v1367 = vpop.f32.mrb[0].mxu0
    %1368 = vmatprep.mubr.f32.mxu0 %v320
    %1369 = vmatmul.mubr.f32.gmra.mrb[0].mxu0 %v319
    %v1370 = vpop.f32.mrb[0].mxu0
    %v1371 = vadd.f32 0.0, %v1370
    %v1372 = vpop.f32.mrb[0].mxu0
    %1373 = vmatprep.mubr.f32.mxu0 %v322
    %1374 = vmatmul.mubr.f32.gmra.mrb[0].mxu0 %v321
    %v1375 = vpop.f32.mrb[0].mxu0
    %v1376 = vadd.f32 0.0, %v1375
    %v1377 = vpop.f32.mrb[0].mxu0
    %1378 = vmatprep.mubr.f32.mxu0 %v324
    %1379 = vmatmul.mubr.f32.gmra.mrb[0].mxu0 %v323
    %v1380 = vpop.f32.mrb[0].mxu0
    %v1381 = vadd.f32 0.0, %v1380
    %v1382 = vpop.f32.mrb[0].mxu0
    %1383 = vmatprep.mubr.f32.mxu0 %v326
    %1384 = vmatmul.mubr.f32.gmra.mrb[0].mxu0 %v325
    %v1385 = vpop.f32.mrb[0].mxu0
    %v1386 = vadd.f32 0.0, %v1385
    %v1387 = vpop.f32.mrb[0].mxu0
    %1388 = vmatprep.mubr.f32.mxu0 %v328
    %1389 = vmatmul.mubr.f32.gmra.mrb[0].mxu0 %v327
    %v1390 = vpop.f32.mrb[0].mxu0
    %v1391 = vadd.f32 0.0, %v1390
    %v1392 = vpop.f32.mrb[0].mxu0
    %1393 = vmatprep.mubr.f32.mxu0 %v330
    %1394 = vmatmul.mubr.f32.gmra.mrb[0].mxu0 %v329
    %v1395 = vpop.f32.mrb[0].mxu0
    %v1396 = vadd.f32 0.0, %v1395
    %v1397 = vpop.f32.mrb[0].mxu0
    %1398 = vmatprep.mubr.f32.mxu0 %v332
    %1399 = vmatmul.mubr.f32.gmra.mrb[0].mxu0 %v331
    %v1400 = vpop.f32.mrb[0].mxu0
    %v1401 = vadd.f32 0.0, %v1400
    %v1402 = vpop.f32.mrb[0].mxu0
    %1403 = vmatprep.mubr.f32.mxu0 %v334
    %1404 = vmatmul.mubr.f32.gmra.mrb[0].mxu0 %v333
    %v1405 = vpop.f32.mrb[0].mxu0
    %v1406 = vadd.f32 0.0, %v1405
    %v1407 = vpop.f32.mrb[0].mxu0
    %1408 = vmatprep.mubr.f32.mxu0 %v336
    %1409 = vmatmul.mubr.f32.gmra.mrb[0].mxu0 %v335
    %v1410 = vpop.f32.mrb[0].mxu0
    %v1411 = vadd.f32 0.0, %v1410
    %v1412 = vpop.f32.mrb[0].mxu0
    %1413 = vmatprep.mubr.f32.mxu0 %v338
    %1414 = vmatmul.mubr.f32.gmra.mrb[0].mxu0 %v337
    %v1415 = vpop.f32.mrb[0].mxu0
    %v1416 = vadd.f32 0.0, %v1415
    %v1417 = vpop.f32.mrb[0].mxu0
    %1418 = vmatprep.mubr.f32.mxu0 %v340
    %1419 = vmatmul.mubr.f32.gmra.mrb[0].mxu0 %v339
    %v1420 = vpop.f32.mrb[0].mxu0
    %v1421 = vadd.f32 0.0, %v1420
    %v1422 = vpop.f32.mrb[0].mxu0
    %1423 = vmatprep.mubr.f32.mxu0 %v342
    %1424 = vmatmul.mubr.f32.gmra.mrb[0].mxu0 %v341
    %v1425 = vpop.f32.mrb[0].mxu0
    %v1426 = vadd.f32 0.0, %v1425
    %v1427 = vpop.f32.mrb[0].mxu0
    %1428 = vmatprep.mubr.f32.mxu0 %v344
    %1429 = vmatmul.mubr.f32.gmra.mrb[0].mxu0 %v343
    %v1430 = vpop.f32.mrb[0].mxu0
    %v1431 = vadd.f32 0.0, %v1430
    %v1432 = vpop.f32.mrb[0].mxu0
    %1433 = vmatprep.mubr.f32.mxu0 %v346
    %1434 = vmatmul.mubr.f32.gmra.mrb[0].mxu0 %v345
    %v1435 = vpop.f32.mrb[0].mxu0
    %v1436 = vadd.f32 0.0, %v1435
    %v1437 = vpop.f32.mrb[0].mxu0
    %1438 = vmatprep.mubr.f32.mxu0 %v348
    %1439 = vmatmul.mubr.f32.gmra.mrb[0].mxu0 %v347
    %v1440 = vpop.f32.mrb[0].mxu0
    %v1441 = vadd.f32 0.0, %v1440
    %v1442 = vpop.f32.mrb[0].mxu0
    %1443 = vmatprep.mubr.f32.mxu0 %v350
    %1444 = vmatmul.mubr.f32.gmra.mrb[0].mxu0 %v349
    %v1445 = vpop.f32.mrb[0].mxu0
    %v1446 = vadd.f32 0.0, %v1445
    %v1447 = vpop.f32.mrb[0].mxu0
    %1448 = vmatprep.mubr.f32.mxu0 %v352
    %1449 = vmatmul.mubr.f32.gmra.mrb[0].mxu0 %v351
    %v1450 = vpop.f32.mrb[0].mxu0
    %v1451 = vadd.f32 0.0, %v1450
    %v1452 = vpop.f32.mrb[0].mxu0
    %1453 = vmatprep.mubr.f32.mxu0 %v354
    %1454 = vmatmul.mubr.f32.gmra.mrb[0].mxu0 %v353
    %v1455 = vpop.f32.mrb[0].mxu0
    %v1456 = vadd.f32 0.0, %v1455
    %v1457 = vpop.f32.mrb[0].mxu0
    %1458 = vmatprep.mubr.f32.mxu0 %v356
    %1459 = vmatmul.mubr.f32.gmra.mrb[0].mxu0 %v355
    %v1460 = vpop.f32.mrb[0].mxu0
    %v1461 = vadd.f32 0.0, %v1460
    %v1462 = vpop.f32.mrb[0].mxu0
    %1463 = vmatprep.mubr.f32.mxu0 %v358
    %1464 = vmatmul.mubr.f32.gmra.mrb[0].mxu0 %v357
    %v1465 = vpop.f32.mrb[0].mxu0
    %v1466 = vadd.f32 0.0, %v1465
    %v1467 = vpop.f32.mrb[0].mxu0
    %1468 = vmatprep.mubr.f32.mxu0 %v360
    %1469 = vmatmul.mubr.f32.gmra.mrb[0].mxu0 %v359
    %v1470 = vpop.f32.mrb[0].mxu0
    %v1471 = vadd.f32 0.0, %v1470
    %v1472 = vpop.f32.mrb[0].mxu0
    %1473 = vmatprep.mubr.f32.mxu0 %v362
    %1474 = vmatmul.mubr.f32.gmra.mrb[0].mxu0 %v361
    %v1475 = vpop.f32.mrb[0].mxu0
    %v1476 = vadd.f32 0.0, %v1475
    %v1477 = vpop.f32.mrb[0].mxu0
    %1478 = vmatprep.mubr.f32.mxu0 %v364
    %1479 = vmatmul.mubr.f32.gmra.mrb[0].mxu0 %v363
    %v1480 = vpop.f32.mrb[0].mxu0
    %v1481 = vadd.f32 0.0, %v1480
    %v1482 = vpop.f32.mrb[0].mxu0
    %1483 = vmatprep.mubr.f32.mxu0 %v366
    %1484 = vmatmul.mubr.f32.gmra.mrb[0].mxu0 %v365
    %v1485 = vpop.f32.mrb[0].mxu0
    %v1486 = vadd.f32 0.0, %v1485
    %v1487 = vpop.f32.mrb[0].mxu0
    %1488 = vdwg.mxu0
    %v1489 = vadd.f32 %v463, %v722
    %v1490 = vadd.f32 %v464, %v724
    %v1491 = vadd.f32 %v465, %v1171
    %v1492 = vadd.f32 %v466, %v728
    %v1493 = vadd.f32 %v467, %v730
    %v1494 = vadd.f32 %v468, %v1176
    %v1495 = vadd.f32 %v469, %v734
    %v1496 = vadd.f32 %v470, %v736
    %v1497 = vadd.f32 %v471, %v1181
    %v1498 = vadd.f32 %v472, %v740
    %v1499 = vadd.f32 %v473, %v742
    %v1500 = vadd.f32 %v474, %v1186
    %v1501 = vadd.f32 %v475, %v746
    %v1502 = vadd.f32 %v476, %v748
    %v1503 = vadd.f32 %v477, %v1191
    %v1504 = vadd.f32 %v478, %v752
    %v1505 = vadd.f32 %v479, %v754
    %v1506 = vadd.f32 %v480, %v1196
    %v1507 = vadd.f32 %v481, %v758
    %v1508 = vadd.f32 %v482, %v760
    %v1509 = vadd.f32 %v483, %v1201
    %v1510 = vadd.f32 %v484, %v764
    %v1511 = vadd.f32 %v485, %v766
    %v1512 = vadd.f32 %v486, %v1206
    %v1513 = vadd.f32 %v487, %v770
    %v1514 = vadd.f32 %v488, %v772
    %v1515 = vadd.f32 %v489, %v1211
    %v1516 = vadd.f32 %v490, %v776
    %v1517 = vadd.f32 %v491, %v778
    %v1518 = vadd.f32 %v492, %v1216
    %v1519 = vadd.f32 %v493, %v782
    %v1520 = vadd.f32 %v494, %v784
    %v1521 = vadd.f32 %v495, %v1221
    %v1522 = vadd.f32 %v496, %v788
    %v1523 = vadd.f32 %v497, %v790
    %v1524 = vadd.f32 %v498, %v1226
    %v1525 = vadd.f32 %v499, %v794
    %v1526 = vadd.f32 %v500, %v796
    %v1527 = vadd.f32 %v501, %v1231
    %v1528 = vadd.f32 %v502, %v800
    %v1529 = vadd.f32 %v503, %v802
    %v1530 = vadd.f32 %v504, %v1236
    %v1531 = vadd.f32 %v505, %v806
    %v1532 = vadd.f32 %v506, %v808
    %v1533 = vadd.f32 %v507, %v1241
    %v1534 = vadd.f32 %v508, %v812
    %v1535 = vadd.f32 %v509, %v814
    %v1536 = vadd.f32 %v510, %v1246
    %v1537 = vadd.f32 %v511, %v818
    %v1538 = vadd.f32 %v512, %v820
    %v1539 = vadd.f32 %v513, %v1251
    %v1540 = vadd.f32 %v514, %v824
    %v1541 = vadd.f32 %v515, %v826
    %v1542 = vadd.f32 %v516, %v1256
    %v1543 = vadd.f32 %v517, %v830
    %v1544 = vadd.f32 %v518, %v832
    %v1545 = vadd.f32 %v519, %v1261
    %v1546 = vadd.f32 %v520, %v836
    %v1547 = vadd.f32 %v521, %v838
    %v1548 = vadd.f32 %v522, %v1266
    %v1549 = vadd.f32 %v523, %v842
    %v1550 = vadd.f32 %v524, %v844
    %v1551 = vadd.f32 %v525, %v1271
    %v1552 = vadd.f32 %v526, %v848
    %v1553 = vadd.f32 %v527, %v850
    %v1554 = vadd.f32 %v528, %v1276
    %v1555 = vadd.f32 %v529, %v854
    %v1556 = vadd.f32 %v530, %v856
    %v1557 = vadd.f32 %v531, %v1281
    %v1558 = vadd.f32 %v532, %v860
    %v1559 = vadd.f32 %v533, %v862
    %v1560 = vadd.f32 %v534, %v1286
    %v1561 = vadd.f32 %v535, %v866
    %v1562 = vadd.f32 %v536, %v868
    %v1563 = vadd.f32 %v537, %v1291
    %v1564 = vadd.f32 %v538, %v872
    %v1565 = vadd.f32 %v539, %v874
    %v1566 = vadd.f32 %v540, %v1296
    %v1567 = vadd.f32 %v541, %v878
    %v1568 = vadd.f32 %v542, %v880
    %v1569 = vadd.f32 %v543, %v1301
    %v1570 = vadd.f32 %v544, %v884
    %v1571 = vadd.f32 %v545, %v886
    %v1572 = vadd.f32 %v546, %v1306
    %v1573 = vadd.f32 %v547, %v890
    %v1574 = vadd.f32 %v548, %v892
    %v1575 = vadd.f32 %v549, %v1311
    %v1576 = vadd.f32 %v550, %v896
    %v1577 = vadd.f32 %v551, %v898
    %v1578 = vadd.f32 %v552, %v1316
    %v1579 = vadd.f32 %v553, %v902
    %v1580 = vadd.f32 %v554, %v904
    %v1581 = vadd.f32 %v555, %v1321
    %v1582 = vadd.f32 %v556, %v908
    %v1583 = vadd.f32 %v557, %v910
    %v1584 = vadd.f32 %v558, %v1326
    %v1585 = vadd.f32 %v559, %v914
    %v1586 = vadd.f32 %v560, %v916
    %v1587 = vadd.f32 %v561, %v1331
    %v1588 = vadd.f32 %v562, %v920
    %v1589 = vadd.f32 %v563, %v922
    %v1590 = vadd.f32 %v564, %v1336
    %v1591 = vadd.f32 %v565, %v926
    %v1592 = vadd.f32 %v566, %v928
    %v1593 = vadd.f32 %v567, %v1341
    %v1594 = vadd.f32 %v568, %v932
    %v1595 = vadd.f32 %v569, %v934
    %v1596 = vadd.f32 %v570, %v1346
    %v1597 = vadd.f32 %v571, %v938
    %v1598 = vadd.f32 %v572, %v940
    %v1599 = vadd.f32 %v573, %v1351
    %v1600 = vadd.f32 %v574, %v944
    %v1601 = vadd.f32 %v575, %v946
    %v1602 = vadd.f32 %v576, %v1356
    %v1603 = vadd.f32 %v577, %v950
    %v1604 = vadd.f32 %v578, %v952
    %v1605 = vadd.f32 %v579, %v1361
    %v1606 = vadd.f32 %v580, %v956
    %v1607 = vadd.f32 %v581, %v958
    %v1608 = vadd.f32 %v582, %v1366
    %v1609 = vadd.f32 %v583, %v962
    %v1610 = vadd.f32 %v584, %v964
    %v1611 = vadd.f32 %v585, %v1371
    %v1612 = vadd.f32 %v586, %v968
    %v1613 = vadd.f32 %v587, %v970
    %v1614 = vadd.f32 %v588, %v1376
    %v1615 = vadd.f32 %v589, %v974
    %v1616 = vadd.f32 %v590, %v976
    %v1617 = vadd.f32 %v591, %v1381
    %v1618 = vadd.f32 %v592, %v980
    %v1619 = vadd.f32 %v593, %v982
    %v1620 = vadd.f32 %v594, %v1386
    %v1621 = vadd.f32 %v595, %v986
    %v1622 = vadd.f32 %v596, %v988
    %v1623 = vadd.f32 %v597, %v1391
    %v1624 = vadd.f32 %v598, %v992
    %v1625 = vadd.f32 %v599, %v994
    %v1626 = vadd.f32 %v600, %v1396
    %v1627 = vadd.f32 %v601, %v998
    %v1628 = vadd.f32 %v602, %v1000
    %v1629 = vadd.f32 %v603, %v1401
    %v1630 = vadd.f32 %v604, %v1004
    %v1631 = vadd.f32 %v605, %v1006
    %v1632 = vadd.f32 %v606, %v1406
    %v1633 = vadd.f32 %v607, %v1010
    %v1634 = vadd.f32 %v608, %v1012
    %v1635 = vadd.f32 %v609, %v1411
    %v1636 = vadd.f32 %v610, %v1016
    %v1637 = vadd.f32 %v611, %v1018
    %v1638 = vadd.f32 %v612, %v1416
    %v1639 = vadd.f32 %v613, %v1022
    %v1640 = vadd.f32 %v614, %v1024
    %v1641 = vadd.f32 %v615, %v1421
    %v1642 = vadd.f32 %v616, %v1028
    %v1643 = vadd.f32 %v617, %v1030
    %v1644 = vadd.f32 %v618, %v1426
    %v1645 = vadd.f32 %v619, %v1034
    %v1646 = vadd.f32 %v620, %v1036
    %v1647 = vadd.f32 %v621, %v1431
    %v1648 = vadd.f32 %v622, %v1040
    %v1649 = vadd.f32 %v623, %v1042
    %v1650 = vadd.f32 %v624, %v1436
    %v1651 = vadd.f32 %v625, %v1046
    %v1652 = vadd.f32 %v626, %v1048
    %v1653 = vadd.f32 %v627, %v1441
    %v1654 = vadd.f32 %v628, %v1052
    %v1655 = vadd.f32 %v629, %v1054
    %v1656 = vadd.f32 %v630, %v1446
    %v1657 = vadd.f32 %v631, %v1058
    %v1658 = vadd.f32 %v632, %v1060
    %v1659 = vadd.f32 %v633, %v1451
    %v1660 = vadd.f32 %v634, %v1064
    %v1661 = vadd.f32 %v635, %v1066
    %v1662 = vadd.f32 %v636, %v1456
    %v1663 = vadd.f32 %v637, %v1070
    %v1664 = vadd.f32 %v638, %v1072
    %v1665 = vadd.f32 %v639, %v1461
    %v1666 = vadd.f32 %v640, %v1076
    %v1667 = vadd.f32 %v641, %v1078
    %v1668 = vadd.f32 %v642, %v1466
    %v1669 = vadd.f32 %v643, %v1082
    %v1670 = vadd.f32 %v644, %v1084
    %v1671 = vadd.f32 %v645, %v1471
    %v1672 = vadd.f32 %v646, %v1088
    %v1673 = vadd.f32 %v647, %v1090
    %v1674 = vadd.f32 %v648, %v1476
    %v1675 = vadd.f32 %v649, %v1094
    %v1676 = vadd.f32 %v650, %v1096
    %v1677 = vadd.f32 %v651, %v1481
    %v1678 = vadd.f32 %v652, %v1100
    %v1679 = vadd.f32 %v653, %v1102
    %v1680 = vadd.f32 %v654, %v1486
    %1681 = vst [vmem:[#allocation2] sm:$0xff] %v1489
    %1682 = vst [vmem:[#allocation2 + $0x8] sm:$0xff] %v1490
    %1683 = vst [vmem:[#allocation2 + $0x10] sm:$0xff] %v1491
    %1684 = vst [vmem:[#allocation2 + $0x18] sm:$0xff] %v1492
    %1685 = vst [vmem:[#allocation2 + $0x20] sm:$0xff] %v1493
    %1686 = vst [vmem:[#allocation2 + $0x28] sm:$0xff] %v1494
    %1687 = vst [vmem:[#allocation2 + $0x30] sm:$0xff] %v1495
    %1688 = vst [vmem:[#allocation2 + $0x38] sm:$0xff] %v1496
    %1689 = vst [vmem:[#allocation2 + $0x40] sm:$0xff] %v1497
    %1690 = vst [vmem:[#allocation2 + $0x48] sm:$0xff] %v1498
    %1691 = vst [vmem:[#allocation2 + $0x50] sm:$0xff] %v1499
    %1692 = vst [vmem:[#allocation2 + $0x58] sm:$0xff] %v1500
    %1693 = vst [vmem:[#allocation2 + $0x60] sm:$0xff] %v1501
    %1694 = vst [vmem:[#allocation2 + $0x68] sm:$0xff] %v1502
    %1695 = vst [vmem:[#allocation2 + $0x70] sm:$0xff] %v1503
    %1696 = vst [vmem:[#allocation2 + $0x78] sm:$0xff] %v1504
    %1697 = vst [vmem:[#allocation2 + $0x80] sm:$0xff] %v1505
    %1698 = vst [vmem:[#allocation2 + $0x88] sm:$0xff] %v1506
    %1699 = vst [vmem:[#allocation2 + $0x90] sm:$0xff] %v1507
    %1700 = vst [vmem:[#allocation2 + $0x98] sm:$0xff] %v1508
    %1701 = vst [vmem:[#allocation2 + $0xa0] sm:$0xff] %v1509
    %1702 = vst [vmem:[#allocation2 + $0xa8] sm:$0xff] %v1510
    %1703 = vst [vmem:[#allocation2 + $0xb0] sm:$0xff] %v1511
    %1704 = vst [vmem:[#allocation2 + $0xb8] sm:$0xff] %v1512
    %1705 = vst [vmem:[#allocation2 + $0xc0] sm:$0xff] %v1513
    %1706 = vst [vmem:[#allocation2 + $0xc8] sm:$0xff] %v1514
    %1707 = vst [vmem:[#allocation2 + $0xd0] sm:$0xff] %v1515
    %1708 = vst [vmem:[#allocation2 + $0xd8] sm:$0xff] %v1516
    %1709 = vst [vmem:[#allocation2 + $0xe0] sm:$0xff] %v1517
    %1710 = vst [vmem:[#allocation2 + $0xe8] sm:$0xff] %v1518
    %1711 = vst [vmem:[#allocation2 + $0xf0] sm:$0xff] %v1519
    %1712 = vst [vmem:[#allocation2 + $0xf8] sm:$0xff] %v1520
    %1713 = vst [vmem:[#allocation2 + $0x100] sm:$0xff] %v1521
    %1714 = vst [vmem:[#allocation2 + $0x108] sm:$0xff] %v1522
    %1715 = vst [vmem:[#allocation2 + $0x110] sm:$0xff] %v1523
    %1716 = vst [vmem:[#allocation2 + $0x118] sm:$0xff] %v1524
    %1717 = vst [vmem:[#allocation2 + $0x120] sm:$0xff] %v1525
    %1718 = vst [vmem:[#allocation2 + $0x128] sm:$0xff] %v1526
    %1719 = vst [vmem:[#allocation2 + $0x130] sm:$0xff] %v1527
    %1720 = vst [vmem:[#allocation2 + $0x138] sm:$0xff] %v1528
    %1721 = vst [vmem:[#allocation2 + $0x140] sm:$0xff] %v1529
    %1722 = vst [vmem:[#allocation2 + $0x148] sm:$0xff] %v1530
    %1723 = vst [vmem:[#allocation2 + $0x150] sm:$0xff] %v1531
    %1724 = vst [vmem:[#allocation2 + $0x158] sm:$0xff] %v1532
    %1725 = vst [vmem:[#allocation2 + $0x160] sm:$0xff] %v1533
    %1726 = vst [vmem:[#allocation2 + $0x168] sm:$0xff] %v1534
    %1727 = vst [vmem:[#allocation2 + $0x170] sm:$0xff] %v1535
    %1728 = vst [vmem:[#allocation2 + $0x178] sm:$0xff] %v1536
    %1729 = vst [vmem:[#allocation2 + $0x180] sm:$0xff] %v1537
    %1730 = vst [vmem:[#allocation2 + $0x188] sm:$0xff] %v1538
    %1731 = vst [vmem:[#allocation2 + $0x190] sm:$0xff] %v1539
    %1732 = vst [vmem:[#allocation2 + $0x198] sm:$0xff] %v1540
    %1733 = vst [vmem:[#allocation2 + $0x1a0] sm:$0xff] %v1541
    %1734 = vst [vmem:[#allocation2 + $0x1a8] sm:$0xff] %v1542
    %1735 = vst [vmem:[#allocation2 + $0x1b0] sm:$0xff] %v1543
    %1736 = vst [vmem:[#allocation2 + $0x1b8] sm:$0xff] %v1544
    %1737 = vst [vmem:[#allocation2 + $0x1c0] sm:$0xff] %v1545
    %1738 = vst [vmem:[#allocation2 + $0x1c8] sm:$0xff] %v1546
    %1739 = vst [vmem:[#allocation2 + $0x1d0] sm:$0xff] %v1547
    %1740 = vst [vmem:[#allocation2 + $0x1d8] sm:$0xff] %v1548
    %1741 = vst [vmem:[#allocation2 + $0x1e0] sm:$0xff] %v1549
    %1742 = vst [vmem:[#allocation2 + $0x1e8] sm:$0xff] %v1550
    %1743 = vst [vmem:[#allocation2 + $0x1f0] sm:$0xff] %v1551
    %1744 = vst [vmem:[#allocation2 + $0x1f8] sm:$0xff] %v1552
    %1745 = vst [vmem:[#allocation2 + $0x200] sm:$0xff] %v1553
    %1746 = vst [vmem:[#allocation2 + $0x208] sm:$0xff] %v1554
    %1747 = vst [vmem:[#allocation2 + $0x210] sm:$0xff] %v1555
    %1748 = vst [vmem:[#allocation2 + $0x218] sm:$0xff] %v1556
    %1749 = vst [vmem:[#allocation2 + $0x220] sm:$0xff] %v1557
    %1750 = vst [vmem:[#allocation2 + $0x228] sm:$0xff] %v1558
    %1751 = vst [vmem:[#allocation2 + $0x230] sm:$0xff] %v1559
    %1752 = vst [vmem:[#allocation2 + $0x238] sm:$0xff] %v1560
    %1753 = vst [vmem:[#allocation2 + $0x240] sm:$0xff] %v1561
    %1754 = vst [vmem:[#allocation2 + $0x248] sm:$0xff] %v1562
    %1755 = vst [vmem:[#allocation2 + $0x250] sm:$0xff] %v1563
    %1756 = vst [vmem:[#allocation2 + $0x258] sm:$0xff] %v1564
    %1757 = vst [vmem:[#allocation2 + $0x260] sm:$0xff] %v1565
    %1758 = vst [vmem:[#allocation2 + $0x268] sm:$0xff] %v1566
    %1759 = vst [vmem:[#allocation2 + $0x270] sm:$0xff] %v1567
    %1760 = vst [vmem:[#allocation2 + $0x278] sm:$0xff] %v1568
    %1761 = vst [vmem:[#allocation2 + $0x280] sm:$0xff] %v1569
    %1762 = vst [vmem:[#allocation2 + $0x288] sm:$0xff] %v1570
    %1763 = vst [vmem:[#allocation2 + $0x290] sm:$0xff] %v1571
    %1764 = vst [vmem:[#allocation2 + $0x298] sm:$0xff] %v1572
    %1765 = vst [vmem:[#allocation2 + $0x2a0] sm:$0xff] %v1573
    %1766 = vst [vmem:[#allocation2 + $0x2a8] sm:$0xff] %v1574
    %1767 = vst [vmem:[#allocation2 + $0x2b0] sm:$0xff] %v1575
    %1768 = vst [vmem:[#allocation2 + $0x2b8] sm:$0xff] %v1576
    %1769 = vst [vmem:[#allocation2 + $0x2c0] sm:$0xff] %v1577
    %1770 = vst [vmem:[#allocation2 + $0x2c8] sm:$0xff] %v1578
    %1771 = vst [vmem:[#allocation2 + $0x2d0] sm:$0xff] %v1579
    %1772 = vst [vmem:[#allocation2 + $0x2d8] sm:$0xff] %v1580
    %1773 = vst [vmem:[#allocation2 + $0x2e0] sm:$0xff] %v1581
    %1774 = vst [vmem:[#allocation2 + $0x2e8] sm:$0xff] %v1582
    %1775 = vst [vmem:[#allocation2 + $0x2f0] sm:$0xff] %v1583
    %1776 = vst [vmem:[#allocation2 + $0x2f8] sm:$0xff] %v1584
    %1777 = vst [vmem:[#allocation2 + $0x300] sm:$0xff] %v1585
    %1778 = vst [vmem:[#allocation2 + $0x308] sm:$0xff] %v1586
    %1779 = vst [vmem:[#allocation2 + $0x310] sm:$0xff] %v1587
    %1780 = vst [vmem:[#allocation2 + $0x318] sm:$0xff] %v1588
    %1781 = vst [vmem:[#allocation2 + $0x320] sm:$0xff] %v1589
    %1782 = vst [vmem:[#allocation2 + $0x328] sm:$0xff] %v1590
    %1783 = vst [vmem:[#allocation2 + $0x330] sm:$0xff] %v1591
    %1784 = vst [vmem:[#allocation2 + $0x338] sm:$0xff] %v1592
    %1785 = vst [vmem:[#allocation2 + $0x340] sm:$0xff] %v1593
    %1786 = vst [vmem:[#allocation2 + $0x348] sm:$0xff] %v1594
    %1787 = vst [vmem:[#allocation2 + $0x350] sm:$0xff] %v1595
    %1788 = vst [vmem:[#allocation2 + $0x358] sm:$0xff] %v1596
    %1789 = vst [vmem:[#allocation2 + $0x360] sm:$0xff] %v1597
    %1790 = vst [vmem:[#allocation2 + $0x368] sm:$0xff] %v1598
    %1791 = vst [vmem:[#allocation2 + $0x370] sm:$0xff] %v1599
    %1792 = vst [vmem:[#allocation2 + $0x378] sm:$0xff] %v1600
    %1793 = vst [vmem:[#allocation2 + $0x380] sm:$0xff] %v1601
    %1794 = vst [vmem:[#allocation2 + $0x388] sm:$0xff] %v1602
    %1795 = vst [vmem:[#allocation2 + $0x390] sm:$0xff] %v1603
    %1796 = vst [vmem:[#allocation2 + $0x398] sm:$0xff] %v1604
    %1797 = vst [vmem:[#allocation2 + $0x3a0] sm:$0xff] %v1605
    %1798 = vst [vmem:[#allocation2 + $0x3a8] sm:$0xff] %v1606
    %1799 = vst [vmem:[#allocation2 + $0x3b0] sm:$0xff] %v1607
    %1800 = vst [vmem:[#allocation2 + $0x3b8] sm:$0xff] %v1608
    %1801 = vst [vmem:[#allocation2 + $0x3c0] sm:$0xff] %v1609
    %1802 = vst [vmem:[#allocation2 + $0x3c8] sm:$0xff] %v1610
    %1803 = vst [vmem:[#allocation2 + $0x3d0] sm:$0xff] %v1611
    %1804 = vst [vmem:[#allocation2 + $0x3d8] sm:$0xff] %v1612
    %1805 = vst [vmem:[#allocation2 + $0x3e0] sm:$0xff] %v1613
    %1806 = vst [vmem:[#allocation2 + $0x3e8] sm:$0xff] %v1614
    %1807 = vst [vmem:[#allocation2 + $0x3f0] sm:$0xff] %v1615
    %1808 = vst [vmem:[#allocation2 + $0x3f8] sm:$0xff] %v1616
    %1809 = vst [vmem:[#allocation2 + $0x400] sm:$0xff] %v1617
    %1810 = vst [vmem:[#allocation2 + $0x408] sm:$0xff] %v1618
    %1811 = vst [vmem:[#allocation2 + $0x410] sm:$0xff] %v1619
    %1812 = vst [vmem:[#allocation2 + $0x418] sm:$0xff] %v1620
    %1813 = vst [vmem:[#allocation2 + $0x420] sm:$0xff] %v1621
    %1814 = vst [vmem:[#allocation2 + $0x428] sm:$0xff] %v1622
    %1815 = vst [vmem:[#allocation2 + $0x430] sm:$0xff] %v1623
    %1816 = vst [vmem:[#allocation2 + $0x438] sm:$0xff] %v1624
    %1817 = vst [vmem:[#allocation2 + $0x440] sm:$0xff] %v1625
    %1818 = vst [vmem:[#allocation2 + $0x448] sm:$0xff] %v1626
    %1819 = vst [vmem:[#allocation2 + $0x450] sm:$0xff] %v1627
    %1820 = vst [vmem:[#allocation2 + $0x458] sm:$0xff] %v1628
    %1821 = vst [vmem:[#allocation2 + $0x460] sm:$0xff] %v1629
    %1822 = vst [vmem:[#allocation2 + $0x468] sm:$0xff] %v1630
    %1823 = vst [vmem:[#allocation2 + $0x470] sm:$0xff] %v1631
    %1824 = vst [vmem:[#allocation2 + $0x478] sm:$0xff] %v1632
    %1825 = vst [vmem:[#allocation2 + $0x480] sm:$0xff] %v1633
    %1826 = vst [vmem:[#allocation2 + $0x488] sm:$0xff] %v1634
    %1827 = vst [vmem:[#allocation2 + $0x490] sm:$0xff] %v1635
    %1828 = vst [vmem:[#allocation2 + $0x498] sm:$0xff] %v1636
    %1829 = vst [vmem:[#allocation2 + $0x4a0] sm:$0xff] %v1637
    %1830 = vst [vmem:[#allocation2 + $0x4a8] sm:$0xff] %v1638
    %1831 = vst [vmem:[#allocation2 + $0x4b0] sm:$0xff] %v1639
    %1832 = vst [vmem:[#allocation2 + $0x4b8] sm:$0xff] %v1640
    %1833 = vst [vmem:[#allocation2 + $0x4c0] sm:$0xff] %v1641
    %1834 = vst [vmem:[#allocation2 + $0x4c8] sm:$0xff] %v1642
    %1835 = vst [vmem:[#allocation2 + $0x4d0] sm:$0xff] %v1643
    %1836 = vst [vmem:[#allocation2 + $0x4d8] sm:$0xff] %v1644
    %1837 = vst [vmem:[#allocation2 + $0x4e0] sm:$0xff] %v1645
    %1838 = vst [vmem:[#allocation2 + $0x4e8] sm:$0xff] %v1646
    %1839 = vst [vmem:[#allocation2 + $0x4f0] sm:$0xff] %v1647
    %1840 = vst [vmem:[#allocation2 + $0x4f8] sm:$0xff] %v1648
    %1841 = vst [vmem:[#allocation2 + $0x500] sm:$0xff] %v1649
    %1842 = vst [vmem:[#allocation2 + $0x508] sm:$0xff] %v1650
    %1843 = vst [vmem:[#allocation2 + $0x510] sm:$0xff] %v1651
    %1844 = vst [vmem:[#allocation2 + $0x518] sm:$0xff] %v1652
    %1845 = vst [vmem:[#allocation2 + $0x520] sm:$0xff] %v1653
    %1846 = vst [vmem:[#allocation2 + $0x528] sm:$0xff] %v1654
    %1847 = vst [vmem:[#allocation2 + $0x530] sm:$0xff] %v1655
    %1848 = vst [vmem:[#allocation2 + $0x538] sm:$0xff] %v1656
    %1849 = vst [vmem:[#allocation2 + $0x540] sm:$0xff] %v1657
    %1850 = vst [vmem:[#allocation2 + $0x548] sm:$0xff] %v1658
    %1851 = vst [vmem:[#allocation2 + $0x550] sm:$0xff] %v1659
    %1852 = vst [vmem:[#allocation2 + $0x558] sm:$0xff] %v1660
    %1853 = vst [vmem:[#allocation2 + $0x560] sm:$0xff] %v1661
    %1854 = vst [vmem:[#allocation2 + $0x568] sm:$0xff] %v1662
    %1855 = vst [vmem:[#allocation2 + $0x570] sm:$0xff] %v1663
    %1856 = vst [vmem:[#allocation2 + $0x578] sm:$0xff] %v1664
    %1857 = vst [vmem:[#allocation2 + $0x580] sm:$0xff] %v1665
    %1858 = vst [vmem:[#allocation2 + $0x588] sm:$0xff] %v1666
    %1859 = vst [vmem:[#allocation2 + $0x590] sm:$0xff] %v1667
    %1860 = vst [vmem:[#allocation2 + $0x598] sm:$0xff] %v1668
    %1861 = vst [vmem:[#allocation2 + $0x5a0] sm:$0xff] %v1669
    %1862 = vst [vmem:[#allocation2 + $0x5a8] sm:$0xff] %v1670
    %1863 = vst [vmem:[#allocation2 + $0x5b0] sm:$0xff] %v1671
    %1864 = vst [vmem:[#allocation2 + $0x5b8] sm:$0xff] %v1672
    %1865 = vst [vmem:[#allocation2 + $0x5c0] sm:$0xff] %v1673
    %1866 = vst [vmem:[#allocation2 + $0x5c8] sm:$0xff] %v1674
    %1867 = vst [vmem:[#allocation2 + $0x5d0] sm:$0xff] %v1675
    %1868 = vst [vmem:[#allocation2 + $0x5d8] sm:$0xff] %v1676
    %1869 = vst [vmem:[#allocation2 + $0x5e0] sm:$0xff] %v1677
    %1870 = vst [vmem:[#allocation2 + $0x5e8] sm:$0xff] %v1678
    %1871 = vst [vmem:[#allocation2 + $0x5f0] sm:$0xff] %v1679
    %1872 = vst [vmem:[#allocation2 + $0x5f8] sm:$0xff] %v1680
    // Predicated region
    $region26: #{tpu_custom_call.1} parent=1 // pred_check
      %p1873 = pneg %p43
    $region27: #{tpu_custom_call.1} parent=1 // pred_check_branch
      %1875 = sbr.rel (%p1873) target = $region29
    $region28: #{tpu_custom_call.1} parent=1 // pred_region
      %v1876 = vld [vmem:[#allocation2] sm:$0xff]
      %v1877 = vld [vmem:[#allocation2 + $0x8] sm:$0xff]
      %v1878 = vld [vmem:[#allocation2 + $0x10] sm:$0xff]
      %v1879 = vld [vmem:[#allocation2 + $0x18] sm:$0xff]
      %v1880 = vld [vmem:[#allocation2 + $0x20] sm:$0xff]
      %v1881 = vld [vmem:[#allocation2 + $0x28] sm:$0xff]
      %v1882 = vld [vmem:[#allocation2 + $0x30] sm:$0xff]
      %v1883 = vld [vmem:[#allocation2 + $0x38] sm:$0xff]
      %v1884 = vld [vmem:[#allocation2 + $0x40] sm:$0xff]
      %v1885 = vld [vmem:[#allocation2 + $0x48] sm:$0xff]
      %v1886 = vld [vmem:[#allocation2 + $0x50] sm:$0xff]
      %v1887 = vld [vmem:[#allocation2 + $0x58] sm:$0xff]
      %v1888 = vld [vmem:[#allocation2 + $0x60] sm:$0xff]
      %v1889 = vld [vmem:[#allocation2 + $0x68] sm:$0xff]
      %v1890 = vld [vmem:[#allocation2 + $0x70] sm:$0xff]
      %v1891 = vld [vmem:[#allocation2 + $0x78] sm:$0xff]
      %v1892 = vld [vmem:[#allocation2 + $0x80] sm:$0xff]
      %v1893 = vld [vmem:[#allocation2 + $0x88] sm:$0xff]
      %v1894 = vld [vmem:[#allocation2 + $0x90] sm:$0xff]
      %v1895 = vld [vmem:[#allocation2 + $0x98] sm:$0xff]
      %v1896 = vld [vmem:[#allocation2 + $0xa0] sm:$0xff]
      %v1897 = vld [vmem:[#allocation2 + $0xa8] sm:$0xff]
      %v1898 = vld [vmem:[#allocation2 + $0xb0] sm:$0xff]
      %v1899 = vld [vmem:[#allocation2 + $0xb8] sm:$0xff]
      %v1900 = vld [vmem:[#allocation2 + $0xc0] sm:$0xff]
      %v1901 = vld [vmem:[#allocation2 + $0xc8] sm:$0xff]
      %v1902 = vld [vmem:[#allocation2 + $0xd0] sm:$0xff]
      %v1903 = vld [vmem:[#allocation2 + $0xd8] sm:$0xff]
      %v1904 = vld [vmem:[#allocation2 + $0xe0] sm:$0xff]
      %v1905 = vld [vmem:[#allocation2 + $0xe8] sm:$0xff]
      %v1906 = vld [vmem:[#allocation2 + $0xf0] sm:$0xff]
      %v1907 = vld [vmem:[#allocation2 + $0xf8] sm:$0xff]
      %v1908 = vld [vmem:[#allocation2 + $0x100] sm:$0xff]
      %v1909 = vld [vmem:[#allocation2 + $0x108] sm:$0xff]
      %v1910 = vld [vmem:[#allocation2 + $0x110] sm:$0xff]
      %v1911 = vld [vmem:[#allocation2 + $0x118] sm:$0xff]
      %v1912 = vld [vmem:[#allocation2 + $0x120] sm:$0xff]
      %v1913 = vld [vmem:[#allocation2 + $0x128] sm:$0xff]
      %v1914 = vld [vmem:[#allocation2 + $0x130] sm:$0xff]
      %v1915 = vld [vmem:[#allocation2 + $0x138] sm:$0xff]
      %v1916 = vld [vmem:[#allocation2 + $0x140] sm:$0xff]
      %v1917 = vld [vmem:[#allocation2 + $0x148] sm:$0xff]
      %v1918 = vld [vmem:[#allocation2 + $0x150] sm:$0xff]
      %v1919 = vld [vmem:[#allocation2 + $0x158] sm:$0xff]
      %v1920 = vld [vmem:[#allocation2 + $0x160] sm:$0xff]
      %v1921 = vld [vmem:[#allocation2 + $0x168] sm:$0xff]
      %v1922 = vld [vmem:[#allocation2 + $0x170] sm:$0xff]
      %v1923 = vld [vmem:[#allocation2 + $0x178] sm:$0xff]
      %v1924 = vld [vmem:[#allocation2 + $0x180] sm:$0xff]
      %v1925 = vld [vmem:[#allocation2 + $0x188] sm:$0xff]
      %v1926 = vld [vmem:[#allocation2 + $0x190] sm:$0xff]
      %v1927 = vld [vmem:[#allocation2 + $0x198] sm:$0xff]
      %v1928 = vld [vmem:[#allocation2 + $0x1a0] sm:$0xff]
      %v1929 = vld [vmem:[#allocation2 + $0x1a8] sm:$0xff]
      %v1930 = vld [vmem:[#allocation2 + $0x1b0] sm:$0xff]
      %v1931 = vld [vmem:[#allocation2 + $0x1b8] sm:$0xff]
      %v1932 = vld [vmem:[#allocation2 + $0x1c0] sm:$0xff]
      %v1933 = vld [vmem:[#allocation2 + $0x1c8] sm:$0xff]
      %v1934 = vld [vmem:[#allocation2 + $0x1d0] sm:$0xff]
      %v1935 = vld [vmem:[#allocation2 + $0x1d8] sm:$0xff]
      %v1936 = vld [vmem:[#allocation2 + $0x1e0] sm:$0xff]
      %v1937 = vld [vmem:[#allocation2 + $0x1e8] sm:$0xff]
      %v1938 = vld [vmem:[#allocation2 + $0x1f0] sm:$0xff]
      %v1939 = vld [vmem:[#allocation2 + $0x1f8] sm:$0xff]
      %v1940 = vld [vmem:[#allocation2 + $0x200] sm:$0xff]
      %v1941 = vld [vmem:[#allocation2 + $0x208] sm:$0xff]
      %v1942 = vld [vmem:[#allocation2 + $0x210] sm:$0xff]
      %v1943 = vld [vmem:[#allocation2 + $0x218] sm:$0xff]
      %v1944 = vld [vmem:[#allocation2 + $0x220] sm:$0xff]
      %v1945 = vld [vmem:[#allocation2 + $0x228] sm:$0xff]
      %v1946 = vld [vmem:[#allocation2 + $0x230] sm:$0xff]
      %v1947 = vld [vmem:[#allocation2 + $0x238] sm:$0xff]
      %v1948 = vld [vmem:[#allocation2 + $0x240] sm:$0xff]
      %v1949 = vld [vmem:[#allocation2 + $0x248] sm:$0xff]
      %v1950 = vld [vmem:[#allocation2 + $0x250] sm:$0xff]
      %v1951 = vld [vmem:[#allocation2 + $0x258] sm:$0xff]
      %v1952 = vld [vmem:[#allocation2 + $0x260] sm:$0xff]
      %v1953 = vld [vmem:[#allocation2 + $0x268] sm:$0xff]
      %v1954 = vld [vmem:[#allocation2 + $0x270] sm:$0xff]
      %v1955 = vld [vmem:[#allocation2 + $0x278] sm:$0xff]
      %v1956 = vld [vmem:[#allocation2 + $0x280] sm:$0xff]
      %v1957 = vld [vmem:[#allocation2 + $0x288] sm:$0xff]
      %v1958 = vld [vmem:[#allocation2 + $0x290] sm:$0xff]
      %v1959 = vld [vmem:[#allocation2 + $0x298] sm:$0xff]
      %v1960 = vld [vmem:[#allocation2 + $0x2a0] sm:$0xff]
      %v1961 = vld [vmem:[#allocation2 + $0x2a8] sm:$0xff]
      %v1962 = vld [vmem:[#allocation2 + $0x2b0] sm:$0xff]
      %v1963 = vld [vmem:[#allocation2 + $0x2b8] sm:$0xff]
      %v1964 = vld [vmem:[#allocation2 + $0x2c0] sm:$0xff]
      %v1965 = vld [vmem:[#allocation2 + $0x2c8] sm:$0xff]
      %v1966 = vld [vmem:[#allocation2 + $0x2d0] sm:$0xff]
      %v1967 = vld [vmem:[#allocation2 + $0x2d8] sm:$0xff]
      %v1968 = vld [vmem:[#allocation2 + $0x2e0] sm:$0xff]
      %v1969 = vld [vmem:[#allocation2 + $0x2e8] sm:$0xff]
      %v1970 = vld [vmem:[#allocation2 + $0x2f0] sm:$0xff]
      %v1971 = vld [vmem:[#allocation2 + $0x2f8] sm:$0xff]
      %v1972 = vld [vmem:[#allocation2 + $0x300] sm:$0xff]
      %v1973 = vld [vmem:[#allocation2 + $0x308] sm:$0xff]
      %v1974 = vld [vmem:[#allocation2 + $0x310] sm:$0xff]
      %v1975 = vld [vmem:[#allocation2 + $0x318] sm:$0xff]
      %v1976 = vld [vmem:[#allocation2 + $0x320] sm:$0xff]
      %v1977 = vld [vmem:[#allocation2 + $0x328] sm:$0xff]
      %v1978 = vld [vmem:[#allocation2 + $0x330] sm:$0xff]
      %v1979 = vld [vmem:[#allocation2 + $0x338] sm:$0xff]
      %v1980 = vld [vmem:[#allocation2 + $0x340] sm:$0xff]
      %v1981 = vld [vmem:[#allocation2 + $0x348] sm:$0xff]
      %v1982 = vld [vmem:[#allocation2 + $0x350] sm:$0xff]
      %v1983 = vld [vmem:[#allocation2 + $0x358] sm:$0xff]
      %v1984 = vld [vmem:[#allocation2 + $0x360] sm:$0xff]
      %v1985 = vld [vmem:[#allocation2 + $0x368] sm:$0xff]
      %v1986 = vld [vmem:[#allocation2 + $0x370] sm:$0xff]
      %v1987 = vld [vmem:[#allocation2 + $0x378] sm:$0xff]
      %v1988 = vld [vmem:[#allocation2 + $0x380] sm:$0xff]
      %v1989 = vld [vmem:[#allocation2 + $0x388] sm:$0xff]
      %v1990 = vld [vmem:[#allocation2 + $0x390] sm:$0xff]
      %v1991 = vld [vmem:[#allocation2 + $0x398] sm:$0xff]
      %v1992 = vld [vmem:[#allocation2 + $0x3a0] sm:$0xff]
      %v1993 = vld [vmem:[#allocation2 + $0x3a8] sm:$0xff]
      %v1994 = vld [vmem:[#allocation2 + $0x3b0] sm:$0xff]
      %v1995 = vld [vmem:[#allocation2 + $0x3b8] sm:$0xff]
      %v1996 = vld [vmem:[#allocation2 + $0x3c0] sm:$0xff]
      %v1997 = vld [vmem:[#allocation2 + $0x3c8] sm:$0xff]
      %v1998 = vld [vmem:[#allocation2 + $0x3d0] sm:$0xff]
      %v1999 = vld [vmem:[#allocation2 + $0x3d8] sm:$0xff]
      %v2000 = vld [vmem:[#allocation2 + $0x3e0] sm:$0xff]
      %v2001 = vld [vmem:[#allocation2 + $0x3e8] sm:$0xff]
      %v2002 = vld [vmem:[#allocation2 + $0x3f0] sm:$0xff]
      %v2003 = vld [vmem:[#allocation2 + $0x3f8] sm:$0xff]
      %v2004 = vld [vmem:[#allocation2 + $0x400] sm:$0xff]
      %v2005 = vld [vmem:[#allocation2 + $0x408] sm:$0xff]
      %v2006 = vld [vmem:[#allocation2 + $0x410] sm:$0xff]
      %v2007 = vld [vmem:[#allocation2 + $0x418] sm:$0xff]
      %v2008 = vld [vmem:[#allocation2 + $0x420] sm:$0xff]
      %v2009 = vld [vmem:[#allocation2 + $0x428] sm:$0xff]
      %v2010 = vld [vmem:[#allocation2 + $0x430] sm:$0xff]
      %v2011 = vld [vmem:[#allocation2 + $0x438] sm:$0xff]
      %v2012 = vld [vmem:[#allocation2 + $0x440] sm:$0xff]
      %v2013 = vld [vmem:[#allocation2 + $0x448] sm:$0xff]
      %v2014 = vld [vmem:[#allocation2 + $0x450] sm:$0xff]
      %v2015 = vld [vmem:[#allocation2 + $0x458] sm:$0xff]
      %v2016 = vld [vmem:[#allocation2 + $0x460] sm:$0xff]
      %v2017 = vld [vmem:[#allocation2 + $0x468] sm:$0xff]
      %v2018 = vld [vmem:[#allocation2 + $0x470] sm:$0xff]
      %v2019 = vld [vmem:[#allocation2 + $0x478] sm:$0xff]
      %v2020 = vld [vmem:[#allocation2 + $0x480] sm:$0xff]
      %v2021 = vld [vmem:[#allocation2 + $0x488] sm:$0xff]
      %v2022 = vld [vmem:[#allocation2 + $0x490] sm:$0xff]
      %v2023 = vld [vmem:[#allocation2 + $0x498] sm:$0xff]
      %v2024 = vld [vmem:[#allocation2 + $0x4a0] sm:$0xff]
      %v2025 = vld [vmem:[#allocation2 + $0x4a8] sm:$0xff]
      %v2026 = vld [vmem:[#allocation2 + $0x4b0] sm:$0xff]
      %v2027 = vld [vmem:[#allocation2 + $0x4b8] sm:$0xff]
      %v2028 = vld [vmem:[#allocation2 + $0x4c0] sm:$0xff]
      %v2029 = vld [vmem:[#allocation2 + $0x4c8] sm:$0xff]
      %v2030 = vld [vmem:[#allocation2 + $0x4d0] sm:$0xff]
      %v2031 = vld [vmem:[#allocation2 + $0x4d8] sm:$0xff]
      %v2032 = vld [vmem:[#allocation2 + $0x4e0] sm:$0xff]
      %v2033 = vld [vmem:[#allocation2 + $0x4e8] sm:$0xff]
      %v2034 = vld [vmem:[#allocation2 + $0x4f0] sm:$0xff]
      %v2035 = vld [vmem:[#allocation2 + $0x4f8] sm:$0xff]
      %v2036 = vld [vmem:[#allocation2 + $0x500] sm:$0xff]
      %v2037 = vld [vmem:[#allocation2 + $0x508] sm:$0xff]
      %v2038 = vld [vmem:[#allocation2 + $0x510] sm:$0xff]
      %v2039 = vld [vmem:[#allocation2 + $0x518] sm:$0xff]
      %v2040 = vld [vmem:[#allocation2 + $0x520] sm:$0xff]
      %v2041 = vld [vmem:[#allocation2 + $0x528] sm:$0xff]
      %v2042 = vld [vmem:[#allocation2 + $0x530] sm:$0xff]
      %v2043 = vld [vmem:[#allocation2 + $0x538] sm:$0xff]
      %v2044 = vld [vmem:[#allocation2 + $0x540] sm:$0xff]
      %v2045 = vld [vmem:[#allocation2 + $0x548] sm:$0xff]
      %v2046 = vld [vmem:[#allocation2 + $0x550] sm:$0xff]
      %v2047 = vld [vmem:[#allocation2 + $0x558] sm:$0xff]
      %v2048 = vld [vmem:[#allocation2 + $0x560] sm:$0xff]
      %v2049 = vld [vmem:[#allocation2 + $0x568] sm:$0xff]
      %v2050 = vld [vmem:[#allocation2 + $0x570] sm:$0xff]
      %v2051 = vld [vmem:[#allocation2 + $0x578] sm:$0xff]
      %v2052 = vld [vmem:[#allocation2 + $0x580] sm:$0xff]
      %v2053 = vld [vmem:[#allocation2 + $0x588] sm:$0xff]
      %v2054 = vld [vmem:[#allocation2 + $0x590] sm:$0xff]
      %v2055 = vld [vmem:[#allocation2 + $0x598] sm:$0xff]
      %v2056 = vld [vmem:[#allocation2 + $0x5a0] sm:$0xff]
      %v2057 = vld [vmem:[#allocation2 + $0x5a8] sm:$0xff]
      %v2058 = vld [vmem:[#allocation2 + $0x5b0] sm:$0xff]
      %v2059 = vld [vmem:[#allocation2 + $0x5b8] sm:$0xff]
      %v2060 = vld [vmem:[#allocation2 + $0x5c0] sm:$0xff]
      %v2061 = vld [vmem:[#allocation2 + $0x5c8] sm:$0xff]
      %v2062 = vld [vmem:[#allocation2 + $0x5d0] sm:$0xff]
      %v2063 = vld [vmem:[#allocation2 + $0x5d8] sm:$0xff]
      %v2064 = vld [vmem:[#allocation2 + $0x5e0] sm:$0xff]
      %v2065 = vld [vmem:[#allocation2 + $0x5e8] sm:$0xff]
      %v2066 = vld [vmem:[#allocation2 + $0x5f0] sm:$0xff]
      %v2067 = vld [vmem:[#allocation2 + $0x5f8] sm:$0xff]
      %v2068 = vld [vmem:[%s2] sm:$0x7]
      %v2070 = vlaneseq
      %v2071 = vshrl.u32 %v2070, 7
      %v2072 = vsub.s32 0, %v2071
      %v2073 = vrot.slane %v2068, %v2072
      %v2074 = vlaneseq
      %v2075 = vshrl.u32 %v2074, 7
      %v2076 = vsub.s32 1, %v2075
      %v2077 = vrot.slane %v2068, %v2076
      %v2078 = vlaneseq
      %v2079 = vshrl.u32 %v2078, 7
      %v2080 = vsub.s32 2, %v2079
      %v2081 = vrot.slane %v2068, %v2080
      %v2085 = vadd.f32 %v1876, %v2073
      %v2086 = vadd.f32 %v1877, %v2077
      %v2087 = vadd.f32 %v1878, %v2081
      %v2088 = vadd.f32 %v1879, %v2073
      %v2089 = vadd.f32 %v1880, %v2077
      %v2090 = vadd.f32 %v1881, %v2081
      %v2091 = vadd.f32 %v1882, %v2073
      %v2092 = vadd.f32 %v1883, %v2077
      %v2093 = vadd.f32 %v1884, %v2081
      %v2094 = vadd.f32 %v1885, %v2073
      %v2095 = vadd.f32 %v1886, %v2077
      %v2096 = vadd.f32 %v1887, %v2081
      %v2097 = vadd.f32 %v1888, %v2073
      %v2098 = vadd.f32 %v1889, %v2077
      %v2099 = vadd.f32 %v1890, %v2081
      %v2100 = vadd.f32 %v1891, %v2073
      %v2101 = vadd.f32 %v1892, %v2077
      %v2102 = vadd.f32 %v1893, %v2081
      %v2103 = vadd.f32 %v1894, %v2073
      %v2104 = vadd.f32 %v1895, %v2077
      %v2105 = vadd.f32 %v1896, %v2081
      %v2106 = vadd.f32 %v1897, %v2073
      %v2107 = vadd.f32 %v1898, %v2077
      %v2108 = vadd.f32 %v1899, %v2081
      %v2109 = vadd.f32 %v1900, %v2073
      %v2110 = vadd.f32 %v1901, %v2077
      %v2111 = vadd.f32 %v1902, %v2081
      %v2112 = vadd.f32 %v1903, %v2073
      %v2113 = vadd.f32 %v1904, %v2077
      %v2114 = vadd.f32 %v1905, %v2081
      %v2115 = vadd.f32 %v1906, %v2073
      %v2116 = vadd.f32 %v1907, %v2077
      %v2117 = vadd.f32 %v1908, %v2081
      %v2118 = vadd.f32 %v1909, %v2073
      %v2119 = vadd.f32 %v1910, %v2077
      %v2120 = vadd.f32 %v1911, %v2081
      %v2121 = vadd.f32 %v1912, %v2073
      %v2122 = vadd.f32 %v1913, %v2077
      %v2123 = vadd.f32 %v1914, %v2081
      %v2124 = vadd.f32 %v1915, %v2073
      %v2125 = vadd.f32 %v1916, %v2077
      %v2126 = vadd.f32 %v1917, %v2081
      %v2127 = vadd.f32 %v1918, %v2073
      %v2128 = vadd.f32 %v1919, %v2077
      %v2129 = vadd.f32 %v1920, %v2081
      %v2130 = vadd.f32 %v1921, %v2073
      %v2131 = vadd.f32 %v1922, %v2077
      %v2132 = vadd.f32 %v1923, %v2081
      %v2133 = vadd.f32 %v1924, %v2073
      %v2134 = vadd.f32 %v1925, %v2077
      %v2135 = vadd.f32 %v1926, %v2081
      %v2136 = vadd.f32 %v1927, %v2073
      %v2137 = vadd.f32 %v1928, %v2077
      %v2138 = vadd.f32 %v1929, %v2081
      %v2139 = vadd.f32 %v1930, %v2073
      %v2140 = vadd.f32 %v1931, %v2077
      %v2141 = vadd.f32 %v1932, %v2081
      %v2142 = vadd.f32 %v1933, %v2073
      %v2143 = vadd.f32 %v1934, %v2077
      %v2144 = vadd.f32 %v1935, %v2081
      %v2145 = vadd.f32 %v1936, %v2073
      %v2146 = vadd.f32 %v1937, %v2077
      %v2147 = vadd.f32 %v1938, %v2081
      %v2148 = vadd.f32 %v1939, %v2073
      %v2149 = vadd.f32 %v1940, %v2077
      %v2150 = vadd.f32 %v1941, %v2081
      %v2151 = vadd.f32 %v1942, %v2073
      %v2152 = vadd.f32 %v1943, %v2077
      %v2153 = vadd.f32 %v1944, %v2081
      %v2154 = vadd.f32 %v1945, %v2073
      %v2155 = vadd.f32 %v1946, %v2077
      %v2156 = vadd.f32 %v1947, %v2081
      %v2157 = vadd.f32 %v1948, %v2073
      %v2158 = vadd.f32 %v1949, %v2077
      %v2159 = vadd.f32 %v1950, %v2081
      %v2160 = vadd.f32 %v1951, %v2073
      %v2161 = vadd.f32 %v1952, %v2077
      %v2162 = vadd.f32 %v1953, %v2081
      %v2163 = vadd.f32 %v1954, %v2073
      %v2164 = vadd.f32 %v1955, %v2077
      %v2165 = vadd.f32 %v1956, %v2081
      %v2166 = vadd.f32 %v1957, %v2073
      %v2167 = vadd.f32 %v1958, %v2077
      %v2168 = vadd.f32 %v1959, %v2081
      %v2169 = vadd.f32 %v1960, %v2073
      %v2170 = vadd.f32 %v1961, %v2077
      %v2171 = vadd.f32 %v1962, %v2081
      %v2172 = vadd.f32 %v1963, %v2073
      %v2173 = vadd.f32 %v1964, %v2077
      %v2174 = vadd.f32 %v1965, %v2081
      %v2175 = vadd.f32 %v1966, %v2073
      %v2176 = vadd.f32 %v1967, %v2077
      %v2177 = vadd.f32 %v1968, %v2081
      %v2178 = vadd.f32 %v1969, %v2073
      %v2179 = vadd.f32 %v1970, %v2077
      %v2180 = vadd.f32 %v1971, %v2081
      %v2181 = vadd.f32 %v1972, %v2073
      %v2182 = vadd.f32 %v1973, %v2077
      %v2183 = vadd.f32 %v1974, %v2081
      %v2184 = vadd.f32 %v1975, %v2073
      %v2185 = vadd.f32 %v1976, %v2077
      %v2186 = vadd.f32 %v1977, %v2081
      %v2187 = vadd.f32 %v1978, %v2073
      %v2188 = vadd.f32 %v1979, %v2077
      %v2189 = vadd.f32 %v1980, %v2081
      %v2190 = vadd.f32 %v1981, %v2073
      %v2191 = vadd.f32 %v1982, %v2077
      %v2192 = vadd.f32 %v1983, %v2081
      %v2193 = vadd.f32 %v1984, %v2073
      %v2194 = vadd.f32 %v1985, %v2077
      %v2195 = vadd.f32 %v1986, %v2081
      %v2196 = vadd.f32 %v1987, %v2073
      %v2197 = vadd.f32 %v1988, %v2077
      %v2198 = vadd.f32 %v1989, %v2081
      %v2199 = vadd.f32 %v1990, %v2073
      %v2200 = vadd.f32 %v1991, %v2077
      %v2201 = vadd.f32 %v1992, %v2081
      %v2202 = vadd.f32 %v1993, %v2073
      %v2203 = vadd.f32 %v1994, %v2077
      %v2204 = vadd.f32 %v1995, %v2081
      %v2205 = vadd.f32 %v1996, %v2073
      %v2206 = vadd.f32 %v1997, %v2077
      %v2207 = vadd.f32 %v1998, %v2081
      %v2208 = vadd.f32 %v1999, %v2073
      %v2209 = vadd.f32 %v2000, %v2077
      %v2210 = vadd.f32 %v2001, %v2081
      %v2211 = vadd.f32 %v2002, %v2073
      %v2212 = vadd.f32 %v2003, %v2077
      %v2213 = vadd.f32 %v2004, %v2081
      %v2214 = vadd.f32 %v2005, %v2073
      %v2215 = vadd.f32 %v2006, %v2077
      %v2216 = vadd.f32 %v2007, %v2081
      %v2217 = vadd.f32 %v2008, %v2073
      %v2218 = vadd.f32 %v2009, %v2077
      %v2219 = vadd.f32 %v2010, %v2081
      %v2220 = vadd.f32 %v2011, %v2073
      %v2221 = vadd.f32 %v2012, %v2077
      %v2222 = vadd.f32 %v2013, %v2081
      %v2223 = vadd.f32 %v2014, %v2073
      %v2224 = vadd.f32 %v2015, %v2077
      %v2225 = vadd.f32 %v2016, %v2081
      %v2226 = vadd.f32 %v2017, %v2073
      %v2227 = vadd.f32 %v2018, %v2077
      %v2228 = vadd.f32 %v2019, %v2081
      %v2229 = vadd.f32 %v2020, %v2073
      %v2230 = vadd.f32 %v2021, %v2077
      %v2231 = vadd.f32 %v2022, %v2081
      %v2232 = vadd.f32 %v2023, %v2073
      %v2233 = vadd.f32 %v2024, %v2077
      %v2234 = vadd.f32 %v2025, %v2081
      %v2235 = vadd.f32 %v2026, %v2073
      %v2236 = vadd.f32 %v2027, %v2077
      %v2237 = vadd.f32 %v2028, %v2081
      %v2238 = vadd.f32 %v2029, %v2073
      %v2239 = vadd.f32 %v2030, %v2077
      %v2240 = vadd.f32 %v2031, %v2081
      %v2241 = vadd.f32 %v2032, %v2073
      %v2242 = vadd.f32 %v2033, %v2077
      %v2243 = vadd.f32 %v2034, %v2081
      %v2244 = vadd.f32 %v2035, %v2073
      %v2245 = vadd.f32 %v2036, %v2077
      %v2246 = vadd.f32 %v2037, %v2081
      %v2247 = vadd.f32 %v2038, %v2073
      %v2248 = vadd.f32 %v2039, %v2077
      %v2249 = vadd.f32 %v2040, %v2081
      %v2250 = vadd.f32 %v2041, %v2073
      %v2251 = vadd.f32 %v2042, %v2077
      %v2252 = vadd.f32 %v2043, %v2081
      %v2253 = vadd.f32 %v2044, %v2073
      %v2254 = vadd.f32 %v2045, %v2077
      %v2255 = vadd.f32 %v2046, %v2081
      %v2256 = vadd.f32 %v2047, %v2073
      %v2257 = vadd.f32 %v2048, %v2077
      %v2258 = vadd.f32 %v2049, %v2081
      %v2259 = vadd.f32 %v2050, %v2073
      %v2260 = vadd.f32 %v2051, %v2077
      %v2261 = vadd.f32 %v2052, %v2081
      %v2262 = vadd.f32 %v2053, %v2073
      %v2263 = vadd.f32 %v2054, %v2077
      %v2264 = vadd.f32 %v2055, %v2081
      %v2265 = vadd.f32 %v2056, %v2073
      %v2266 = vadd.f32 %v2057, %v2077
      %v2267 = vadd.f32 %v2058, %v2081
      %v2268 = vadd.f32 %v2059, %v2073
      %v2269 = vadd.f32 %v2060, %v2077
      %v2270 = vadd.f32 %v2061, %v2081
      %v2271 = vadd.f32 %v2062, %v2073
      %v2272 = vadd.f32 %v2063, %v2077
      %v2273 = vadd.f32 %v2064, %v2081
      %v2274 = vadd.f32 %v2065, %v2073
      %v2275 = vadd.f32 %v2066, %v2077
      %v2276 = vadd.f32 %v2067, %v2081
      %2277 = vst [vmem:[#allocation8] sm:$0xff] %v2085
      %2278 = vst [vmem:[#allocation8 + $0x8] sm:$0xff] %v2086
      %2279 = vst [vmem:[#allocation8 + $0x10] sm:$0xff] %v2087
      %2280 = vst [vmem:[#allocation8 + $0x18] sm:$0xff] %v2088
      %2281 = vst [vmem:[#allocation8 + $0x20] sm:$0xff] %v2089
      %2282 = vst [vmem:[#allocation8 + $0x28] sm:$0xff] %v2090
      %2283 = vst [vmem:[#allocation8 + $0x30] sm:$0xff] %v2091
      %2284 = vst [vmem:[#allocation8 + $0x38] sm:$0xff] %v2092
      %2285 = vst [vmem:[#allocation8 + $0x40] sm:$0xff] %v2093
      %2286 = vst [vmem:[#allocation8 + $0x48] sm:$0xff] %v2094
      %2287 = vst [vmem:[#allocation8 + $0x50] sm:$0xff] %v2095
      %2288 = vst [vmem:[#allocation8 + $0x58] sm:$0xff] %v2096
      %2289 = vst [vmem:[#allocation8 + $0x60] sm:$0xff] %v2097
      %2290 = vst [vmem:[#allocation8 + $0x68] sm:$0xff] %v2098
      %2291 = vst [vmem:[#allocation8 + $0x70] sm:$0xff] %v2099
      %2292 = vst [vmem:[#allocation8 + $0x78] sm:$0xff] %v2100
      %2293 = vst [vmem:[#allocation8 + $0x80] sm:$0xff] %v2101
      %2294 = vst [vmem:[#allocation8 + $0x88] sm:$0xff] %v2102
      %2295 = vst [vmem:[#allocation8 + $0x90] sm:$0xff] %v2103
      %2296 = vst [vmem:[#allocation8 + $0x98] sm:$0xff] %v2104
      %2297 = vst [vmem:[#allocation8 + $0xa0] sm:$0xff] %v2105
      %2298 = vst [vmem:[#allocation8 + $0xa8] sm:$0xff] %v2106
      %2299 = vst [vmem:[#allocation8 + $0xb0] sm:$0xff] %v2107
      %2300 = vst [vmem:[#allocation8 + $0xb8] sm:$0xff] %v2108
      %2301 = vst [vmem:[#allocation8 + $0xc0] sm:$0xff] %v2109
      %2302 = vst [vmem:[#allocation8 + $0xc8] sm:$0xff] %v2110
      %2303 = vst [vmem:[#allocation8 + $0xd0] sm:$0xff] %v2111
      %2304 = vst [vmem:[#allocation8 + $0xd8] sm:$0xff] %v2112
      %2305 = vst [vmem:[#allocation8 + $0xe0] sm:$0xff] %v2113
      %2306 = vst [vmem:[#allocation8 + $0xe8] sm:$0xff] %v2114
      %2307 = vst [vmem:[#allocation8 + $0xf0] sm:$0xff] %v2115
      %2308 = vst [vmem:[#allocation8 + $0xf8] sm:$0xff] %v2116
      %2309 = vst [vmem:[#allocation8 + $0x100] sm:$0xff] %v2117
      %2310 = vst [vmem:[#allocation8 + $0x108] sm:$0xff] %v2118
      %2311 = vst [vmem:[#allocation8 + $0x110] sm:$0xff] %v2119
      %2312 = vst [vmem:[#allocation8 + $0x118] sm:$0xff] %v2120
      %2313 = vst [vmem:[#allocation8 + $0x120] sm:$0xff] %v2121
      %2314 = vst [vmem:[#allocation8 + $0x128] sm:$0xff] %v2122
      %2315 = vst [vmem:[#allocation8 + $0x130] sm:$0xff] %v2123
      %2316 = vst [vmem:[#allocation8 + $0x138] sm:$0xff] %v2124
      %2317 = vst [vmem:[#allocation8 + $0x140] sm:$0xff] %v2125
      %2318 = vst [vmem:[#allocation8 + $0x148] sm:$0xff] %v2126
      %2319 = vst [vmem:[#allocation8 + $0x150] sm:$0xff] %v2127
      %2320 = vst [vmem:[#allocation8 + $0x158] sm:$0xff] %v2128
      %2321 = vst [vmem:[#allocation8 + $0x160] sm:$0xff] %v2129
      %2322 = vst [vmem:[#allocation8 + $0x168] sm:$0xff] %v2130
      %2323 = vst [vmem:[#allocation8 + $0x170] sm:$0xff] %v2131
      %2324 = vst [vmem:[#allocation8 + $0x178] sm:$0xff] %v2132
      %2325 = vst [vmem:[#allocation8 + $0x180] sm:$0xff] %v2133
      %2326 = vst [vmem:[#allocation8 + $0x188] sm:$0xff] %v2134
      %2327 = vst [vmem:[#allocation8 + $0x190] sm:$0xff] %v2135
      %2328 = vst [vmem:[#allocation8 + $0x198] sm:$0xff] %v2136
      %2329 = vst [vmem:[#allocation8 + $0x1a0] sm:$0xff] %v2137
      %2330 = vst [vmem:[#allocation8 + $0x1a8] sm:$0xff] %v2138
      %2331 = vst [vmem:[#allocation8 + $0x1b0] sm:$0xff] %v2139
      %2332 = vst [vmem:[#allocation8 + $0x1b8] sm:$0xff] %v2140
      %2333 = vst [vmem:[#allocation8 + $0x1c0] sm:$0xff] %v2141
      %2334 = vst [vmem:[#allocation8 + $0x1c8] sm:$0xff] %v2142
      %2335 = vst [vmem:[#allocation8 + $0x1d0] sm:$0xff] %v2143
      %2336 = vst [vmem:[#allocation8 + $0x1d8] sm:$0xff] %v2144
      %2337 = vst [vmem:[#allocation8 + $0x1e0] sm:$0xff] %v2145
      %2338 = vst [vmem:[#allocation8 + $0x1e8] sm:$0xff] %v2146
      %2339 = vst [vmem:[#allocation8 + $0x1f0] sm:$0xff] %v2147
      %2340 = vst [vmem:[#allocation8 + $0x1f8] sm:$0xff] %v2148
      %2341 = vst [vmem:[#allocation8 + $0x200] sm:$0xff] %v2149
      %2342 = vst [vmem:[#allocation8 + $0x208] sm:$0xff] %v2150
      %2343 = vst [vmem:[#allocation8 + $0x210] sm:$0xff] %v2151
      %2344 = vst [vmem:[#allocation8 + $0x218] sm:$0xff] %v2152
      %2345 = vst [vmem:[#allocation8 + $0x220] sm:$0xff] %v2153
      %2346 = vst [vmem:[#allocation8 + $0x228] sm:$0xff] %v2154
      %2347 = vst [vmem:[#allocation8 + $0x230] sm:$0xff] %v2155
      %2348 = vst [vmem:[#allocation8 + $0x238] sm:$0xff] %v2156
      %2349 = vst [vmem:[#allocation8 + $0x240] sm:$0xff] %v2157
      %2350 = vst [vmem:[#allocation8 + $0x248] sm:$0xff] %v2158
      %2351 = vst [vmem:[#allocation8 + $0x250] sm:$0xff] %v2159
      %2352 = vst [vmem:[#allocation8 + $0x258] sm:$0xff] %v2160
      %2353 = vst [vmem:[#allocation8 + $0x260] sm:$0xff] %v2161
      %2354 = vst [vmem:[#allocation8 + $0x268] sm:$0xff] %v2162
      %2355 = vst [vmem:[#allocation8 + $0x270] sm:$0xff] %v2163
      %2356 = vst [vmem:[#allocation8 + $0x278] sm:$0xff] %v2164
      %2357 = vst [vmem:[#allocation8 + $0x280] sm:$0xff] %v2165
      %2358 = vst [vmem:[#allocation8 + $0x288] sm:$0xff] %v2166
      %2359 = vst [vmem:[#allocation8 + $0x290] sm:$0xff] %v2167
      %2360 = vst [vmem:[#allocation8 + $0x298] sm:$0xff] %v2168
      %2361 = vst [vmem:[#allocation8 + $0x2a0] sm:$0xff] %v2169
      %2362 = vst [vmem:[#allocation8 + $0x2a8] sm:$0xff] %v2170
      %2363 = vst [vmem:[#allocation8 + $0x2b0] sm:$0xff] %v2171
      %2364 = vst [vmem:[#allocation8 + $0x2b8] sm:$0xff] %v2172
      %2365 = vst [vmem:[#allocation8 + $0x2c0] sm:$0xff] %v2173
      %2366 = vst [vmem:[#allocation8 + $0x2c8] sm:$0xff] %v2174
      %2367 = vst [vmem:[#allocation8 + $0x2d0] sm:$0xff] %v2175
      %2368 = vst [vmem:[#allocation8 + $0x2d8] sm:$0xff] %v2176
      %2369 = vst [vmem:[#allocation8 + $0x2e0] sm:$0xff] %v2177
      %2370 = vst [vmem:[#allocation8 + $0x2e8] sm:$0xff] %v2178
      %2371 = vst [vmem:[#allocation8 + $0x2f0] sm:$0xff] %v2179
      %2372 = vst [vmem:[#allocation8 + $0x2f8] sm:$0xff] %v2180
      %2373 = vst [vmem:[#allocation8 + $0x300] sm:$0xff] %v2181
      %2374 = vst [vmem:[#allocation8 + $0x308] sm:$0xff] %v2182
      %2375 = vst [vmem:[#allocation8 + $0x310] sm:$0xff] %v2183
      %2376 = vst [vmem:[#allocation8 + $0x318] sm:$0xff] %v2184
      %2377 = vst [vmem:[#allocation8 + $0x320] sm:$0xff] %v2185
      %2378 = vst [vmem:[#allocation8 + $0x328] sm:$0xff] %v2186
      %2379 = vst [vmem:[#allocation8 + $0x330] sm:$0xff] %v2187
      %2380 = vst [vmem:[#allocation8 + $0x338] sm:$0xff] %v2188
      %2381 = vst [vmem:[#allocation8 + $0x340] sm:$0xff] %v2189
      %2382 = vst [vmem:[#allocation8 + $0x348] sm:$0xff] %v2190
      %2383 = vst [vmem:[#allocation8 + $0x350] sm:$0xff] %v2191
      %2384 = vst [vmem:[#allocation8 + $0x358] sm:$0xff] %v2192
      %2385 = vst [vmem:[#allocation8 + $0x360] sm:$0xff] %v2193
      %2386 = vst [vmem:[#allocation8 + $0x368] sm:$0xff] %v2194
      %2387 = vst [vmem:[#allocation8 + $0x370] sm:$0xff] %v2195
      %2388 = vst [vmem:[#allocation8 + $0x378] sm:$0xff] %v2196
      %2389 = vst [vmem:[#allocation8 + $0x380] sm:$0xff] %v2197
      %2390 = vst [vmem:[#allocation8 + $0x388] sm:$0xff] %v2198
      %2391 = vst [vmem:[#allocation8 + $0x390] sm:$0xff] %v2199
      %2392 = vst [vmem:[#allocation8 + $0x398] sm:$0xff] %v2200
      %2393 = vst [vmem:[#allocation8 + $0x3a0] sm:$0xff] %v2201
      %2394 = vst [vmem:[#allocation8 + $0x3a8] sm:$0xff] %v2202
      %2395 = vst [vmem:[#allocation8 + $0x3b0] sm:$0xff] %v2203
      %2396 = vst [vmem:[#allocation8 + $0x3b8] sm:$0xff] %v2204
      %2397 = vst [vmem:[#allocation8 + $0x3c0] sm:$0xff] %v2205
      %2398 = vst [vmem:[#allocation8 + $0x3c8] sm:$0xff] %v2206
      %2399 = vst [vmem:[#allocation8 + $0x3d0] sm:$0xff] %v2207
      %2400 = vst [vmem:[#allocation8 + $0x3d8] sm:$0xff] %v2208
      %2401 = vst [vmem:[#allocation8 + $0x3e0] sm:$0xff] %v2209
      %2402 = vst [vmem:[#allocation8 + $0x3e8] sm:$0xff] %v2210
      %2403 = vst [vmem:[#allocation8 + $0x3f0] sm:$0xff] %v2211
      %2404 = vst [vmem:[#allocation8 + $0x3f8] sm:$0xff] %v2212
      %2405 = vst [vmem:[#allocation8 + $0x400] sm:$0xff] %v2213
      %2406 = vst [vmem:[#allocation8 + $0x408] sm:$0xff] %v2214
      %2407 = vst [vmem:[#allocation8 + $0x410] sm:$0xff] %v2215
      %2408 = vst [vmem:[#allocation8 + $0x418] sm:$0xff] %v2216
      %2409 = vst [vmem:[#allocation8 + $0x420] sm:$0xff] %v2217
      %2410 = vst [vmem:[#allocation8 + $0x428] sm:$0xff] %v2218
      %2411 = vst [vmem:[#allocation8 + $0x430] sm:$0xff] %v2219
      %2412 = vst [vmem:[#allocation8 + $0x438] sm:$0xff] %v2220
      %2413 = vst [vmem:[#allocation8 + $0x440] sm:$0xff] %v2221
      %2414 = vst [vmem:[#allocation8 + $0x448] sm:$0xff] %v2222
      %2415 = vst [vmem:[#allocation8 + $0x450] sm:$0xff] %v2223
      %2416 = vst [vmem:[#allocation8 + $0x458] sm:$0xff] %v2224
      %2417 = vst [vmem:[#allocation8 + $0x460] sm:$0xff] %v2225
      %2418 = vst [vmem:[#allocation8 + $0x468] sm:$0xff] %v2226
      %2419 = vst [vmem:[#allocation8 + $0x470] sm:$0xff] %v2227
      %2420 = vst [vmem:[#allocation8 + $0x478] sm:$0xff] %v2228
      %2421 = vst [vmem:[#allocation8 + $0x480] sm:$0xff] %v2229
      %2422 = vst [vmem:[#allocation8 + $0x488] sm:$0xff] %v2230
      %2423 = vst [vmem:[#allocation8 + $0x490] sm:$0xff] %v2231
      %2424 = vst [vmem:[#allocation8 + $0x498] sm:$0xff] %v2232
      %2425 = vst [vmem:[#allocation8 + $0x4a0] sm:$0xff] %v2233
      %2426 = vst [vmem:[#allocation8 + $0x4a8] sm:$0xff] %v2234
      %2427 = vst [vmem:[#allocation8 + $0x4b0] sm:$0xff] %v2235
      %2428 = vst [vmem:[#allocation8 + $0x4b8] sm:$0xff] %v2236
      %2429 = vst [vmem:[#allocation8 + $0x4c0] sm:$0xff] %v2237
      %2430 = vst [vmem:[#allocation8 + $0x4c8] sm:$0xff] %v2238
      %2431 = vst [vmem:[#allocation8 + $0x4d0] sm:$0xff] %v2239
      %2432 = vst [vmem:[#allocation8 + $0x4d8] sm:$0xff] %v2240
      %2433 = vst [vmem:[#allocation8 + $0x4e0] sm:$0xff] %v2241
      %2434 = vst [vmem:[#allocation8 + $0x4e8] sm:$0xff] %v2242
      %2435 = vst [vmem:[#allocation8 + $0x4f0] sm:$0xff] %v2243
      %2436 = vst [vmem:[#allocation8 + $0x4f8] sm:$0xff] %v2244
      %2437 = vst [vmem:[#allocation8 + $0x500] sm:$0xff] %v2245
      %2438 = vst [vmem:[#allocation8 + $0x508] sm:$0xff] %v2246
      %2439 = vst [vmem:[#allocation8 + $0x510] sm:$0xff] %v2247
      %2440 = vst [vmem:[#allocation8 + $0x518] sm:$0xff] %v2248
      %2441 = vst [vmem:[#allocation8 + $0x520] sm:$0xff] %v2249
      %2442 = vst [vmem:[#allocation8 + $0x528] sm:$0xff] %v2250
      %2443 = vst [vmem:[#allocation8 + $0x530] sm:$0xff] %v2251
      %2444 = vst [vmem:[#allocation8 + $0x538] sm:$0xff] %v2252
      %2445 = vst [vmem:[#allocation8 + $0x540] sm:$0xff] %v2253
      %2446 = vst [vmem:[#allocation8 + $0x548] sm:$0xff] %v2254
      %2447 = vst [vmem:[#allocation8 + $0x550] sm:$0xff] %v2255
      %2448 = vst [vmem:[#allocation8 + $0x558] sm:$0xff] %v2256
      %2449 = vst [vmem:[#allocation8 + $0x560] sm:$0xff] %v2257
      %2450 = vst [vmem:[#allocation8 + $0x568] sm:$0xff] %v2258
      %2451 = vst [vmem:[#allocation8 + $0x570] sm:$0xff] %v2259
      %2452 = vst [vmem:[#allocation8 + $0x578] sm:$0xff] %v2260
      %2453 = vst [vmem:[#allocation8 + $0x580] sm:$0xff] %v2261
      %2454 = vst [vmem:[#allocation8 + $0x588] sm:$0xff] %v2262
      %2455 = vst [vmem:[#allocation8 + $0x590] sm:$0xff] %v2263
      %2456 = vst [vmem:[#allocation8 + $0x598] sm:$0xff] %v2264
      %2457 = vst [vmem:[#allocation8 + $0x5a0] sm:$0xff] %v2265
      %2458 = vst [vmem:[#allocation8 + $0x5a8] sm:$0xff] %v2266
      %2459 = vst [vmem:[#allocation8 + $0x5b0] sm:$0xff] %v2267
      %2460 = vst [vmem:[#allocation8 + $0x5b8] sm:$0xff] %v2268
      %2461 = vst [vmem:[#allocation8 + $0x5c0] sm:$0xff] %v2269
      %2462 = vst [vmem:[#allocation8 + $0x5c8] sm:$0xff] %v2270
      %2463 = vst [vmem:[#allocation8 + $0x5d0] sm:$0xff] %v2271
      %2464 = vst [vmem:[#allocation8 + $0x5d8] sm:$0xff] %v2272
      %2465 = vst [vmem:[#allocation8 + $0x5e0] sm:$0xff] %v2273
      %2466 = vst [vmem:[#allocation8 + $0x5e8] sm:$0xff] %v2274
      %2467 = vst [vmem:[#allocation8 + $0x5f0] sm:$0xff] %v2275
      %2468 = vst [vmem:[#allocation8 + $0x5f8] sm:$0xff] %v2276
    $region29: #{tpu_custom_call.1} parent=1 // pred_fallthru
      _
    // Predicated region
    $region30: #{tpu_custom_call.1} parent=1 // pred_check
      _
    $region31: #{tpu_custom_call.1} parent=1 // pred_check_branch
      %2470 = sbr.rel (0) target = $region33
    $region32: #{tpu_custom_call.1} parent=1 // pred_region
      %s2472 = ssub.s32 24576, 24576
      %2473 = vsyncadd [#allocation5], %s2472
      %s2474 = sshll.u32 [#allocation8], 4
      %s2475 = int_to_ptr.vmem [resolvable:$true] %s2474
      %2480 = dma.vmem_to_hbm [thread:$0]  %s2475, 24576, %s3, [#allocation5], 384, 384, 24
    $region33: #{tpu_custom_call.1} parent=1 // pred_fallthru
      _
    // Predicated region
    $region34: #{tpu_custom_call.1} parent=1 // pred_check
      _
    $region35: #{tpu_custom_call.1} parent=1 // pred_check_branch
      %2482 = sbr.rel (0) target = $region37
    $region36: #{tpu_custom_call.1} parent=1 // pred_region
      %2483 = dma.done [#allocation5], 24576
    $region37: #{tpu_custom_call.1} parent=1 // pred_fallthru
      _
    %2484 = vsyncpa [#allocation4], 1
    %2485 = vsyncpa [#allocation7], 1
    %2486 = vsyncpa [#allocation5], 1

</llo_original>
